<compile_context>
chip_gen: v6e
topology: v6e:2x2x1
jax: 0.10.0
libtpu: 0.0.40
codegen_flags: <defaults>
</compile_context>

<pallas_src>
import math
import jax
import jax.numpy as jnp
from jax.experimental import pallas as pl
from jax.experimental.pallas import tpu as pltpu  # noqa: F401

# ----------------------------- small config ---------------------------------
BATCH = 1
SEQ = 8
INPUT_HIDDEN = 32          # thinker hidden size (input of thinker_to_talker_proj)
HIDDEN = 32                # talker hidden size
NUM_HEADS = 4
NUM_KV_HEADS = 2
HEAD_DIM = 8               # NUM_HEADS * HEAD_DIM == HIDDEN
GROUP = NUM_HEADS // NUM_KV_HEADS
INTERMEDIATE = 64
NUM_LAYERS = 2
CODEC_VOCAB = 64
ROPE_THETA = 10000.0
MROPE_SECTION = (2, 1, 1)  # sums to HEAD_DIM // 2
RMS_EPS = 1e-6

Q_COLS = NUM_HEADS * HEAD_DIM            # 32
KV_COLS = NUM_KV_HEADS * HEAD_DIM        # 16
KV_SLAB = 2 * KV_COLS                    # 32   (K | V, lane-dense, offset 0)
QKV_COLS = Q_COLS + 2 * KV_COLS          # 64   packed as [K | V | Q]
LOGITS_PAD = 128                         # lane-dense logits store


# ------------------------------- kernel --------------------------------------
def _rms_norm(x, w):
    var = jnp.mean(x * x, axis=-1, keepdims=True)
    return x * jax.lax.rsqrt(var + RMS_EPS) * w


def _talker_kernel(embeds_ref, proj_w_ref, proj_b_ref, cos_ref, sin_ref,
                   rot_ref, mask_ref, mq_sel_ref,
                   ln1_ref, qkv_w_ref, qkv_b_ref, ow_sel_ref, ln2_ref,
                   gate_w_ref, up_w_ref, down_w_ref, norm_w_ref, head_w_ref,
                   logits_ref, kv_ref):
    # --- thinker_to_talker_proj ------------------------------------------------
    x = (jnp.dot(embeds_ref[...], proj_w_ref[...],
                 preferred_element_type=jnp.float32) + proj_b_ref[...])  # [S,H]

    # layer-invariant values (loaded / computed once; layer loop is unrolled)
    cos_f = cos_ref[...]                    # [S, QKV_COLS]  (ones over V lanes)
    sin_f = sin_ref[...]                    # [S, QKV_COLS]  (zeros over V lanes)
    rot = rot_ref[...]                      # [QKV_COLS, QKV_COLS]
    mask = mask_ref[...]                    # [S, S] additive mask from module
    scale = 1.0 / math.sqrt(HEAD_DIM)

    kv_slabs = []
    for l in range(NUM_LAYERS):
        # --- input RMSNorm + fused [K|V|Q] projection --------------------------
        xn = _rms_norm(x, ln1_ref[l])
        qkv = (jnp.dot(xn, qkv_w_ref[l], preferred_element_type=jnp.float32)
               + qkv_b_ref[l])                                  # [S, 64]

        # --- RoPE on the whole fused block (V lanes pass through) --------------
        # rotate_half(x) == x @ R (block-diagonal, zero over V lanes).
        qkv_rot = qkv * cos_f + jnp.dot(
            qkv, rot, preferred_element_type=jnp.float32) * sin_f

        # presents slab for this layer: [K_rot | V], lane offset 0 (free slice)
        kv_slab = qkv_rot[:, :KV_SLAB]                          # [S, 32]
        kv_slabs.append(kv_slab)

        # --- GQA attention, no lane extracts ------------------------------------
        # q_sel_h = qkv_rot @ Mq_h  places query head hq onto its KV head's K
        # lanes (zeros elsewhere), so scores = q_sel_h @ kv_slab^T == q_h k_h^T.
        # o_proj is folded per head via zero-padded Wo_h: (p @ kv_slab) @ Wo_h.
        attn_o = jnp.zeros((SEQ, HIDDEN), jnp.float32)
        for hq in range(NUM_HEADS):
            q_sel = jnp.dot(qkv_rot, mq_sel_ref[hq],
                            preferred_element_type=jnp.float32)         # [S, 32]
            s = jax.lax.dot_general(
                q_sel, kv_slab, (((1,), (1,)), ((), ())),
                preferred_element_type=jnp.float32) * scale + mask      # [S, S]
            s = s - jnp.max(s, axis=-1, keepdims=True)
            e = jnp.exp(s)
            p = e * pl.reciprocal(jnp.sum(e, axis=-1, keepdims=True),
                                  approx=True)
            pv = jnp.dot(p, kv_slab, preferred_element_type=jnp.float32)  # [S,32]
            attn_o = attn_o + jnp.dot(pv, ow_sel_ref[l, hq],
                                      preferred_element_type=jnp.float32)

        res = x + attn_o                                        # residual 1

        # --- post-attention RMSNorm + SwiGLU MLP (gate/up as two matmuls) ------
        hn = _rms_norm(res, ln2_ref[l])
        gate = jnp.dot(hn, gate_w_ref[l], preferred_element_type=jnp.float32)
        up = jnp.dot(hn, up_w_ref[l], preferred_element_type=jnp.float32)
        act = gate * jax.nn.sigmoid(gate) * up                  # silu(gate) * up
        x = res + jnp.dot(act, down_w_ref[l],
                          preferred_element_type=jnp.float32)

    # --- single lane-dense store of all layers' K|V presents --------------------
    kv_ref[...] = jnp.concatenate(kv_slabs, axis=-1)            # [S, L*32]

    # --- final RMSNorm + codec head (last position only) ------------------------
    # Select the last row with a one-hot matmul (MXU idle; avoids an unaligned
    # sublane slice).
    sel = (jax.lax.broadcasted_iota(jnp.int32, (1, SEQ), 1)
           == SEQ - 1).astype(jnp.float32)
    last = jnp.dot(sel, x, preferred_element_type=jnp.float32)  # [1, H]
    last = _rms_norm(last, norm_w_ref[...])
    logits_ref[...] = jnp.dot(last, head_w_ref[...],
                              preferred_element_type=jnp.float32)  # [1, 128]


# ---------------------------- glue (plain JAX) --------------------------------
def omni_rotary(position_ids):
    """OmniRotary.forward: position_ids [3, 1, S] -> cos/sin [S, HEAD_DIM]."""
    theta = 1.0 / (ROPE_THETA ** (
        jnp.arange(0, HEAD_DIM, 2, dtype=jnp.float32) / HEAD_DIM))  # [D/2]
    pos = position_ids.astype(jnp.float32)[..., None]               # [3,1,S,1]
    pieces, off = [], 0
    for j, sec in enumerate(MROPE_SECTION):
        pieces.append(pos[j] * theta[off:off + sec][None, None, :])  # [1,S,sec]
        off += sec
    idx_theta = jnp.concatenate(pieces, axis=-1)                     # [1,S,D/2]
    cos = jnp.cos(idx_theta)
    sin = jnp.sin(idx_theta)
    cos = jnp.concatenate([cos, cos], axis=-1)[0]                    # [S, D]
    sin = jnp.concatenate([sin, sin], axis=-1)[0]                    # [S, D]
    return cos, sin


def _rotate_half_matrix_kvq():
    """Block-diagonal R with x @ R == rotate_half(x) on the [K|V|Q] fused block
    (identity-free / zero block over the V lanes)."""
    half = HEAD_DIM // 2
    z = jnp.zeros((half, half), jnp.float32)
    eye = jnp.eye(half, dtype=jnp.float32)
    r = jnp.block([[z, eye], [-eye, z]])                             # [D, D]
    r_k = jnp.kron(jnp.eye(NUM_KV_HEADS, dtype=jnp.float32), r)      # [16,16]
    r_q = jnp.kron(jnp.eye(NUM_HEADS, dtype=jnp.float32), r)         # [32,32]
    full = jnp.zeros((QKV_COLS, QKV_COLS), jnp.float32)
    full = full.at[:KV_COLS, :KV_COLS].set(r_k)                      # K block
    full = full.at[2 * KV_COLS:, 2 * KV_COLS:].set(r_q)              # Q block
    return full                                                      # [64, 64]


def _q_select_tensor():
    """Per-query-head selection: qkv_rot @ Mq[hq] places head hq's query onto
    its KV head's K lanes of a [S, KV_SLAB] tile (zeros over the V lanes)."""
    m = jnp.zeros((NUM_HEADS, QKV_COLS, KV_SLAB), jnp.float32)
    eye = jnp.eye(HEAD_DIM, dtype=jnp.float32)
    for hq in range(NUM_HEADS):
        kv = hq // GROUP
        q_off = 2 * KV_COLS + hq * HEAD_DIM
        m = m.at[hq, q_off:q_off + HEAD_DIM,
                 kv * HEAD_DIM:(kv + 1) * HEAD_DIM].set(eye)
    return m                                                         # [4, 64, 32]


def talker_forward(packed, inputs_embeds, attention_mask, position_ids):
    """Qwen2_5OmniTalker.forward (past_key_values empty / prefill path)."""
    embeds = inputs_embeds[0]                                        # [S, IN_H]
    mask2d = attention_mask[0, 0]                                    # [S, S]

    cos, sin = omni_rotary(position_ids)                             # [S, D]
    ones_v = jnp.ones((SEQ, KV_COLS), jnp.float32)
    zeros_v = jnp.zeros((SEQ, KV_COLS), jnp.float32)
    # [K | V | Q] lane layout; V lanes pass through RoPE (cos=1, sin=0).
    cos_full = jnp.concatenate(
        [jnp.tile(cos, (1, NUM_KV_HEADS)), ones_v,
         jnp.tile(cos, (1, NUM_HEADS))], axis=-1)                    # [S, 64]
    sin_full = jnp.concatenate(
        [jnp.tile(sin, (1, NUM_KV_HEADS)), zeros_v,
         jnp.tile(sin, (1, NUM_HEADS))], axis=-1)                    # [S, 64]

    logits_pad, kv_flat = pl.pallas_call(
        _talker_kernel,
        out_shape=(
            jax.ShapeDtypeStruct((1, LOGITS_PAD), jnp.float32),
            jax.ShapeDtypeStruct((SEQ, NUM_LAYERS * KV_SLAB), jnp.float32),
        ),
    )(embeds, packed["proj_w"], packed["proj_b"], cos_full, sin_full,
      packed["rot_full"], mask2d, packed["mq_sel"],
      packed["ln1_w"], packed["qkv_w"], packed["qkv_b"], packed["ow_sel"],
      packed["ln2_w"], packed["gate_w"], packed["up_w"], packed["down_w"],
      packed["norm_w"], packed["head_w_pad"])

    logits = logits_pad[:, :CODEC_VOCAB]                             # [1, V]
    # [S, L*2*Hkv*D] -> [L, 2, B=1, S, Hkv, D]  (reference export KV layout)
    presents = kv_flat.reshape(SEQ, NUM_LAYERS, 2, NUM_KV_HEADS, HEAD_DIM)
    presents = presents.transpose(1, 2, 0, 3, 4)[:, :, None]
    return logits, presents


# ------------------------------ params ----------------------------------------
def init_params(key):
    keys = iter(jax.random.split(key, 8 + NUM_LAYERS * 16))

    def nrm(shape, scale=0.02):
        return scale * jax.random.normal(next(keys), shape, dtype=jnp.float32)

    params = {
        "proj_w": nrm((INPUT_HIDDEN, HIDDEN)),
        "proj_b": nrm((HIDDEN,)),
        "norm_w": jnp.ones((HIDDEN,), jnp.float32),
        "head_w": nrm((HIDDEN, CODEC_VOCAB)),
        "layers": [],
    }
    for _ in range(NUM_LAYERS):
        params["layers"].append({
            "ln1_w": jnp.ones((HIDDEN,), jnp.float32),
            "q_w": nrm((HIDDEN, NUM_HEADS * HEAD_DIM)),
            "q_b": nrm((NUM_HEADS * HEAD_DIM,)),
            "k_w": nrm((HIDDEN, NUM_KV_HEADS * HEAD_DIM)),
            "k_b": nrm((NUM_KV_HEADS * HEAD_DIM,)),
            "v_w": nrm((HIDDEN, NUM_KV_HEADS * HEAD_DIM)),
            "v_b": nrm((NUM_KV_HEADS * HEAD_DIM,)),
            "o_w": nrm((NUM_HEADS * HEAD_DIM, HIDDEN)),
            "ln2_w": jnp.ones((HIDDEN,), jnp.float32),
            "gate_w": nrm((HIDDEN, INTERMEDIATE)),
            "up_w": nrm((HIDDEN, INTERMEDIATE)),
            "down_w": nrm((INTERMEDIATE, HIDDEN)),
        })
    return params


def pack_params(params):
    """Fuse K|V|Q weights, stack per-layer weights on a leading L axis, and
    pre-build the constant selection / rotation matrices used by the kernel."""
    layers = params["layers"]
    d = HEAD_DIM

    # per-head o_proj blocks placed at the V-lane rows of the KV slab
    ow_sel = jnp.zeros((NUM_LAYERS, NUM_HEADS, KV_SLAB, HIDDEN), jnp.float32)
    for l, p in enumerate(layers):
        for hq in range(NUM_HEADS):
            kv = hq // GROUP
            ow_sel = ow_sel.at[
                l, hq, KV_COLS + kv * d:KV_COLS + (kv + 1) * d, :
            ].set(p["o_w"][hq * d:(hq + 1) * d, :])

    return {
        "proj_w": params["proj_w"],
        "proj_b": params["proj_b"].reshape(1, HIDDEN),
        "norm_w": params["norm_w"].reshape(1, HIDDEN),
        "head_w_pad": jnp.pad(params["head_w"],
                              ((0, 0), (0, LOGITS_PAD - CODEC_VOCAB))),
        "rot_full": _rotate_half_matrix_kvq(),
        "mq_sel": _q_select_tensor(),
        "ow_sel": ow_sel,
        "ln1_w": jnp.stack([p["ln1_w"].reshape(1, HIDDEN) for p in layers]),
        "qkv_w": jnp.stack(
            [jnp.concatenate([p["k_w"], p["v_w"], p["q_w"]], axis=1)
             for p in layers]),
        "qkv_b": jnp.stack(
            [jnp.concatenate([p["k_b"], p["v_b"], p["q_b"]]).reshape(1, QKV_COLS)
             for p in layers]),
        "ln2_w": jnp.stack([p["ln2_w"].reshape(1, HIDDEN) for p in layers]),
        "gate_w": jnp.stack([p["gate_w"] for p in layers]),
        "up_w": jnp.stack([p["up_w"] for p in layers]),
        "down_w": jnp.stack([p["down_w"] for p in layers]),
    }


# ------------------------------ main -------------------------------------------
if __name__ == "__main__":
    key = jax.random.PRNGKey(0)
    kp, kx = jax.random.split(key)
    params = init_params(kp)
    packed = pack_params(params)

    inputs_embeds = jax.random.normal(kx, (BATCH, SEQ, INPUT_HIDDEN),
                                      dtype=jnp.float32)
    # get_position_ids() prefill: arange(S) stacked 3x  -> [3, 1, S]
    pos = jnp.arange(SEQ, dtype=jnp.int32)[None, :]
    position_ids = jnp.stack([pos, pos, pos])
    # get_attention_mask() prefill: (1 - tril) * float32_min  -> [1, 1, S, S]
    attention_mask = ((1.0 - jnp.tril(jnp.ones((1, 1, SEQ, SEQ), jnp.float32)))
                      * jnp.finfo(jnp.float32).min)

    fwd = jax.jit(talker_forward)
    logits, presents = fwd(packed, inputs_embeds, attention_mask, position_ids)
    jax.block_until_ready((logits, presents))

    assert logits.shape == (1, CODEC_VOCAB)
    assert presents.shape == (NUM_LAYERS, 2, BATCH, SEQ, NUM_KV_HEADS, HEAD_DIM)
    assert bool(jnp.all(jnp.isfinite(logits))) and bool(jnp.all(jnp.isfinite(presents)))

    # TODO(synk): generate()/token2wav/argmax loop and ONNX/file export are host-side
    # orchestration, not part of the forward kernel.
    print("KERNEL_OK")
</pallas_src>

<mosaic_0001>
module attributes {stable_mosaic.version = 11 : i64} {
  func.func @_talker_kernel(%arg0: memref<8x32xf32, #tpu.memory_space<vmem>>, %arg1: memref<32x32xf32, #tpu.memory_space<vmem>>, %arg2: memref<1x32xf32, #tpu.memory_space<vmem>>, %arg3: memref<8x64xf32, #tpu.memory_space<vmem>>, %arg4: memref<8x64xf32, #tpu.memory_space<vmem>>, %arg5: memref<64x64xf32, #tpu.memory_space<vmem>>, %arg6: memref<8x8xf32, #tpu.memory_space<vmem>>, %arg7: memref<4x64x32xf32, #tpu.memory_space<vmem>>, %arg8: memref<2x1x32xf32, #tpu.memory_space<vmem>>, %arg9: memref<2x32x64xf32, #tpu.memory_space<vmem>>, %arg10: memref<2x1x64xf32, #tpu.memory_space<vmem>>, %arg11: memref<2x4x32x32xf32, #tpu.memory_space<vmem>>, %arg12: memref<2x1x32xf32, #tpu.memory_space<vmem>>, %arg13: memref<2x32x64xf32, #tpu.memory_space<vmem>>, %arg14: memref<2x32x64xf32, #tpu.memory_space<vmem>>, %arg15: memref<2x64x32xf32, #tpu.memory_space<vmem>>, %arg16: memref<1x32xf32, #tpu.memory_space<vmem>>, %arg17: memref<32x128xf32, #tpu.memory_space<vmem>>, %arg18: memref<1x128xf32, #tpu.memory_space<vmem>>, %arg19: memref<8x64xf32, #tpu.memory_space<vmem>>) attributes {dimension_semantics = [], scalar_prefetch = 0 : i64, scratch_operands = 0 : i64, tpu.core_type = #tpu.core_type<tc>} {
    %c0 = arith.constant 0 : index
    %c0_0 = arith.constant 0 : index
    %0 = vector.load %arg0[%c0, %c0_0] : memref<8x32xf32, #tpu.memory_space<vmem>>, vector<8x32xf32>
    %c0_1 = arith.constant 0 : index
    %c0_2 = arith.constant 0 : index
    %1 = vector.load %arg1[%c0_1, %c0_2] : memref<32x32xf32, #tpu.memory_space<vmem>>, vector<32x32xf32>
    %cst = arith.constant dense<0.000000e+00> : vector<8x32xf32>
    %2 = tpu.matmul %0, %1, %cst {dimension_numbers = #tpu.dot_dimension_numbers<[1], [0], [0], [1], [0, 0, 1, 1], [], []>} : vector<8x32xf32>, vector<32x32xf32>, vector<8x32xf32> -> vector<8x32xf32>
    %c0_3 = arith.constant 0 : index
    %c0_4 = arith.constant 0 : index
    %3 = vector.load %arg2[%c0_3, %c0_4] : memref<1x32xf32, #tpu.memory_space<vmem>>, vector<1x32xf32>
    %4 = vector.broadcast %3 : vector<1x32xf32> to vector<8x32xf32>
    %5 = arith.addf %2, %4 : vector<8x32xf32>
    %c0_5 = arith.constant 0 : index
    %c0_6 = arith.constant 0 : index
    %6 = vector.load %arg3[%c0_5, %c0_6] : memref<8x64xf32, #tpu.memory_space<vmem>>, vector<8x64xf32>
    %c0_7 = arith.constant 0 : index
    %c0_8 = arith.constant 0 : index
    %7 = vector.load %arg4[%c0_7, %c0_8] : memref<8x64xf32, #tpu.memory_space<vmem>>, vector<8x64xf32>
    %c0_9 = arith.constant 0 : index
    %c0_10 = arith.constant 0 : index
    %8 = vector.load %arg5[%c0_9, %c0_10] : memref<64x64xf32, #tpu.memory_space<vmem>>, vector<64x64xf32>
    %c0_11 = arith.constant 0 : index
    %c0_12 = arith.constant 0 : index
    %9 = vector.load %arg6[%c0_11, %c0_12] : memref<8x8xf32, #tpu.memory_space<vmem>>, vector<8x8xf32>
    %c0_13 = arith.constant 0 : index
    %c0_14 = arith.constant 0 : index
    %c0_15 = arith.constant 0 : index
    %10 = vector.load %arg8[%c0_13, %c0_14, %c0_15] : memref<2x1x32xf32, #tpu.memory_space<vmem>>, vector<1x1x32xf32>
    %11 = vector.shape_cast %10 : vector<1x1x32xf32> to vector<1x32xf32>
    %12 = arith.mulf %5, %5 : vector<8x32xf32>
    %cst_16 = arith.constant dense<0.000000e+00> : vector<8xf32>
    %13 = vector.multi_reduction <add>, %12, %cst_16 [1] : vector<8x32xf32> to vector<8xf32>
    %14 = vector.shape_cast %13 : vector<8xf32> to vector<8x1xf32>
    %cst_17 = arith.constant 3.200000e+01 : f32
    %15 = vector.broadcast %cst_17 : f32 to vector<8x1xf32>
    %16 = arith.divf %14, %15 : vector<8x1xf32>
    %cst_18 = arith.constant 9.99999997E-7 : f32
    %17 = vector.broadcast %cst_18 : f32 to vector<8x1xf32>
    %18 = arith.addf %16, %17 : vector<8x1xf32>
    %19 = math.rsqrt %18 : vector<8x1xf32>
    %20 = vector.broadcast %19 : vector<8x1xf32> to vector<8x32xf32>
    %21 = arith.mulf %5, %20 : vector<8x32xf32>
    %22 = vector.broadcast %11 : vector<1x32xf32> to vector<8x32xf32>
    %23 = arith.mulf %21, %22 : vector<8x32xf32>
    %c0_19 = arith.constant 0 : index
    %c0_20 = arith.constant 0 : index
    %c0_21 = arith.constant 0 : index
    %24 = vector.load %arg9[%c0_19, %c0_20, %c0_21] : memref<2x32x64xf32, #tpu.memory_space<vmem>>, vector<1x32x64xf32>
    %25 = vector.shape_cast %24 : vector<1x32x64xf32> to vector<32x64xf32>
    %cst_22 = arith.constant dense<0.000000e+00> : vector<8x64xf32>
    %26 = tpu.matmul %23, %25, %cst_22 {dimension_numbers = #tpu.dot_dimension_numbers<[1], [0], [0], [1], [0, 0, 1, 1], [], []>} : vector<8x32xf32>, vector<32x64xf32>, vector<8x64xf32> -> vector<8x64xf32>
    %c0_23 = arith.constant 0 : index
    %c0_24 = arith.constant 0 : index
    %c0_25 = arith.constant 0 : index
    %27 = vector.load %arg10[%c0_23, %c0_24, %c0_25] : memref<2x1x64xf32, #tpu.memory_space<vmem>>, vector<1x1x64xf32>
    %28 = vector.shape_cast %27 : vector<1x1x64xf32> to vector<1x64xf32>
    %29 = vector.broadcast %28 : vector<1x64xf32> to vector<8x64xf32>
    %30 = arith.addf %26, %29 : vector<8x64xf32>
    %31 = arith.mulf %30, %6 : vector<8x64xf32>
    %cst_26 = arith.constant dense<0.000000e+00> : vector<8x64xf32>
    %32 = tpu.matmul %30, %8, %cst_26 {dimension_numbers = #tpu.dot_dimension_numbers<[1], [0], [0], [1], [0, 0, 1, 1], [], []>} : vector<8x64xf32>, vector<64x64xf32>, vector<8x64xf32> -> vector<8x64xf32>
    %33 = arith.mulf %32, %7 : vector<8x64xf32>
    %34 = arith.addf %31, %33 : vector<8x64xf32>
    %35 = vector.extract_strided_slice %34 {offsets = [0, 0], sizes = [8, 32], strides = [1, 1]} : vector<8x64xf32> to vector<8x32xf32>
    %cst_27 = arith.constant 0.000000e+00 : f32
    %36 = vector.broadcast %cst_27 : f32 to vector<8x32xf32>
    %c0_28 = arith.constant 0 : index
    %c0_29 = arith.constant 0 : index
    %c0_30 = arith.constant 0 : index
    %37 = vector.load %arg7[%c0_28, %c0_29, %c0_30] : memref<4x64x32xf32, #tpu.memory_space<vmem>>, vector<1x64x32xf32>
    %38 = vector.shape_cast %37 : vector<1x64x32xf32> to vector<64x32xf32>
    %cst_31 = arith.constant dense<0.000000e+00> : vector<8x32xf32>
    %39 = tpu.matmul %34, %38, %cst_31 {dimension_numbers = #tpu.dot_dimension_numbers<[1], [0], [0], [1], [0, 0, 1, 1], [], []>} : vector<8x64xf32>, vector<64x32xf32>, vector<8x32xf32> -> vector<8x32xf32>
    %cst_32 = arith.constant dense<0.000000e+00> : vector<8x8xf32>
    %40 = tpu.matmul %39, %35, %cst_32 {dimension_numbers = #tpu.dot_dimension_numbers<[1], [1], [0], [0], [0, 0, 1, 0], [], []>} : vector<8x32xf32>, vector<8x32xf32>, vector<8x8xf32> -> vector<8x8xf32>
    %cst_33 = arith.constant 0.353553385 : f32
    %41 = vector.broadcast %cst_33 : f32 to vector<8x8xf32>
    %42 = arith.mulf %40, %41 : vector<8x8xf32>
    %43 = arith.addf %42, %9 : vector<8x8xf32>
    %cst_34 = arith.constant dense<0xFF800000> : vector<8xf32>
    %44 = vector.multi_reduction <maximumf>, %43, %cst_34 [1] : vector<8x8xf32> to vector<8xf32>
    %45 = vector.shape_cast %44 : vector<8xf32> to vector<8x1xf32>
    %46 = vector.broadcast %45 : vector<8x1xf32> to vector<8x8xf32>
    %47 = arith.subf %43, %46 : vector<8x8xf32>
    %48 = math.exp %47 : vector<8x8xf32>
    %cst_35 = arith.constant dense<0.000000e+00> : vector<8xf32>
    %49 = vector.multi_reduction <add>, %48, %cst_35 [1] : vector<8x8xf32> to vector<8xf32>
    %50 = vector.shape_cast %49 : vector<8xf32> to vector<8x1xf32>
    %51 = tpu.reciprocal %50 {approx = true} : vector<8x1xf32> -> vector<8x1xf32>
    %52 = vector.broadcast %51 : vector<8x1xf32> to vector<8x8xf32>
    %53 = arith.mulf %48, %52 : vector<8x8xf32>
    %cst_36 = arith.constant dense<0.000000e+00> : vector<8x32xf32>
    %54 = tpu.matmul %53, %35, %cst_36 {dimension_numbers = #tpu.dot_dimension_numbers<[1], [0], [0], [1], [0, 0, 1, 1], [], []>} : vector<8x8xf32>, vector<8x32xf32>, vector<8x32xf32> -> vector<8x32xf32>
    %c0_37 = arith.constant 0 : index
    %c0_38 = arith.constant 0 : index
    %c0_39 = arith.constant 0 : index
    %c0_40 = arith.constant 0 : index
    %55 = vector.load %arg11[%c0_37, %c0_38, %c0_39, %c0_40] : memref<2x4x32x32xf32, #tpu.memory_space<vmem>>, vector<1x1x32x32xf32>
    %56 = vector.shape_cast %55 : vector<1x1x32x32xf32> to vector<32x32xf32>
    %cst_41 = arith.constant dense<0.000000e+00> : vector<8x32xf32>
    %57 = tpu.matmul %54, %56, %cst_41 {dimension_numbers = #tpu.dot_dimension_numbers<[1], [0], [0], [1], [0, 0, 1, 1], [], []>} : vector<8x32xf32>, vector<32x32xf32>, vector<8x32xf32> -> vector<8x32xf32>
    %58 = arith.addf %36, %57 : vector<8x32xf32>
    %c1 = arith.constant 1 : index
    %c0_42 = arith.constant 0 : index
    %c0_43 = arith.constant 0 : index
    %59 = vector.load %arg7[%c1, %c0_42, %c0_43] : memref<4x64x32xf32, #tpu.memory_space<vmem>>, vector<1x64x32xf32>
    %60 = vector.shape_cast %59 : vector<1x64x32xf32> to vector<64x32xf32>
    %cst_44 = arith.constant dense<0.000000e+00> : vector<8x32xf32>
    %61 = tpu.matmul %34, %60, %cst_44 {dimension_numbers = #tpu.dot_dimension_numbers<[1], [0], [0], [1], [0, 0, 1, 1], [], []>} : vector<8x64xf32>, vector<64x32xf32>, vector<8x32xf32> -> vector<8x32xf32>
    %cst_45 = arith.constant dense<0.000000e+00> : vector<8x8xf32>
    %62 = tpu.matmul %61, %35, %cst_45 {dimension_numbers = #tpu.dot_dimension_numbers<[1], [1], [0], [0], [0, 0, 1, 0], [], []>} : vector<8x32xf32>, vector<8x32xf32>, vector<8x8xf32> -> vector<8x8xf32>
    %cst_46 = arith.constant 0.353553385 : f32
    %63 = vector.broadcast %cst_46 : f32 to vector<8x8xf32>
    %64 = arith.mulf %62, %63 : vector<8x8xf32>
    %65 = arith.addf %64, %9 : vector<8x8xf32>
    %cst_47 = arith.constant dense<0xFF800000> : vector<8xf32>
    %66 = vector.multi_reduction <maximumf>, %65, %cst_47 [1] : vector<8x8xf32> to vector<8xf32>
    %67 = vector.shape_cast %66 : vector<8xf32> to vector<8x1xf32>
    %68 = vector.broadcast %67 : vector<8x1xf32> to vector<8x8xf32>
    %69 = arith.subf %65, %68 : vector<8x8xf32>
    %70 = math.exp %69 : vector<8x8xf32>
    %cst_48 = arith.constant dense<0.000000e+00> : vector<8xf32>
    %71 = vector.multi_reduction <add>, %70, %cst_48 [1] : vector<8x8xf32> to vector<8xf32>
    %72 = vector.shape_cast %71 : vector<8xf32> to vector<8x1xf32>
    %73 = tpu.reciprocal %72 {approx = true} : vector<8x1xf32> -> vector<8x1xf32>
    %74 = vector.broadcast %73 : vector<8x1xf32> to vector<8x8xf32>
    %75 = arith.mulf %70, %74 : vector<8x8xf32>
    %cst_49 = arith.constant dense<0.000000e+00> : vector<8x32xf32>
    %76 = tpu.matmul %75, %35, %cst_49 {dimension_numbers = #tpu.dot_dimension_numbers<[1], [0], [0], [1], [0, 0, 1, 1], [], []>} : vector<8x8xf32>, vector<8x32xf32>, vector<8x32xf32> -> vector<8x32xf32>
    %c0_50 = arith.constant 0 : index
    %c1_51 = arith.constant 1 : index
    %c0_52 = arith.constant 0 : index
    %c0_53 = arith.constant 0 : index
    %77 = vector.load %arg11[%c0_50, %c1_51, %c0_52, %c0_53] : memref<2x4x32x32xf32, #tpu.memory_space<vmem>>, vector<1x1x32x32xf32>
    %78 = vector.shape_cast %77 : vector<1x1x32x32xf32> to vector<32x32xf32>
    %cst_54 = arith.constant dense<0.000000e+00> : vector<8x32xf32>
    %79 = tpu.matmul %76, %78, %cst_54 {dimension_numbers = #tpu.dot_dimension_numbers<[1], [0], [0], [1], [0, 0, 1, 1], [], []>} : vector<8x32xf32>, vector<32x32xf32>, vector<8x32xf32> -> vector<8x32xf32>
    %80 = arith.addf %58, %79 : vector<8x32xf32>
    %c2 = arith.constant 2 : index
    %c0_55 = arith.constant 0 : index
    %c0_56 = arith.constant 0 : index
    %81 = vector.load %arg7[%c2, %c0_55, %c0_56] : memref<4x64x32xf32, #tpu.memory_space<vmem>>, vector<1x64x32xf32>
    %82 = vector.shape_cast %81 : vector<1x64x32xf32> to vector<64x32xf32>
    %cst_57 = arith.constant dense<0.000000e+00> : vector<8x32xf32>
    %83 = tpu.matmul %34, %82, %cst_57 {dimension_numbers = #tpu.dot_dimension_numbers<[1], [0], [0], [1], [0, 0, 1, 1], [], []>} : vector<8x64xf32>, vector<64x32xf32>, vector<8x32xf32> -> vector<8x32xf32>
    %cst_58 = arith.constant dense<0.000000e+00> : vector<8x8xf32>
    %84 = tpu.matmul %83, %35, %cst_58 {dimension_numbers = #tpu.dot_dimension_numbers<[1], [1], [0], [0], [0, 0, 1, 0], [], []>} : vector<8x32xf32>, vector<8x32xf32>, vector<8x8xf32> -> vector<8x8xf32>
    %cst_59 = arith.constant 0.353553385 : f32
    %85 = vector.broadcast %cst_59 : f32 to vector<8x8xf32>
    %86 = arith.mulf %84, %85 : vector<8x8xf32>
    %87 = arith.addf %86, %9 : vector<8x8xf32>
    %cst_60 = arith.constant dense<0xFF800000> : vector<8xf32>
    %88 = vector.multi_reduction <maximumf>, %87, %cst_60 [1] : vector<8x8xf32> to vector<8xf32>
    %89 = vector.shape_cast %88 : vector<8xf32> to vector<8x1xf32>
    %90 = vector.broadcast %89 : vector<8x1xf32> to vector<8x8xf32>
    %91 = arith.subf %87, %90 : vector<8x8xf32>
    %92 = math.exp %91 : vector<8x8xf32>
    %cst_61 = arith.constant dense<0.000000e+00> : vector<8xf32>
    %93 = vector.multi_reduction <add>, %92, %cst_61 [1] : vector<8x8xf32> to vector<8xf32>
    %94 = vector.shape_cast %93 : vector<8xf32> to vector<8x1xf32>
    %95 = tpu.reciprocal %94 {approx = true} : vector<8x1xf32> -> vector<8x1xf32>
    %96 = vector.broadcast %95 : vector<8x1xf32> to vector<8x8xf32>
    %97 = arith.mulf %92, %96 : vector<8x8xf32>
    %cst_62 = arith.constant dense<0.000000e+00> : vector<8x32xf32>
    %98 = tpu.matmul %97, %35, %cst_62 {dimension_numbers = #tpu.dot_dimension_numbers<[1], [0], [0], [1], [0, 0, 1, 1], [], []>} : vector<8x8xf32>, vector<8x32xf32>, vector<8x32xf32> -> vector<8x32xf32>
    %c0_63 = arith.constant 0 : index
    %c2_64 = arith.constant 2 : index
    %c0_65 = arith.constant 0 : index
    %c0_66 = arith.constant 0 : index
    %99 = vector.load %arg11[%c0_63, %c2_64, %c0_65, %c0_66] : memref<2x4x32x32xf32, #tpu.memory_space<vmem>>, vector<1x1x32x32xf32>
    %100 = vector.shape_cast %99 : vector<1x1x32x32xf32> to vector<32x32xf32>
    %cst_67 = arith.constant dense<0.000000e+00> : vector<8x32xf32>
    %101 = tpu.matmul %98, %100, %cst_67 {dimension_numbers = #tpu.dot_dimension_numbers<[1], [0], [0], [1], [0, 0, 1, 1], [], []>} : vector<8x32xf32>, vector<32x32xf32>, vector<8x32xf32> -> vector<8x32xf32>
    %102 = arith.addf %80, %101 : vector<8x32xf32>
    %c3 = arith.constant 3 : index
    %c0_68 = arith.constant 0 : index
    %c0_69 = arith.constant 0 : index
    %103 = vector.load %arg7[%c3, %c0_68, %c0_69] : memref<4x64x32xf32, #tpu.memory_space<vmem>>, vector<1x64x32xf32>
    %104 = vector.shape_cast %103 : vector<1x64x32xf32> to vector<64x32xf32>
    %cst_70 = arith.constant dense<0.000000e+00> : vector<8x32xf32>
    %105 = tpu.matmul %34, %104, %cst_70 {dimension_numbers = #tpu.dot_dimension_numbers<[1], [0], [0], [1], [0, 0, 1, 1], [], []>} : vector<8x64xf32>, vector<64x32xf32>, vector<8x32xf32> -> vector<8x32xf32>
    %cst_71 = arith.constant dense<0.000000e+00> : vector<8x8xf32>
    %106 = tpu.matmul %105, %35, %cst_71 {dimension_numbers = #tpu.dot_dimension_numbers<[1], [1], [0], [0], [0, 0, 1, 0], [], []>} : vector<8x32xf32>, vector<8x32xf32>, vector<8x8xf32> -> vector<8x8xf32>
    %cst_72 = arith.constant 0.353553385 : f32
    %107 = vector.broadcast %cst_72 : f32 to vector<8x8xf32>
    %108 = arith.mulf %106, %107 : vector<8x8xf32>
    %109 = arith.addf %108, %9 : vector<8x8xf32>
    %cst_73 = arith.constant dense<0xFF800000> : vector<8xf32>
    %110 = vector.multi_reduction <maximumf>, %109, %cst_73 [1] : vector<8x8xf32> to vector<8xf32>
    %111 = vector.shape_cast %110 : vector<8xf32> to vector<8x1xf32>
    %112 = vector.broadcast %111 : vector<8x1xf32> to vector<8x8xf32>
    %113 = arith.subf %109, %112 : vector<8x8xf32>
    %114 = math.exp %113 : vector<8x8xf32>
    %cst_74 = arith.constant dense<0.000000e+00> : vector<8xf32>
    %115 = vector.multi_reduction <add>, %114, %cst_74 [1] : vector<8x8xf32> to vector<8xf32>
    %116 = vector.shape_cast %115 : vector<8xf32> to vector<8x1xf32>
    %117 = tpu.reciprocal %116 {approx = true} : vector<8x1xf32> -> vector<8x1xf32>
    %118 = vector.broadcast %117 : vector<8x1xf32> to vector<8x8xf32>
    %119 = arith.mulf %114, %118 : vector<8x8xf32>
    %cst_75 = arith.constant dense<0.000000e+00> : vector<8x32xf32>
    %120 = tpu.matmul %119, %35, %cst_75 {dimension_numbers = #tpu.dot_dimension_numbers<[1], [0], [0], [1], [0, 0, 1, 1], [], []>} : vector<8x8xf32>, vector<8x32xf32>, vector<8x32xf32> -> vector<8x32xf32>
    %c0_76 = arith.constant 0 : index
    %c3_77 = arith.constant 3 : index
    %c0_78 = arith.constant 0 : index
    %c0_79 = arith.constant 0 : index
    %121 = vector.load %arg11[%c0_76, %c3_77, %c0_78, %c0_79] : memref<2x4x32x32xf32, #tpu.memory_space<vmem>>, vector<1x1x32x32xf32>
    %122 = vector.shape_cast %121 : vector<1x1x32x32xf32> to vector<32x32xf32>
    %cst_80 = arith.constant dense<0.000000e+00> : vector<8x32xf32>
    %123 = tpu.matmul %120, %122, %cst_80 {dimension_numbers = #tpu.dot_dimension_numbers<[1], [0], [0], [1], [0, 0, 1, 1], [], []>} : vector<8x32xf32>, vector<32x32xf32>, vector<8x32xf32> -> vector<8x32xf32>
    %124 = arith.addf %102, %123 : vector<8x32xf32>
    %125 = arith.addf %5, %124 : vector<8x32xf32>
    %c0_81 = arith.constant 0 : index
    %c0_82 = arith.constant 0 : index
    %c0_83 = arith.constant 0 : index
    %126 = vector.load %arg12[%c0_81, %c0_82, %c0_83] : memref<2x1x32xf32, #tpu.memory_space<vmem>>, vector<1x1x32xf32>
    %127 = vector.shape_cast %126 : vector<1x1x32xf32> to vector<1x32xf32>
    %128 = arith.mulf %125, %125 : vector<8x32xf32>
    %cst_84 = arith.constant dense<0.000000e+00> : vector<8xf32>
    %129 = vector.multi_reduction <add>, %128, %cst_84 [1] : vector<8x32xf32> to vector<8xf32>
    %130 = vector.shape_cast %129 : vector<8xf32> to vector<8x1xf32>
    %cst_85 = arith.constant 3.200000e+01 : f32
    %131 = vector.broadcast %cst_85 : f32 to vector<8x1xf32>
    %132 = arith.divf %130, %131 : vector<8x1xf32>
    %cst_86 = arith.constant 9.99999997E-7 : f32
    %133 = vector.broadcast %cst_86 : f32 to vector<8x1xf32>
    %134 = arith.addf %132, %133 : vector<8x1xf32>
    %135 = math.rsqrt %134 : vector<8x1xf32>
    %136 = vector.broadcast %135 : vector<8x1xf32> to vector<8x32xf32>
    %137 = arith.mulf %125, %136 : vector<8x32xf32>
    %138 = vector.broadcast %127 : vector<1x32xf32> to vector<8x32xf32>
    %139 = arith.mulf %137, %138 : vector<8x32xf32>
    %c0_87 = arith.constant 0 : index
    %c0_88 = arith.constant 0 : index
    %c0_89 = arith.constant 0 : index
    %140 = vector.load %arg13[%c0_87, %c0_88, %c0_89] : memref<2x32x64xf32, #tpu.memory_space<vmem>>, vector<1x32x64xf32>
    %141 = vector.shape_cast %140 : vector<1x32x64xf32> to vector<32x64xf32>
    %cst_90 = arith.constant dense<0.000000e+00> : vector<8x64xf32>
    %142 = tpu.matmul %139, %141, %cst_90 {dimension_numbers = #tpu.dot_dimension_numbers<[1], [0], [0], [1], [0, 0, 1, 1], [], []>} : vector<8x32xf32>, vector<32x64xf32>, vector<8x64xf32> -> vector<8x64xf32>
    %c0_91 = arith.constant 0 : index
    %c0_92 = arith.constant 0 : index
    %c0_93 = arith.constant 0 : index
    %143 = vector.load %arg14[%c0_91, %c0_92, %c0_93] : memref<2x32x64xf32, #tpu.memory_space<vmem>>, vector<1x32x64xf32>
    %144 = vector.shape_cast %143 : vector<1x32x64xf32> to vector<32x64xf32>
    %cst_94 = arith.constant dense<0.000000e+00> : vector<8x64xf32>
    %145 = tpu.matmul %139, %144, %cst_94 {dimension_numbers = #tpu.dot_dimension_numbers<[1], [0], [0], [1], [0, 0, 1, 1], [], []>} : vector<8x32xf32>, vector<32x64xf32>, vector<8x64xf32> -> vector<8x64xf32>
    %146 = arith.negf %142 : vector<8x64xf32>
    %147 = math.exp %146 : vector<8x64xf32>
    %cst_95 = arith.constant 1.000000e+00 : f32
    %148 = vector.broadcast %cst_95 : f32 to vector<8x64xf32>
    %149 = arith.addf %148, %147 : vector<8x64xf32>
    %150 = arith.divf %148, %149 : vector<8x64xf32>
    %151 = arith.mulf %142, %150 : vector<8x64xf32>
    %152 = arith.mulf %151, %145 : vector<8x64xf32>
    %c0_96 = arith.constant 0 : index
    %c0_97 = arith.constant 0 : index
    %c0_98 = arith.constant 0 : index
    %153 = vector.load %arg15[%c0_96, %c0_97, %c0_98] : memref<2x64x32xf32, #tpu.memory_space<vmem>>, vector<1x64x32xf32>
    %154 = vector.shape_cast %153 : vector<1x64x32xf32> to vector<64x32xf32>
    %cst_99 = arith.constant dense<0.000000e+00> : vector<8x32xf32>
    %155 = tpu.matmul %152, %154, %cst_99 {dimension_numbers = #tpu.dot_dimension_numbers<[1], [0], [0], [1], [0, 0, 1, 1], [], []>} : vector<8x64xf32>, vector<64x32xf32>, vector<8x32xf32> -> vector<8x32xf32>
    %156 = arith.addf %125, %155 : vector<8x32xf32>
    %c1_100 = arith.constant 1 : index
    %c0_101 = arith.constant 0 : index
    %c0_102 = arith.constant 0 : index
    %157 = vector.load %arg8[%c1_100, %c0_101, %c0_102] : memref<2x1x32xf32, #tpu.memory_space<vmem>>, vector<1x1x32xf32>
    %158 = vector.shape_cast %157 : vector<1x1x32xf32> to vector<1x32xf32>
    %159 = arith.mulf %156, %156 : vector<8x32xf32>
    %cst_103 = arith.constant dense<0.000000e+00> : vector<8xf32>
    %160 = vector.multi_reduction <add>, %159, %cst_103 [1] : vector<8x32xf32> to vector<8xf32>
    %161 = vector.shape_cast %160 : vector<8xf32> to vector<8x1xf32>
    %cst_104 = arith.constant 3.200000e+01 : f32
    %162 = vector.broadcast %cst_104 : f32 to vector<8x1xf32>
    %163 = arith.divf %161, %162 : vector<8x1xf32>
    %cst_105 = arith.constant 9.99999997E-7 : f32
    %164 = vector.broadcast %cst_105 : f32 to vector<8x1xf32>
    %165 = arith.addf %163, %164 : vector<8x1xf32>
    %166 = math.rsqrt %165 : vector<8x1xf32>
    %167 = vector.broadcast %166 : vector<8x1xf32> to vector<8x32xf32>
    %168 = arith.mulf %156, %167 : vector<8x32xf32>
    %169 = vector.broadcast %158 : vector<1x32xf32> to vector<8x32xf32>
    %170 = arith.mulf %168, %169 : vector<8x32xf32>
    %c1_106 = arith.constant 1 : index
    %c0_107 = arith.constant 0 : index
    %c0_108 = arith.constant 0 : index
    %171 = vector.load %arg9[%c1_106, %c0_107, %c0_108] : memref<2x32x64xf32, #tpu.memory_space<vmem>>, vector<1x32x64xf32>
    %172 = vector.shape_cast %171 : vector<1x32x64xf32> to vector<32x64xf32>
    %cst_109 = arith.constant dense<0.000000e+00> : vector<8x64xf32>
    %173 = tpu.matmul %170, %172, %cst_109 {dimension_numbers = #tpu.dot_dimension_numbers<[1], [0], [0], [1], [0, 0, 1, 1], [], []>} : vector<8x32xf32>, vector<32x64xf32>, vector<8x64xf32> -> vector<8x64xf32>
    %c1_110 = arith.constant 1 : index
    %c0_111 = arith.constant 0 : index
    %c0_112 = arith.constant 0 : index
    %174 = vector.load %arg10[%c1_110, %c0_111, %c0_112] : memref<2x1x64xf32, #tpu.memory_space<vmem>>, vector<1x1x64xf32>
    %175 = vector.shape_cast %174 : vector<1x1x64xf32> to vector<1x64xf32>
    %176 = vector.broadcast %175 : vector<1x64xf32> to vector<8x64xf32>
    %177 = arith.addf %173, %176 : vector<8x64xf32>
    %178 = arith.mulf %177, %6 : vector<8x64xf32>
    %cst_113 = arith.constant dense<0.000000e+00> : vector<8x64xf32>
    %179 = tpu.matmul %177, %8, %cst_113 {dimension_numbers = #tpu.dot_dimension_numbers<[1], [0], [0], [1], [0, 0, 1, 1], [], []>} : vector<8x64xf32>, vector<64x64xf32>, vector<8x64xf32> -> vector<8x64xf32>
    %180 = arith.mulf %179, %7 : vector<8x64xf32>
    %181 = arith.addf %178, %180 : vector<8x64xf32>
    %182 = vector.extract_strided_slice %181 {offsets = [0, 0], sizes = [8, 32], strides = [1, 1]} : vector<8x64xf32> to vector<8x32xf32>
    %cst_114 = arith.constant 0.000000e+00 : f32
    %183 = vector.broadcast %cst_114 : f32 to vector<8x32xf32>
    %c0_115 = arith.constant 0 : index
    %c0_116 = arith.constant 0 : index
    %c0_117 = arith.constant 0 : index
    %184 = vector.load %arg7[%c0_115, %c0_116, %c0_117] : memref<4x64x32xf32, #tpu.memory_space<vmem>>, vector<1x64x32xf32>
    %185 = vector.shape_cast %184 : vector<1x64x32xf32> to vector<64x32xf32>
    %cst_118 = arith.constant dense<0.000000e+00> : vector<8x32xf32>
    %186 = tpu.matmul %181, %185, %cst_118 {dimension_numbers = #tpu.dot_dimension_numbers<[1], [0], [0], [1], [0, 0, 1, 1], [], []>} : vector<8x64xf32>, vector<64x32xf32>, vector<8x32xf32> -> vector<8x32xf32>
    %cst_119 = arith.constant dense<0.000000e+00> : vector<8x8xf32>
    %187 = tpu.matmul %186, %182, %cst_119 {dimension_numbers = #tpu.dot_dimension_numbers<[1], [1], [0], [0], [0, 0, 1, 0], [], []>} : vector<8x32xf32>, vector<8x32xf32>, vector<8x8xf32> -> vector<8x8xf32>
    %cst_120 = arith.constant 0.353553385 : f32
    %188 = vector.broadcast %cst_120 : f32 to vector<8x8xf32>
    %189 = arith.mulf %187, %188 : vector<8x8xf32>
    %190 = arith.addf %189, %9 : vector<8x8xf32>
    %cst_121 = arith.constant dense<0xFF800000> : vector<8xf32>
    %191 = vector.multi_reduction <maximumf>, %190, %cst_121 [1] : vector<8x8xf32> to vector<8xf32>
    %192 = vector.shape_cast %191 : vector<8xf32> to vector<8x1xf32>
    %193 = vector.broadcast %192 : vector<8x1xf32> to vector<8x8xf32>
    %194 = arith.subf %190, %193 : vector<8x8xf32>
    %195 = math.exp %194 : vector<8x8xf32>
    %cst_122 = arith.constant dense<0.000000e+00> : vector<8xf32>
    %196 = vector.multi_reduction <add>, %195, %cst_122 [1] : vector<8x8xf32> to vector<8xf32>
    %197 = vector.shape_cast %196 : vector<8xf32> to vector<8x1xf32>
    %198 = tpu.reciprocal %197 {approx = true} : vector<8x1xf32> -> vector<8x1xf32>
    %199 = vector.broadcast %198 : vector<8x1xf32> to vector<8x8xf32>
    %200 = arith.mulf %195, %199 : vector<8x8xf32>
    %cst_123 = arith.constant dense<0.000000e+00> : vector<8x32xf32>
    %201 = tpu.matmul %200, %182, %cst_123 {dimension_numbers = #tpu.dot_dimension_numbers<[1], [0], [0], [1], [0, 0, 1, 1], [], []>} : vector<8x8xf32>, vector<8x32xf32>, vector<8x32xf32> -> vector<8x32xf32>
    %c1_124 = arith.constant 1 : index
    %c0_125 = arith.constant 0 : index
    %c0_126 = arith.constant 0 : index
    %c0_127 = arith.constant 0 : index
    %202 = vector.load %arg11[%c1_124, %c0_125, %c0_126, %c0_127] : memref<2x4x32x32xf32, #tpu.memory_space<vmem>>, vector<1x1x32x32xf32>
    %203 = vector.shape_cast %202 : vector<1x1x32x32xf32> to vector<32x32xf32>
    %cst_128 = arith.constant dense<0.000000e+00> : vector<8x32xf32>
    %204 = tpu.matmul %201, %203, %cst_128 {dimension_numbers = #tpu.dot_dimension_numbers<[1], [0], [0], [1], [0, 0, 1, 1], [], []>} : vector<8x32xf32>, vector<32x32xf32>, vector<8x32xf32> -> vector<8x32xf32>
    %205 = arith.addf %183, %204 : vector<8x32xf32>
    %c1_129 = arith.constant 1 : index
    %c0_130 = arith.constant 0 : index
    %c0_131 = arith.constant 0 : index
    %206 = vector.load %arg7[%c1_129, %c0_130, %c0_131] : memref<4x64x32xf32, #tpu.memory_space<vmem>>, vector<1x64x32xf32>
    %207 = vector.shape_cast %206 : vector<1x64x32xf32> to vector<64x32xf32>
    %cst_132 = arith.constant dense<0.000000e+00> : vector<8x32xf32>
    %208 = tpu.matmul %181, %207, %cst_132 {dimension_numbers = #tpu.dot_dimension_numbers<[1], [0], [0], [1], [0, 0, 1, 1], [], []>} : vector<8x64xf32>, vector<64x32xf32>, vector<8x32xf32> -> vector<8x32xf32>
    %cst_133 = arith.constant dense<0.000000e+00> : vector<8x8xf32>
    %209 = tpu.matmul %208, %182, %cst_133 {dimension_numbers = #tpu.dot_dimension_numbers<[1], [1], [0], [0], [0, 0, 1, 0], [], []>} : vector<8x32xf32>, vector<8x32xf32>, vector<8x8xf32> -> vector<8x8xf32>
    %cst_134 = arith.constant 0.353553385 : f32
    %210 = vector.broadcast %cst_134 : f32 to vector<8x8xf32>
    %211 = arith.mulf %209, %210 : vector<8x8xf32>
    %212 = arith.addf %211, %9 : vector<8x8xf32>
    %cst_135 = arith.constant dense<0xFF800000> : vector<8xf32>
    %213 = vector.multi_reduction <maximumf>, %212, %cst_135 [1] : vector<8x8xf32> to vector<8xf32>
    %214 = vector.shape_cast %213 : vector<8xf32> to vector<8x1xf32>
    %215 = vector.broadcast %214 : vector<8x1xf32> to vector<8x8xf32>
    %216 = arith.subf %212, %215 : vector<8x8xf32>
    %217 = math.exp %216 : vector<8x8xf32>
    %cst_136 = arith.constant dense<0.000000e+00> : vector<8xf32>
    %218 = vector.multi_reduction <add>, %217, %cst_136 [1] : vector<8x8xf32> to vector<8xf32>
    %219 = vector.shape_cast %218 : vector<8xf32> to vector<8x1xf32>
    %220 = tpu.reciprocal %219 {approx = true} : vector<8x1xf32> -> vector<8x1xf32>
    %221 = vector.broadcast %220 : vector<8x1xf32> to vector<8x8xf32>
    %222 = arith.mulf %217, %221 : vector<8x8xf32>
    %cst_137 = arith.constant dense<0.000000e+00> : vector<8x32xf32>
    %223 = tpu.matmul %222, %182, %cst_137 {dimension_numbers = #tpu.dot_dimension_numbers<[1], [0], [0], [1], [0, 0, 1, 1], [], []>} : vector<8x8xf32>, vector<8x32xf32>, vector<8x32xf32> -> vector<8x32xf32>
    %c1_138 = arith.constant 1 : index
    %c1_139 = arith.constant 1 : index
    %c0_140 = arith.constant 0 : index
    %c0_141 = arith.constant 0 : index
    %224 = vector.load %arg11[%c1_138, %c1_139, %c0_140, %c0_141] : memref<2x4x32x32xf32, #tpu.memory_space<vmem>>, vector<1x1x32x32xf32>
    %225 = vector.shape_cast %224 : vector<1x1x32x32xf32> to vector<32x32xf32>
    %cst_142 = arith.constant dense<0.000000e+00> : vector<8x32xf32>
    %226 = tpu.matmul %223, %225, %cst_142 {dimension_numbers = #tpu.dot_dimension_numbers<[1], [0], [0], [1], [0, 0, 1, 1], [], []>} : vector<8x32xf32>, vector<32x32xf32>, vector<8x32xf32> -> vector<8x32xf32>
    %227 = arith.addf %205, %226 : vector<8x32xf32>
    %c2_143 = arith.constant 2 : index
    %c0_144 = arith.constant 0 : index
    %c0_145 = arith.constant 0 : index
    %228 = vector.load %arg7[%c2_143, %c0_144, %c0_145] : memref<4x64x32xf32, #tpu.memory_space<vmem>>, vector<1x64x32xf32>
    %229 = vector.shape_cast %228 : vector<1x64x32xf32> to vector<64x32xf32>
    %cst_146 = arith.constant dense<0.000000e+00> : vector<8x32xf32>
    %230 = tpu.matmul %181, %229, %cst_146 {dimension_numbers = #tpu.dot_dimension_numbers<[1], [0], [0], [1], [0, 0, 1, 1], [], []>} : vector<8x64xf32>, vector<64x32xf32>, vector<8x32xf32> -> vector<8x32xf32>
    %cst_147 = arith.constant dense<0.000000e+00> : vector<8x8xf32>
    %231 = tpu.matmul %230, %182, %cst_147 {dimension_numbers = #tpu.dot_dimension_numbers<[1], [1], [0], [0], [0, 0, 1, 0], [], []>} : vector<8x32xf32>, vector<8x32xf32>, vector<8x8xf32> -> vector<8x8xf32>
    %cst_148 = arith.constant 0.353553385 : f32
    %232 = vector.broadcast %cst_148 : f32 to vector<8x8xf32>
    %233 = arith.mulf %231, %232 : vector<8x8xf32>
    %234 = arith.addf %233, %9 : vector<8x8xf32>
    %cst_149 = arith.constant dense<0xFF800000> : vector<8xf32>
    %235 = vector.multi_reduction <maximumf>, %234, %cst_149 [1] : vector<8x8xf32> to vector<8xf32>
    %236 = vector.shape_cast %235 : vector<8xf32> to vector<8x1xf32>
    %237 = vector.broadcast %236 : vector<8x1xf32> to vector<8x8xf32>
    %238 = arith.subf %234, %237 : vector<8x8xf32>
    %239 = math.exp %238 : vector<8x8xf32>
    %cst_150 = arith.constant dense<0.000000e+00> : vector<8xf32>
    %240 = vector.multi_reduction <add>, %239, %cst_150 [1] : vector<8x8xf32> to vector<8xf32>
    %241 = vector.shape_cast %240 : vector<8xf32> to vector<8x1xf32>
    %242 = tpu.reciprocal %241 {approx = true} : vector<8x1xf32> -> vector<8x1xf32>
    %243 = vector.broadcast %242 : vector<8x1xf32> to vector<8x8xf32>
    %244 = arith.mulf %239, %243 : vector<8x8xf32>
    %cst_151 = arith.constant dense<0.000000e+00> : vector<8x32xf32>
    %245 = tpu.matmul %244, %182, %cst_151 {dimension_numbers = #tpu.dot_dimension_numbers<[1], [0], [0], [1], [0, 0, 1, 1], [], []>} : vector<8x8xf32>, vector<8x32xf32>, vector<8x32xf32> -> vector<8x32xf32>
    %c1_152 = arith.constant 1 : index
    %c2_153 = arith.constant 2 : index
    %c0_154 = arith.constant 0 : index
    %c0_155 = arith.constant 0 : index
    %246 = vector.load %arg11[%c1_152, %c2_153, %c0_154, %c0_155] : memref<2x4x32x32xf32, #tpu.memory_space<vmem>>, vector<1x1x32x32xf32>
    %247 = vector.shape_cast %246 : vector<1x1x32x32xf32> to vector<32x32xf32>
    %cst_156 = arith.constant dense<0.000000e+00> : vector<8x32xf32>
    %248 = tpu.matmul %245, %247, %cst_156 {dimension_numbers = #tpu.dot_dimension_numbers<[1], [0], [0], [1], [0, 0, 1, 1], [], []>} : vector<8x32xf32>, vector<32x32xf32>, vector<8x32xf32> -> vector<8x32xf32>
    %249 = arith.addf %227, %248 : vector<8x32xf32>
    %c3_157 = arith.constant 3 : index
    %c0_158 = arith.constant 0 : index
    %c0_159 = arith.constant 0 : index
    %250 = vector.load %arg7[%c3_157, %c0_158, %c0_159] : memref<4x64x32xf32, #tpu.memory_space<vmem>>, vector<1x64x32xf32>
    %251 = vector.shape_cast %250 : vector<1x64x32xf32> to vector<64x32xf32>
    %cst_160 = arith.constant dense<0.000000e+00> : vector<8x32xf32>
    %252 = tpu.matmul %181, %251, %cst_160 {dimension_numbers = #tpu.dot_dimension_numbers<[1], [0], [0], [1], [0, 0, 1, 1], [], []>} : vector<8x64xf32>, vector<64x32xf32>, vector<8x32xf32> -> vector<8x32xf32>
    %cst_161 = arith.constant dense<0.000000e+00> : vector<8x8xf32>
    %253 = tpu.matmul %252, %182, %cst_161 {dimension_numbers = #tpu.dot_dimension_numbers<[1], [1], [0], [0], [0, 0, 1, 0], [], []>} : vector<8x32xf32>, vector<8x32xf32>, vector<8x8xf32> -> vector<8x8xf32>
    %cst_162 = arith.constant 0.353553385 : f32
    %254 = vector.broadcast %cst_162 : f32 to vector<8x8xf32>
    %255 = arith.mulf %253, %254 : vector<8x8xf32>
    %256 = arith.addf %255, %9 : vector<8x8xf32>
    %cst_163 = arith.constant dense<0xFF800000> : vector<8xf32>
    %257 = vector.multi_reduction <maximumf>, %256, %cst_163 [1] : vector<8x8xf32> to vector<8xf32>
    %258 = vector.shape_cast %257 : vector<8xf32> to vector<8x1xf32>
    %259 = vector.broadcast %258 : vector<8x1xf32> to vector<8x8xf32>
    %260 = arith.subf %256, %259 : vector<8x8xf32>
    %261 = math.exp %260 : vector<8x8xf32>
    %cst_164 = arith.constant dense<0.000000e+00> : vector<8xf32>
    %262 = vector.multi_reduction <add>, %261, %cst_164 [1] : vector<8x8xf32> to vector<8xf32>
    %263 = vector.shape_cast %262 : vector<8xf32> to vector<8x1xf32>
    %264 = tpu.reciprocal %263 {approx = true} : vector<8x1xf32> -> vector<8x1xf32>
    %265 = vector.broadcast %264 : vector<8x1xf32> to vector<8x8xf32>
    %266 = arith.mulf %261, %265 : vector<8x8xf32>
    %cst_165 = arith.constant dense<0.000000e+00> : vector<8x32xf32>
    %267 = tpu.matmul %266, %182, %cst_165 {dimension_numbers = #tpu.dot_dimension_numbers<[1], [0], [0], [1], [0, 0, 1, 1], [], []>} : vector<8x8xf32>, vector<8x32xf32>, vector<8x32xf32> -> vector<8x32xf32>
    %c1_166 = arith.constant 1 : index
    %c3_167 = arith.constant 3 : index
    %c0_168 = arith.constant 0 : index
    %c0_169 = arith.constant 0 : index
    %268 = vector.load %arg11[%c1_166, %c3_167, %c0_168, %c0_169] : memref<2x4x32x32xf32, #tpu.memory_space<vmem>>, vector<1x1x32x32xf32>
    %269 = vector.shape_cast %268 : vector<1x1x32x32xf32> to vector<32x32xf32>
    %cst_170 = arith.constant dense<0.000000e+00> : vector<8x32xf32>
    %270 = tpu.matmul %267, %269, %cst_170 {dimension_numbers = #tpu.dot_dimension_numbers<[1], [0], [0], [1], [0, 0, 1, 1], [], []>} : vector<8x32xf32>, vector<32x32xf32>, vector<8x32xf32> -> vector<8x32xf32>
    %271 = arith.addf %249, %270 : vector<8x32xf32>
    %272 = arith.addf %156, %271 : vector<8x32xf32>
    %c1_171 = arith.constant 1 : index
    %c0_172 = arith.constant 0 : index
    %c0_173 = arith.constant 0 : index
    %273 = vector.load %arg12[%c1_171, %c0_172, %c0_173] : memref<2x1x32xf32, #tpu.memory_space<vmem>>, vector<1x1x32xf32>
    %274 = vector.shape_cast %273 : vector<1x1x32xf32> to vector<1x32xf32>
    %275 = arith.mulf %272, %272 : vector<8x32xf32>
    %cst_174 = arith.constant dense<0.000000e+00> : vector<8xf32>
    %276 = vector.multi_reduction <add>, %275, %cst_174 [1] : vector<8x32xf32> to vector<8xf32>
    %277 = vector.shape_cast %276 : vector<8xf32> to vector<8x1xf32>
    %cst_175 = arith.constant 3.200000e+01 : f32
    %278 = vector.broadcast %cst_175 : f32 to vector<8x1xf32>
    %279 = arith.divf %277, %278 : vector<8x1xf32>
    %cst_176 = arith.constant 9.99999997E-7 : f32
    %280 = vector.broadcast %cst_176 : f32 to vector<8x1xf32>
    %281 = arith.addf %279, %280 : vector<8x1xf32>
    %282 = math.rsqrt %281 : vector<8x1xf32>
    %283 = vector.broadcast %282 : vector<8x1xf32> to vector<8x32xf32>
    %284 = arith.mulf %272, %283 : vector<8x32xf32>
    %285 = vector.broadcast %274 : vector<1x32xf32> to vector<8x32xf32>
    %286 = arith.mulf %284, %285 : vector<8x32xf32>
    %c1_177 = arith.constant 1 : index
    %c0_178 = arith.constant 0 : index
    %c0_179 = arith.constant 0 : index
    %287 = vector.load %arg13[%c1_177, %c0_178, %c0_179] : memref<2x32x64xf32, #tpu.memory_space<vmem>>, vector<1x32x64xf32>
    %288 = vector.shape_cast %287 : vector<1x32x64xf32> to vector<32x64xf32>
    %cst_180 = arith.constant dense<0.000000e+00> : vector<8x64xf32>
    %289 = tpu.matmul %286, %288, %cst_180 {dimension_numbers = #tpu.dot_dimension_numbers<[1], [0], [0], [1], [0, 0, 1, 1], [], []>} : vector<8x32xf32>, vector<32x64xf32>, vector<8x64xf32> -> vector<8x64xf32>
    %c1_181 = arith.constant 1 : index
    %c0_182 = arith.constant 0 : index
    %c0_183 = arith.constant 0 : index
    %290 = vector.load %arg14[%c1_181, %c0_182, %c0_183] : memref<2x32x64xf32, #tpu.memory_space<vmem>>, vector<1x32x64xf32>
    %291 = vector.shape_cast %290 : vector<1x32x64xf32> to vector<32x64xf32>
    %cst_184 = arith.constant dense<0.000000e+00> : vector<8x64xf32>
    %292 = tpu.matmul %286, %291, %cst_184 {dimension_numbers = #tpu.dot_dimension_numbers<[1], [0], [0], [1], [0, 0, 1, 1], [], []>} : vector<8x32xf32>, vector<32x64xf32>, vector<8x64xf32> -> vector<8x64xf32>
    %293 = arith.negf %289 : vector<8x64xf32>
    %294 = math.exp %293 : vector<8x64xf32>
    %cst_185 = arith.constant 1.000000e+00 : f32
    %295 = vector.broadcast %cst_185 : f32 to vector<8x64xf32>
    %296 = arith.addf %295, %294 : vector<8x64xf32>
    %297 = arith.divf %295, %296 : vector<8x64xf32>
    %298 = arith.mulf %289, %297 : vector<8x64xf32>
    %299 = arith.mulf %298, %292 : vector<8x64xf32>
    %c1_186 = arith.constant 1 : index
    %c0_187 = arith.constant 0 : index
    %c0_188 = arith.constant 0 : index
    %300 = vector.load %arg15[%c1_186, %c0_187, %c0_188] : memref<2x64x32xf32, #tpu.memory_space<vmem>>, vector<1x64x32xf32>
    %301 = vector.shape_cast %300 : vector<1x64x32xf32> to vector<64x32xf32>
    %cst_189 = arith.constant dense<0.000000e+00> : vector<8x32xf32>
    %302 = tpu.matmul %299, %301, %cst_189 {dimension_numbers = #tpu.dot_dimension_numbers<[1], [0], [0], [1], [0, 0, 1, 1], [], []>} : vector<8x64xf32>, vector<64x32xf32>, vector<8x32xf32> -> vector<8x32xf32>
    %303 = arith.addf %272, %302 : vector<8x32xf32>
    %304 = tpu.concatenate %35, %182 in 1 : vector<8x32xf32>, vector<8x32xf32> -> vector<8x64xf32>
    %c0_190 = arith.constant 0 : index
    %c0_191 = arith.constant 0 : index
    %305 = vector.load %arg19[%c0_190, %c0_191] : memref<8x64xf32, #tpu.memory_space<vmem>>, vector<8x64xf32>
    tpu.vector_store %arg19[%c0_190, %c0_191], %304 {strides = array<i32>} : memref<8x64xf32, #tpu.memory_space<vmem>>, vector<8x64xf32>,
    %306 = tpu.iota {dimensions = array<i32: 1>} : vector<1x8xi32>
    %c7_i32 = arith.constant 7 : i32
    %307 = vector.broadcast %c7_i32 : i32 to vector<1x8xi32>
    %308 = arith.cmpi eq, %306, %307 : vector<1x8xi32>
    %309 = arith.extui %308 : vector<1x8xi1> to vector<1x8xi32>
    %310 = arith.sitofp %309 : vector<1x8xi32> to vector<1x8xf32>
    %cst_192 = arith.constant dense<0.000000e+00> : vector<1x32xf32>
    %311 = tpu.matmul %310, %303, %cst_192 {dimension_numbers = #tpu.dot_dimension_numbers<[1], [0], [0], [1], [0, 0, 1, 1], [], []>} : vector<1x8xf32>, vector<8x32xf32>, vector<1x32xf32> -> vector<1x32xf32>
    %c0_193 = arith.constant 0 : index
    %c0_194 = arith.constant 0 : index
    %312 = vector.load %arg16[%c0_193, %c0_194] : memref<1x32xf32, #tpu.memory_space<vmem>>, vector<1x32xf32>
    %313 = arith.mulf %311, %311 : vector<1x32xf32>
    %cst_195 = arith.constant dense<0.000000e+00> : vector<1xf32>
    %314 = vector.multi_reduction <add>, %313, %cst_195 [1] : vector<1x32xf32> to vector<1xf32>
    %315 = vector.shape_cast %314 : vector<1xf32> to vector<1x1xf32>
    %cst_196 = arith.constant 3.200000e+01 : f32
    %316 = vector.broadcast %cst_196 : f32 to vector<1x1xf32>
    %317 = arith.divf %315, %316 : vector<1x1xf32>
    %cst_197 = arith.constant 9.99999997E-7 : f32
    %318 = vector.broadcast %cst_197 : f32 to vector<1x1xf32>
    %319 = arith.addf %317, %318 : vector<1x1xf32>
    %320 = math.rsqrt %319 : vector<1x1xf32>
    %321 = vector.broadcast %320 : vector<1x1xf32> to vector<1x32xf32>
    %322 = arith.mulf %311, %321 : vector<1x32xf32>
    %323 = arith.mulf %322, %312 : vector<1x32xf32>
    %c0_198 = arith.constant 0 : index
    %c0_199 = arith.constant 0 : index
    %324 = vector.load %arg17[%c0_198, %c0_199] : memref<32x128xf32, #tpu.memory_space<vmem>>, vector<32x128xf32>
    %cst_200 = arith.constant dense<0.000000e+00> : vector<1x128xf32>
    %325 = tpu.matmul %323, %324, %cst_200 {dimension_numbers = #tpu.dot_dimension_numbers<[1], [0], [0], [1], [0, 0, 1, 1], [], []>} : vector<1x32xf32>, vector<32x128xf32>, vector<1x128xf32> -> vector<1x128xf32>
    %c0_201 = arith.constant 0 : index
    %c0_202 = arith.constant 0 : index
    %326 = vector.load %arg18[%c0_201, %c0_202] : memref<1x128xf32, #tpu.memory_space<vmem>>, vector<1x128xf32>
    tpu.vector_store %arg18[%c0_201, %c0_202], %325 {strides = array<i32>} : memref<1x128xf32, #tpu.memory_space<vmem>>, vector<1x128xf32>,
    return
  }
}

</mosaic_0001>

<llo_original>
// kernel: tile.27
$region0: #{tile.27}
  %s0 = inlined_call_operand.vmem [shape: f32[8,2,8], index: 0, kind: input, shape index: {}]
  %s1 = inlined_call_operand.vmem [shape: f32[8,16], index: 1, kind: output, shape index: {}]
  $region1: #{tile.27} parent=0
    #allocation0 [shape = 'u8[32768]{0}', space=vmem, size = 0x8000, scoped, tag = 'scoped mem for input reshape']
    %s3 = sshll.u32 1, 2
    %s4 = ssub.s32 %s3, 1
    %s5 = smul.addr 2, 7
    %s6 = scalar_lea.vmem %s0, %s5
    %v7 = vld [vmem:[%s6] sm:%s4]
    %s8 = scalar_lea.vmem [#allocation0], 56
    %9 = vst [vmem:[%s8] sm:%s4] %v7
    %s10 = smul.addr 2, 6
    %s11 = scalar_lea.vmem %s0, %s10
    %v12 = vld [vmem:[%s11] sm:%s4]
    %s13 = scalar_lea.vmem [#allocation0], 48
    %14 = vst [vmem:[%s13] sm:%s4] %v12
    %s15 = smul.addr 2, 5
    %s16 = scalar_lea.vmem %s0, %s15
    %v17 = vld [vmem:[%s16] sm:%s4]
    %s18 = scalar_lea.vmem [#allocation0], 40
    %19 = vst [vmem:[%s18] sm:%s4] %v17
    %s20 = smul.addr 2, 4
    %s21 = scalar_lea.vmem %s0, %s20
    %v22 = vld [vmem:[%s21] sm:%s4]
    %s23 = scalar_lea.vmem [#allocation0], 32
    %24 = vst [vmem:[%s23] sm:%s4] %v22
    %s25 = smul.addr 2, 3
    %s26 = scalar_lea.vmem %s0, %s25
    %v27 = vld [vmem:[%s26] sm:%s4]
    %s28 = scalar_lea.vmem [#allocation0], 24
    %29 = vst [vmem:[%s28] sm:%s4] %v27
    %s30 = smul.addr 2, 2
    %s31 = scalar_lea.vmem %s0, %s30
    %v32 = vld [vmem:[%s31] sm:%s4]
    %s33 = scalar_lea.vmem [#allocation0], 16
    %34 = vst [vmem:[%s33] sm:%s4] %v32
    %s35 = scalar_lea.vmem %s0, 2
    %v36 = vld [vmem:[%s35] sm:%s4]
    %s37 = scalar_lea.vmem [#allocation0], 8
    %38 = vst [vmem:[%s37] sm:%s4] %v36
    %v39 = vld [vmem:[%s0] sm:%s4]
    %40 = vst [vmem:[#allocation0] sm:%s4] %v39
    %v41 = vld [vmem:[#allocation0] ss:$8 sm:$0xf]
    %v42 = vld [vmem:[#allocation0] ss:$8 sm:$0xf0]
    %vm43 = vcmask 1047556
    %v44 = vsel %vm43, %v42, %v41
    %vm45 = vcmask 64512
    %46 = vst.msk [vmem:[%s1] sm:$0xff] %vm45, %v44
    %s47 = scalar_lea.vmem [#allocation0], 1
    %v48 = vld [vmem:[%s47] ss:$8 sm:$0xf]
    %s49 = scalar_lea.vmem [#allocation0], 1
    %v50 = vld [vmem:[%s49] ss:$8 sm:$0xf0]
    %vm51 = vcmask 1047556
    %v52 = vsel %vm51, %v50, %v48
    %53 = vrot.lane.b32.xlu0 %v52, 8
    %v54 = vpop.permute.xlu0 %53
    %vm55 = vcmask 130112
    %56 = vst.msk [vmem:[%s1] sm:$0xff] %vm55, %v54

// kernel: tile.23
$region0: #{tile.23}
  %s0 = inlined_call_operand.vmem [shape: f32[8,4,8], index: 0, kind: input, shape index: {}]
  %s1 = inlined_call_operand.vmem [shape: f32[8,32], index: 1, kind: output, shape index: {}]
  $region1: #{tile.23} parent=0
    #allocation0 [shape = 'u8[32768]{0}', space=vmem, size = 0x8000, scoped, tag = 'scoped mem for input reshape']
    %s3 = sshll.u32 1, 4
    %s4 = ssub.s32 %s3, 1
    %s5 = smul.addr 4, 7
    %s6 = scalar_lea.vmem %s0, %s5
    %v7 = vld [vmem:[%s6] sm:%s4]
    %s8 = scalar_lea.vmem [#allocation0], 56
    %9 = vst [vmem:[%s8] sm:%s4] %v7
    %s10 = smul.addr 4, 6
    %s11 = scalar_lea.vmem %s0, %s10
    %v12 = vld [vmem:[%s11] sm:%s4]
    %s13 = scalar_lea.vmem [#allocation0], 48
    %14 = vst [vmem:[%s13] sm:%s4] %v12
    %s15 = smul.addr 4, 5
    %s16 = scalar_lea.vmem %s0, %s15
    %v17 = vld [vmem:[%s16] sm:%s4]
    %s18 = scalar_lea.vmem [#allocation0], 40
    %19 = vst [vmem:[%s18] sm:%s4] %v17
    %s20 = smul.addr 4, 4
    %s21 = scalar_lea.vmem %s0, %s20
    %v22 = vld [vmem:[%s21] sm:%s4]
    %s23 = scalar_lea.vmem [#allocation0], 32
    %24 = vst [vmem:[%s23] sm:%s4] %v22
    %s25 = smul.addr 4, 3
    %s26 = scalar_lea.vmem %s0, %s25
    %v27 = vld [vmem:[%s26] sm:%s4]
    %s28 = scalar_lea.vmem [#allocation0], 24
    %29 = vst [vmem:[%s28] sm:%s4] %v27
    %s30 = smul.addr 4, 2
    %s31 = scalar_lea.vmem %s0, %s30
    %v32 = vld [vmem:[%s31] sm:%s4]
    %s33 = scalar_lea.vmem [#allocation0], 16
    %34 = vst [vmem:[%s33] sm:%s4] %v32
    %s35 = scalar_lea.vmem %s0, 4
    %v36 = vld [vmem:[%s35] sm:%s4]
    %s37 = scalar_lea.vmem [#allocation0], 8
    %38 = vst [vmem:[%s37] sm:%s4] %v36
    %v39 = vld [vmem:[%s0] sm:%s4]
    %40 = vst [vmem:[#allocation0] sm:%s4] %v39
    %v41 = vld [vmem:[#allocation0] ss:$8 sm:$0xf]
    %v42 = vld [vmem:[#allocation0] ss:$8 sm:$0xf0]
    %vm43 = vcmask 1047556
    %v44 = vsel %vm43, %v42, %v41
    %vm45 = vcmask 64512
    %46 = vst.msk [vmem:[%s1] sm:$0xff] %vm45, %v44
    %s47 = scalar_lea.vmem [#allocation0], 3
    %v48 = vld [vmem:[%s47] ss:$8 sm:$0xf]
    %s49 = scalar_lea.vmem [#allocation0], 3
    %v50 = vld [vmem:[%s49] ss:$8 sm:$0xf0]
    %vm51 = vcmask 1047556
    %v52 = vsel %vm51, %v50, %v48
    %53 = vrot.lane.b32.xlu0 %v52, 24
    %v54 = vpop.permute.xlu0 %53
    %vm55 = vcmask 261312
    %56 = vst.msk [vmem:[%s1] sm:$0xff] %vm55, %v54
    %s57 = scalar_lea.vmem [#allocation0], 2
    %v58 = vld [vmem:[%s57] ss:$8 sm:$0xf]
    %s59 = scalar_lea.vmem [#allocation0], 2
    %v60 = vld [vmem:[%s59] ss:$8 sm:$0xf0]
    %vm61 = vcmask 1047556
    %v62 = vsel %vm61, %v60, %v58
    %63 = vrot.lane.b32.xlu0 %v62, 16
    %v64 = vpop.permute.xlu0 %63
    %vm65 = vcmask 195712
    %66 = vst.msk [vmem:[%s1] sm:$0xff] %vm65, %v64
    %s67 = scalar_lea.vmem [#allocation0], 1
    %v68 = vld [vmem:[%s67] ss:$8 sm:$0xf]
    %s69 = scalar_lea.vmem [#allocation0], 1
    %v70 = vld [vmem:[%s69] ss:$8 sm:$0xf0]
    %vm71 = vcmask 1047556
    %v72 = vsel %vm71, %v70, %v68
    %73 = vrot.lane.b32.xlu0 %v72, 8
    %v74 = vpop.permute.xlu0 %73
    %vm75 = vcmask 130112
    %76 = vst.msk [vmem:[%s1] sm:$0xff] %vm75, %v74

// kernel: talker_forward.1
$region0: #{talker_forward.1}
  #allocation0 [shape = 'u32[]', space=smem, size = 0x4, offset = 0x4, fixed_abs, tag = 'smem constant byte address 0x4 - core index']
  #allocation1 [shape = 'u32[144,128]{1,0:T(1,128)}', space=vmem, size = 0x12000, scoped, tag = 'internal scratch']
  %s0 = inlined_call_operand.vmem [shape: f32[8,32], index: 0, kind: input, shape index: {}]
  %s1 = inlined_call_operand.vmem [shape: f32[32,32], index: 1, kind: input, shape index: {}]
  %s2 = inlined_call_operand.vmem [shape: f32[1,32], index: 2, kind: input, shape index: {}]
  %s3 = inlined_call_operand.vmem [shape: f32[8,64], index: 3, kind: input, shape index: {}]
  %s4 = inlined_call_operand.vmem [shape: f32[8,64], index: 4, kind: input, shape index: {}]
  %s5 = inlined_call_operand.vmem [shape: f32[64,64], index: 5, kind: input, shape index: {}]
  %s6 = inlined_call_operand.vmem [shape: f32[8,8], index: 6, kind: input, shape index: {}]
  %s7 = inlined_call_operand.vmem [shape: f32[4,64,32], index: 7, kind: input, shape index: {}]
  %s8 = inlined_call_operand.vmem [shape: f32[2,1,32], index: 8, kind: input, shape index: {}]
  %s9 = inlined_call_operand.vmem [shape: f32[2,32,64], index: 9, kind: input, shape index: {}]
  %s10 = inlined_call_operand.vmem [shape: f32[2,1,64], index: 10, kind: input, shape index: {}]
  %s11 = inlined_call_operand.vmem [shape: f32[2,4,32,32], index: 11, kind: input, shape index: {}]
  %s12 = inlined_call_operand.vmem [shape: f32[2,1,32], index: 12, kind: input, shape index: {}]
  %s13 = inlined_call_operand.vmem [shape: f32[2,32,64], index: 13, kind: input, shape index: {}]
  %s14 = inlined_call_operand.vmem [shape: f32[2,32,64], index: 14, kind: input, shape index: {}]
  %s15 = inlined_call_operand.vmem [shape: f32[2,64,32], index: 15, kind: input, shape index: {}]
  %s16 = inlined_call_operand.vmem [shape: f32[1,32], index: 16, kind: input, shape index: {}]
  %s17 = inlined_call_operand.vmem [shape: f32[32,128], index: 17, kind: input, shape index: {}]
  %s18 = inlined_call_operand.hbm [shape: f32[1,128], index: 18, kind: output, shape index: {0}]
  %s19 = inlined_call_operand.vmem [shape: f32[8,64], index: 19, kind: output, shape index: {1}]
  %20 = xla_tuple %s18, %s19
  %s21 = sld [smem:[#allocation0]]
  $region90: #{talker_forward.1} parent=0
    _
  %s23 = ssub.s32 1, %s21
  %s24 = scalar_select 0, %s23, %s21
  $region1: #{talker_forward.1} parent=0
    #allocation2 [shape = 'u8[512]{0}', space=vmem, size = 0x400, scoped, tag = 'output window, operand 0, single buffered']
    #allocation3 [shape = 's32[1]{0}', space=sflag, size = 0x4, scoped, tag = 'scoped memory for talker_forward.1']
    %25 = vsyncpa [#allocation3], 0
    // Predicated region
    $region2: #{talker_forward.1} parent=1 // pred_check
      _
    $region3: #{talker_forward.1} parent=1 // pred_check_branch
      %27 = sbr.rel (0) target = $region5
    $region4: #{talker_forward.1} parent=1 // pred_region
      _
    $region5: #{talker_forward.1} parent=1 // pred_fallthru
      _
    // Predicated region
    $region6: #{talker_forward.1} parent=1 // pred_check
      _
    $region7: #{talker_forward.1} parent=1 // pred_check_branch
      %29 = sbr.rel (0) target = $region9
    $region8: #{talker_forward.1} parent=1 // pred_region
      _
    $region9: #{talker_forward.1} parent=1 // pred_fallthru
      _
    // Predicated region
    $region10: #{talker_forward.1} parent=1 // pred_check
      _
    $region11: #{talker_forward.1} parent=1 // pred_check_branch
      %31 = sbr.rel (0) target = $region13
    $region12: #{talker_forward.1} parent=1 // pred_region
      _
    $region13: #{talker_forward.1} parent=1 // pred_fallthru
      _
    // Predicated region
    $region14: #{talker_forward.1} parent=1 // pred_check
      _
    $region15: #{talker_forward.1} parent=1 // pred_check_branch
      %33 = sbr.rel (0) target = $region17
    $region16: #{talker_forward.1} parent=1 // pred_region
      _
    $region17: #{talker_forward.1} parent=1 // pred_fallthru
      _
    // Predicated region
    $region18: #{talker_forward.1} parent=1 // pred_check
      _
    $region19: #{talker_forward.1} parent=1 // pred_check_branch
      %35 = sbr.rel (0) target = $region21
    $region20: #{talker_forward.1} parent=1 // pred_region
      _
    $region21: #{talker_forward.1} parent=1 // pred_fallthru
      _
    // Predicated region
    $region22: #{talker_forward.1} parent=1 // pred_check
      _
    $region23: #{talker_forward.1} parent=1 // pred_check_branch
      %37 = sbr.rel (0) target = $region25
    $region24: #{talker_forward.1} parent=1 // pred_region
      _
    $region25: #{talker_forward.1} parent=1 // pred_fallthru
      _
    // Predicated region
    $region26: #{talker_forward.1} parent=1 // pred_check
      _
    $region27: #{talker_forward.1} parent=1 // pred_check_branch
      %39 = sbr.rel (0) target = $region29
    $region28: #{talker_forward.1} parent=1 // pred_region
      _
    $region29: #{talker_forward.1} parent=1 // pred_fallthru
      _
    // Predicated region
    $region30: #{talker_forward.1} parent=1 // pred_check
      _
    $region31: #{talker_forward.1} parent=1 // pred_check_branch
      %41 = sbr.rel (0) target = $region33
    $region32: #{talker_forward.1} parent=1 // pred_region
      _
    $region33: #{talker_forward.1} parent=1 // pred_fallthru
      _
    // Predicated region
    $region34: #{talker_forward.1} parent=1 // pred_check
      _
    $region35: #{talker_forward.1} parent=1 // pred_check_branch
      %43 = sbr.rel (0) target = $region37
    $region36: #{talker_forward.1} parent=1 // pred_region
      _
    $region37: #{talker_forward.1} parent=1 // pred_fallthru
      _
    // Predicated region
    $region38: #{talker_forward.1} parent=1 // pred_check
      _
    $region39: #{talker_forward.1} parent=1 // pred_check_branch
      %45 = sbr.rel (0) target = $region41
    $region40: #{talker_forward.1} parent=1 // pred_region
      _
    $region41: #{talker_forward.1} parent=1 // pred_fallthru
      _
    // Predicated region
    $region42: #{talker_forward.1} parent=1 // pred_check
      _
    $region43: #{talker_forward.1} parent=1 // pred_check_branch
      %47 = sbr.rel (0) target = $region45
    $region44: #{talker_forward.1} parent=1 // pred_region
      _
    $region45: #{talker_forward.1} parent=1 // pred_fallthru
      _
    // Predicated region
    $region46: #{talker_forward.1} parent=1 // pred_check
      _
    $region47: #{talker_forward.1} parent=1 // pred_check_branch
      %49 = sbr.rel (0) target = $region49
    $region48: #{talker_forward.1} parent=1 // pred_region
      _
    $region49: #{talker_forward.1} parent=1 // pred_fallthru
      _
    // Predicated region
    $region50: #{talker_forward.1} parent=1 // pred_check
      _
    $region51: #{talker_forward.1} parent=1 // pred_check_branch
      %51 = sbr.rel (0) target = $region53
    $region52: #{talker_forward.1} parent=1 // pred_region
      _
    $region53: #{talker_forward.1} parent=1 // pred_fallthru
      _
    // Predicated region
    $region54: #{talker_forward.1} parent=1 // pred_check
      _
    $region55: #{talker_forward.1} parent=1 // pred_check_branch
      %53 = sbr.rel (0) target = $region57
    $region56: #{talker_forward.1} parent=1 // pred_region
      _
    $region57: #{talker_forward.1} parent=1 // pred_fallthru
      _
    // Predicated region
    $region58: #{talker_forward.1} parent=1 // pred_check
      _
    $region59: #{talker_forward.1} parent=1 // pred_check_branch
      %55 = sbr.rel (0) target = $region61
    $region60: #{talker_forward.1} parent=1 // pred_region
      _
    $region61: #{talker_forward.1} parent=1 // pred_fallthru
      _
    // Predicated region
    $region62: #{talker_forward.1} parent=1 // pred_check
      _
    $region63: #{talker_forward.1} parent=1 // pred_check_branch
      %57 = sbr.rel (0) target = $region65
    $region64: #{talker_forward.1} parent=1 // pred_region
      _
    $region65: #{talker_forward.1} parent=1 // pred_fallthru
      _
    // Predicated region
    $region66: #{talker_forward.1} parent=1 // pred_check
      _
    $region67: #{talker_forward.1} parent=1 // pred_check_branch
      %59 = sbr.rel (0) target = $region69
    $region68: #{talker_forward.1} parent=1 // pred_region
      _
    $region69: #{talker_forward.1} parent=1 // pred_fallthru
      _
    // Predicated region
    $region70: #{talker_forward.1} parent=1 // pred_check
      _
    $region71: #{talker_forward.1} parent=1 // pred_check_branch
      %61 = sbr.rel (0) target = $region73
    $region72: #{talker_forward.1} parent=1 // pred_region
      _
    $region73: #{talker_forward.1} parent=1 // pred_fallthru
      _
    %v62 = vld [vmem:[%s0] sm:$0xff]
    %v63 = vld [vmem:[%s1] sm:$0xff]
    %v64 = vld [vmem:[%s1 + $0x8] sm:$0xff]
    %v65 = vld [vmem:[%s1 + $0x10] sm:$0xff]
    %v66 = vld [vmem:[%s1 + $0x18] sm:$0xff]
    %v67 = vld [vmem:[%s2] sm:$0x1]
    %v69 = vlaneseq
    %v70 = vshrl.u32 %v69, 7
    %v71 = vsub.s32 0, %v70
    %v72 = vrot.slane %v67, %v71
    %vm74 = vcmask 261120
    %v76 = vsel %vm74, %v62, 0
    %78 = vmatprep.subr.mxu0 0.0
    %79 = vmatpush1.msra.mxu0 0.0
    %80 = vmatprep.subr.mxu0 0.0
    %81 = vmatpush1.msra.mxu0 0.0
    %82 = vmatprep.subr.mxu0 0.0
    %83 = vmatpush1.msra.mxu0 0.0
    %84 = vmatprep.subr.mxu0 0.0
    %85 = vmatpush1.msra.mxu0 0.0
    %86 = vmatprep.subr.mxu0 0.0
    %87 = vmatpush1.msra.mxu0 0.0
    %88 = vmatprep.subr.mxu0 0.0
    %89 = vmatpush1.msra.mxu0 0.0
    %90 = vmatprep.subr.mxu0 0.0
    %91 = vmatpush1.msra.mxu0 0.0
    %92 = vmatprep.subr.mxu0 0.0
    %93 = vmatpush1.msra.mxu0 0.0
    %94 = vmatprep.subr.mxu0 0.0
    %95 = vmatpush1.msra.mxu0 0.0
    %96 = vmatprep.subr.mxu0 0.0
    %97 = vmatpush1.msra.mxu0 0.0
    %98 = vmatprep.subr.mxu0 0.0
    %99 = vmatpush1.msra.mxu0 0.0
    %100 = vmatprep.subr.mxu0 0.0
    %101 = vmatpush1.msra.mxu0 0.0
    %102 = vmatprep.subr.mxu0 0.0
    %103 = vmatpush1.msra.mxu0 %v66
    %104 = vmatprep.subr.mxu0 0.0
    %105 = vmatpush1.msra.mxu0 %v65
    %106 = vmatprep.subr.mxu0 0.0
    %107 = vmatpush1.msra.mxu0 %v64
    %108 = vmatprep.subr.mxu0 0.0
    %109 = vmatpush1.msra.mxu0 %v63
    %110 = vmatprep.subr.mxu0 0.0
    %111 = vmatpush2.msra.mxu0 0.0
    %112 = vmatprep.subr.mxu0 0.0
    %113 = vmatpush2.msra.mxu0 0.0
    %114 = vmatprep.subr.mxu0 0.0
    %115 = vmatpush2.msra.mxu0 0.0
    %116 = vmatprep.subr.mxu0 0.0
    %117 = vmatpush2.msra.mxu0 0.0
    %118 = vmatprep.subr.mxu0 0.0
    %119 = vmatpush2.msra.mxu0 0.0
    %120 = vmatprep.subr.mxu0 0.0
    %121 = vmatpush2.msra.mxu0 0.0
    %122 = vmatprep.subr.mxu0 0.0
    %123 = vmatpush2.msra.mxu0 0.0
    %124 = vmatprep.subr.mxu0 0.0
    %125 = vmatpush2.msra.mxu0 0.0
    %126 = vmatprep.subr.mxu0 0.0
    %127 = vmatpush2.msra.mxu0 0.0
    %128 = vmatprep.subr.mxu0 0.0
    %129 = vmatpush2.msra.mxu0 0.0
    %130 = vmatprep.subr.mxu0 0.0
    %131 = vmatpush2.msra.mxu0 0.0
    %132 = vmatprep.subr.mxu0 0.0
    %133 = vmatpush2.msra.mxu0 0.0
    %134 = vmatprep.subr.mxu0 0.0
    %135 = vmatpush2.msra.mxu0 0.0
    %136 = vmatprep.subr.mxu0 0.0
    %137 = vmatpush2.msra.mxu0 0.0
    %138 = vmatprep.subr.mxu0 0.0
    %139 = vmatpush2.msra.mxu0 0.0
    %140 = vmatprep.subr.mxu0 0.0
    %141 = vmatpush2.msra.mxu0 0.0
    %142 = vmatprep.mubr.f32.mxu0 0.0
    %143 = vmatmul.mubr.f32.gmra.mxu0 %v76
    %v144 = vpop.f32.mrf.mxu0
    %v145 = vadd.f32 %v72, %v144
    %v146 = vpop.f32.mrf.mxu0
    %147 = vdwg.mxu0
    %v148 = vld [vmem:[%s3] sm:$0xff]
    %v149 = vld [vmem:[%s4] sm:$0xff]
    %v150 = vld [vmem:[%s5] sm:$0xff]
    %v151 = vld [vmem:[%s5 + $0x8] sm:$0xff]
    %v152 = vld [vmem:[%s5 + $0x10] sm:$0xff]
    %v153 = vld [vmem:[%s5 + $0x18] sm:$0xff]
    %v154 = vld [vmem:[%s5 + $0x20] sm:$0xff]
    %v155 = vld [vmem:[%s5 + $0x28] sm:$0xff]
    %v156 = vld [vmem:[%s5 + $0x30] sm:$0xff]
    %v157 = vld [vmem:[%s5 + $0x38] sm:$0xff]
    %v158 = vld [vmem:[%s6] sm:$0xff]
    %v159 = vld [vmem:[%s8] sm:$0x1]
    %v160 = vmul.f32 %v145, %v145
    %v161 = vsel %vm74, %v160, 0.0
    %162 = vadd.xlane.f32.xlu0 %v161
    %v163 = vpop.xlane.xlu0 %162
    %v164 = vrcp.pop 32.0
    %v165 = vmul.f32 %v163, %v164
    %v166 = vadd.f32 %v165, 1e-06
    %v167 = vrsqrt.pop %v166
    %v168 = vmul.f32 %v145, %v167
    %v170 = vlaneseq
    %v171 = vshrl.u32 %v170, 7
    %v172 = vsub.s32 0, %v171
    %v173 = vrot.slane %v159, %v172
    %v175 = vmul.f32 %v168, %v173
    %v176 = vld [vmem:[%s9] sm:$0xff]
    %v177 = vld [vmem:[%s9 + $0x8] sm:$0xff]
    %v178 = vld [vmem:[%s9 + $0x10] sm:$0xff]
    %v179 = vld [vmem:[%s9 + $0x18] sm:$0xff]
    %v180 = vld [vmem:[%s10] sm:$0x1]
    %v182 = vlaneseq
    %v183 = vshrl.u32 %v182, 7
    %v184 = vsub.s32 0, %v183
    %v185 = vrot.slane %v180, %v184
    %v188 = vsel %vm74, %v175, 0
    %190 = vmatprep.subr.mxu0 0.0
    %191 = vmatpush1.msra.mxu0 0.0
    %192 = vmatprep.subr.mxu0 0.0
    %193 = vmatpush1.msra.mxu0 0.0
    %194 = vmatprep.subr.mxu0 0.0
    %195 = vmatpush1.msra.mxu0 0.0
    %196 = vmatprep.subr.mxu0 0.0
    %197 = vmatpush1.msra.mxu0 0.0
    %198 = vmatprep.subr.mxu0 0.0
    %199 = vmatpush1.msra.mxu0 0.0
    %200 = vmatprep.subr.mxu0 0.0
    %201 = vmatpush1.msra.mxu0 0.0
    %202 = vmatprep.subr.mxu0 0.0
    %203 = vmatpush1.msra.mxu0 0.0
    %204 = vmatprep.subr.mxu0 0.0
    %205 = vmatpush1.msra.mxu0 0.0
    %206 = vmatprep.subr.mxu0 0.0
    %207 = vmatpush1.msra.mxu0 0.0
    %208 = vmatprep.subr.mxu0 0.0
    %209 = vmatpush1.msra.mxu0 0.0
    %210 = vmatprep.subr.mxu0 0.0
    %211 = vmatpush1.msra.mxu0 0.0
    %212 = vmatprep.subr.mxu0 0.0
    %213 = vmatpush1.msra.mxu0 0.0
    %214 = vmatprep.subr.mxu0 0.0
    %215 = vmatpush1.msra.mxu0 %v179
    %216 = vmatprep.subr.mxu0 0.0
    %217 = vmatpush1.msra.mxu0 %v178
    %218 = vmatprep.subr.mxu0 0.0
    %219 = vmatpush1.msra.mxu0 %v177
    %220 = vmatprep.subr.mxu0 0.0
    %221 = vmatpush1.msra.mxu0 %v176
    %222 = vmatprep.subr.mxu0 0.0
    %223 = vmatpush2.msra.mxu0 0.0
    %224 = vmatprep.subr.mxu0 0.0
    %225 = vmatpush2.msra.mxu0 0.0
    %226 = vmatprep.subr.mxu0 0.0
    %227 = vmatpush2.msra.mxu0 0.0
    %228 = vmatprep.subr.mxu0 0.0
    %229 = vmatpush2.msra.mxu0 0.0
    %230 = vmatprep.subr.mxu0 0.0
    %231 = vmatpush2.msra.mxu0 0.0
    %232 = vmatprep.subr.mxu0 0.0
    %233 = vmatpush2.msra.mxu0 0.0
    %234 = vmatprep.subr.mxu0 0.0
    %235 = vmatpush2.msra.mxu0 0.0
    %236 = vmatprep.subr.mxu0 0.0
    %237 = vmatpush2.msra.mxu0 0.0
    %238 = vmatprep.subr.mxu0 0.0
    %239 = vmatpush2.msra.mxu0 0.0
    %240 = vmatprep.subr.mxu0 0.0
    %241 = vmatpush2.msra.mxu0 0.0
    %242 = vmatprep.subr.mxu0 0.0
    %243 = vmatpush2.msra.mxu0 0.0
    %244 = vmatprep.subr.mxu0 0.0
    %245 = vmatpush2.msra.mxu0 0.0
    %246 = vmatprep.subr.mxu0 0.0
    %247 = vmatpush2.msra.mxu0 0.0
    %248 = vmatprep.subr.mxu0 0.0
    %249 = vmatpush2.msra.mxu0 0.0
    %250 = vmatprep.subr.mxu0 0.0
    %251 = vmatpush2.msra.mxu0 0.0
    %252 = vmatprep.subr.mxu0 0.0
    %253 = vmatpush2.msra.mxu0 0.0
    %254 = vmatprep.mubr.f32.mxu0 0.0
    %255 = vmatmul.mubr.f32.gmra.mxu0 %v188
    %v256 = vpop.f32.mrf.mxu0
    %v257 = vadd.f32 %v185, %v256
    %v258 = vpop.f32.mrf.mxu0
    %259 = vdwg.mxu0
    %v260 = vmul.f32 %v257, %v148
    %vm261 = vcmask 523264
    %v263 = vsel %vm261, %v257, 0
    %265 = vmatprep.subr.mxu0 0.0
    %266 = vmatpush1.msra.mxu0 0.0
    %267 = vmatprep.subr.mxu0 0.0
    %268 = vmatpush1.msra.mxu0 0.0
    %269 = vmatprep.subr.mxu0 0.0
    %270 = vmatpush1.msra.mxu0 0.0
    %271 = vmatprep.subr.mxu0 0.0
    %272 = vmatpush1.msra.mxu0 0.0
    %273 = vmatprep.subr.mxu0 0.0
    %274 = vmatpush1.msra.mxu0 0.0
    %275 = vmatprep.subr.mxu0 0.0
    %276 = vmatpush1.msra.mxu0 0.0
    %277 = vmatprep.subr.mxu0 0.0
    %278 = vmatpush1.msra.mxu0 0.0
    %279 = vmatprep.subr.mxu0 0.0
    %280 = vmatpush1.msra.mxu0 0.0
    %281 = vmatprep.subr.mxu0 0.0
    %282 = vmatpush1.msra.mxu0 %v157
    %283 = vmatprep.subr.mxu0 0.0
    %284 = vmatpush1.msra.mxu0 %v156
    %285 = vmatprep.subr.mxu0 0.0
    %286 = vmatpush1.msra.mxu0 %v155
    %287 = vmatprep.subr.mxu0 0.0
    %288 = vmatpush1.msra.mxu0 %v154
    %289 = vmatprep.subr.mxu0 0.0
    %290 = vmatpush1.msra.mxu0 %v153
    %291 = vmatprep.subr.mxu0 0.0
    %292 = vmatpush1.msra.mxu0 %v152
    %293 = vmatprep.subr.mxu0 0.0
    %294 = vmatpush1.msra.mxu0 %v151
    %295 = vmatprep.subr.mxu0 0.0
    %296 = vmatpush1.msra.mxu0 %v150
    %297 = vmatprep.subr.mxu0 0.0
    %298 = vmatpush2.msra.mxu0 0.0
    %299 = vmatprep.subr.mxu0 0.0
    %300 = vmatpush2.msra.mxu0 0.0
    %301 = vmatprep.subr.mxu0 0.0
    %302 = vmatpush2.msra.mxu0 0.0
    %303 = vmatprep.subr.mxu0 0.0
    %304 = vmatpush2.msra.mxu0 0.0
    %305 = vmatprep.subr.mxu0 0.0
    %306 = vmatpush2.msra.mxu0 0.0
    %307 = vmatprep.subr.mxu0 0.0
    %308 = vmatpush2.msra.mxu0 0.0
    %309 = vmatprep.subr.mxu0 0.0
    %310 = vmatpush2.msra.mxu0 0.0
    %311 = vmatprep.subr.mxu0 0.0
    %312 = vmatpush2.msra.mxu0 0.0
    %313 = vmatprep.subr.mxu0 0.0
    %314 = vmatpush2.msra.mxu0 0.0
    %315 = vmatprep.subr.mxu0 0.0
    %316 = vmatpush2.msra.mxu0 0.0
    %317 = vmatprep.subr.mxu0 0.0
    %318 = vmatpush2.msra.mxu0 0.0
    %319 = vmatprep.subr.mxu0 0.0
    %320 = vmatpush2.msra.mxu0 0.0
    %321 = vmatprep.subr.mxu0 0.0
    %322 = vmatpush2.msra.mxu0 0.0
    %323 = vmatprep.subr.mxu0 0.0
    %324 = vmatpush2.msra.mxu0 0.0
    %325 = vmatprep.subr.mxu0 0.0
    %326 = vmatpush2.msra.mxu0 0.0
    %327 = vmatprep.subr.mxu0 0.0
    %328 = vmatpush2.msra.mxu0 0.0
    %329 = vmatprep.mubr.f32.mxu0 0.0
    %330 = vmatmul.mubr.f32.gmra.mxu0 %v263
    %v331 = vpop.f32.mrf.mxu0
    %v332 = vadd.f32 0.0, %v331
    %v333 = vpop.f32.mrf.mxu0
    %334 = vdwg.mxu0
    %v335 = vmul.f32 %v332, %v149
    %v336 = vadd.f32 %v260, %v335
    %v337 = vld [vmem:[%s7] sm:$0xff]
    %v338 = vld [vmem:[%s7 + $0x8] sm:$0xff]
    %v339 = vld [vmem:[%s7 + $0x10] sm:$0xff]
    %v340 = vld [vmem:[%s7 + $0x18] sm:$0xff]
    %v341 = vld [vmem:[%s7 + $0x20] sm:$0xff]
    %v342 = vld [vmem:[%s7 + $0x28] sm:$0xff]
    %v343 = vld [vmem:[%s7 + $0x30] sm:$0xff]
    %v344 = vld [vmem:[%s7 + $0x38] sm:$0xff]
    %v346 = vsel %vm261, %v336, 0
    %348 = vmatprep.subr.mxu0 0.0
    %349 = vmatpush1.msra.mxu0 0.0
    %350 = vmatprep.subr.mxu0 0.0
    %351 = vmatpush1.msra.mxu0 0.0
    %352 = vmatprep.subr.mxu0 0.0
    %353 = vmatpush1.msra.mxu0 0.0
    %354 = vmatprep.subr.mxu0 0.0
    %355 = vmatpush1.msra.mxu0 0.0
    %356 = vmatprep.subr.mxu0 0.0
    %357 = vmatpush1.msra.mxu0 0.0
    %358 = vmatprep.subr.mxu0 0.0
    %359 = vmatpush1.msra.mxu0 0.0
    %360 = vmatprep.subr.mxu0 0.0
    %361 = vmatpush1.msra.mxu0 0.0
    %362 = vmatprep.subr.mxu0 0.0
    %363 = vmatpush1.msra.mxu0 0.0
    %364 = vmatprep.subr.mxu0 0.0
    %365 = vmatpush1.msra.mxu0 %v344
    %366 = vmatprep.subr.mxu0 0.0
    %367 = vmatpush1.msra.mxu0 %v343
    %368 = vmatprep.subr.mxu0 0.0
    %369 = vmatpush1.msra.mxu0 %v342
    %370 = vmatprep.subr.mxu0 0.0
    %371 = vmatpush1.msra.mxu0 %v341
    %372 = vmatprep.subr.mxu0 0.0
    %373 = vmatpush1.msra.mxu0 %v340
    %374 = vmatprep.subr.mxu0 0.0
    %375 = vmatpush1.msra.mxu0 %v339
    %376 = vmatprep.subr.mxu0 0.0
    %377 = vmatpush1.msra.mxu0 %v338
    %378 = vmatprep.subr.mxu0 0.0
    %379 = vmatpush1.msra.mxu0 %v337
    %380 = vmatprep.subr.mxu0 0.0
    %381 = vmatpush2.msra.mxu0 0.0
    %382 = vmatprep.subr.mxu0 0.0
    %383 = vmatpush2.msra.mxu0 0.0
    %384 = vmatprep.subr.mxu0 0.0
    %385 = vmatpush2.msra.mxu0 0.0
    %386 = vmatprep.subr.mxu0 0.0
    %387 = vmatpush2.msra.mxu0 0.0
    %388 = vmatprep.subr.mxu0 0.0
    %389 = vmatpush2.msra.mxu0 0.0
    %390 = vmatprep.subr.mxu0 0.0
    %391 = vmatpush2.msra.mxu0 0.0
    %392 = vmatprep.subr.mxu0 0.0
    %393 = vmatpush2.msra.mxu0 0.0
    %394 = vmatprep.subr.mxu0 0.0
    %395 = vmatpush2.msra.mxu0 0.0
    %396 = vmatprep.subr.mxu0 0.0
    %397 = vmatpush2.msra.mxu0 0.0
    %398 = vmatprep.subr.mxu0 0.0
    %399 = vmatpush2.msra.mxu0 0.0
    %400 = vmatprep.subr.mxu0 0.0
    %401 = vmatpush2.msra.mxu0 0.0
    %402 = vmatprep.subr.mxu0 0.0
    %403 = vmatpush2.msra.mxu0 0.0
    %404 = vmatprep.subr.mxu0 0.0
    %405 = vmatpush2.msra.mxu0 0.0
    %406 = vmatprep.subr.mxu0 0.0
    %407 = vmatpush2.msra.mxu0 0.0
    %408 = vmatprep.subr.mxu0 0.0
    %409 = vmatpush2.msra.mxu0 0.0
    %410 = vmatprep.subr.mxu0 0.0
    %411 = vmatpush2.msra.mxu0 0.0
    %412 = vmatprep.mubr.f32.mxu0 0.0
    %413 = vmatmul.mubr.f32.gmra.mxu0 %v346
    %v414 = vpop.f32.mrf.mxu0
    %v415 = vadd.f32 0.0, %v414
    %v416 = vpop.f32.mrf.mxu0
    %417 = vdwg.mxu0
    %v419 = vsel %vm74, %v415, 0
    %v421 = vsel %vm74, %v336, 0
    %423 = vmatprep.subr.mxu0 0.0
    %424 = vmatpush1.xpose.msra.mxu0 0.0
    %425 = vmatprep.subr.mxu0 0.0
    %426 = vmatpush1.xpose.msra.mxu0 0.0
    %427 = vmatprep.subr.mxu0 0.0
    %428 = vmatpush1.xpose.msra.mxu0 0.0
    %429 = vmatprep.subr.mxu0 0.0
    %430 = vmatpush1.xpose.msra.mxu0 0.0
    %431 = vmatprep.subr.mxu0 0.0
    %432 = vmatpush1.xpose.msra.mxu0 0.0
    %433 = vmatprep.subr.mxu0 0.0
    %434 = vmatpush1.xpose.msra.mxu0 0.0
    %435 = vmatprep.subr.mxu0 0.0
    %436 = vmatpush1.xpose.msra.mxu0 0.0
    %437 = vmatprep.subr.mxu0 0.0
    %438 = vmatpush1.xpose.msra.mxu0 0.0
    %439 = vmatprep.subr.mxu0 0.0
    %440 = vmatpush1.xpose.msra.mxu0 0.0
    %441 = vmatprep.subr.mxu0 0.0
    %442 = vmatpush1.xpose.msra.mxu0 0.0
    %443 = vmatprep.subr.mxu0 0.0
    %444 = vmatpush1.xpose.msra.mxu0 0.0
    %445 = vmatprep.subr.mxu0 0.0
    %446 = vmatpush1.xpose.msra.mxu0 0.0
    %447 = vmatprep.subr.mxu0 0.0
    %448 = vmatpush1.xpose.msra.mxu0 0.0
    %449 = vmatprep.subr.mxu0 0.0
    %450 = vmatpush1.xpose.msra.mxu0 0.0
    %451 = vmatprep.subr.mxu0 0.0
    %452 = vmatpush1.xpose.msra.mxu0 0.0
    %453 = vmatprep.subr.mxu0 0.0
    %454 = vmatpush1.xpose.msra.mxu0 %v421
    %455 = vmatprep.subr.mxu0 0.0
    %456 = vmatpush2.xpose.msra.mxu0 0.0
    %457 = vmatprep.subr.mxu0 0.0
    %458 = vmatpush2.xpose.msra.mxu0 0.0
    %459 = vmatprep.subr.mxu0 0.0
    %460 = vmatpush2.xpose.msra.mxu0 0.0
    %461 = vmatprep.subr.mxu0 0.0
    %462 = vmatpush2.xpose.msra.mxu0 0.0
    %463 = vmatprep.subr.mxu0 0.0
    %464 = vmatpush2.xpose.msra.mxu0 0.0
    %465 = vmatprep.subr.mxu0 0.0
    %466 = vmatpush2.xpose.msra.mxu0 0.0
    %467 = vmatprep.subr.mxu0 0.0
    %468 = vmatpush2.xpose.msra.mxu0 0.0
    %469 = vmatprep.subr.mxu0 0.0
    %470 = vmatpush2.xpose.msra.mxu0 0.0
    %471 = vmatprep.subr.mxu0 0.0
    %472 = vmatpush2.xpose.msra.mxu0 0.0
    %473 = vmatprep.subr.mxu0 0.0
    %474 = vmatpush2.xpose.msra.mxu0 0.0
    %475 = vmatprep.subr.mxu0 0.0
    %476 = vmatpush2.xpose.msra.mxu0 0.0
    %477 = vmatprep.subr.mxu0 0.0
    %478 = vmatpush2.xpose.msra.mxu0 0.0
    %479 = vmatprep.subr.mxu0 0.0
    %480 = vmatpush2.xpose.msra.mxu0 0.0
    %481 = vmatprep.subr.mxu0 0.0
    %482 = vmatpush2.xpose.msra.mxu0 0.0
    %483 = vmatprep.subr.mxu0 0.0
    %484 = vmatpush2.xpose.msra.mxu0 0.0
    %485 = vmatprep.subr.mxu0 0.0
    %486 = vmatpush2.xpose.msra.mxu0 0.0
    %487 = vmatprep.mubr.f32.mxu0 0.0
    %488 = vmatmul.mubr.f32.gmra.mxu0 %v419
    %v489 = vpop.f32.mrf.mxu0
    %v490 = vadd.f32 0.0, %v489
    %v491 = vpop.f32.mrf.mxu0
    %492 = vdwg.mxu0
    %v493 = vmul.f32 %v490, 0.35355338
    %v494 = vadd.f32 %v493, %v158
    %vm495 = vcmask 64512
    %v496 = vsel %vm495, %v494, -inf
    %497 = vmax.xlane.f32.xlu0 %v496
    %v498 = vpop.xlane.xlu0 %497
    %v499 = vsub.f32 %v494, %v498
    %v500 = vmul.f32 %v499, 1.442695
    %v501 = vpow.pop %v500
    %v502 = vsel %vm495, %v501, 0.0
    %503 = vadd.xlane.f32.xlu0 %v502
    %v504 = vpop.xlane.xlu0 %503
    %v505 = vrcp.pop %v504
    %v506 = vmul.f32 %v501, %v505
    %v508 = vsel %vm495, %v506, 0
    %510 = vmatprep.subr.mxu0 0.0
    %511 = vmatpush1.msra.mxu0 0.0
    %512 = vmatprep.subr.mxu0 0.0
    %513 = vmatpush1.msra.mxu0 0.0
    %514 = vmatprep.subr.mxu0 0.0
    %515 = vmatpush1.msra.mxu0 0.0
    %516 = vmatprep.subr.mxu0 0.0
    %517 = vmatpush1.msra.mxu0 0.0
    %518 = vmatprep.subr.mxu0 0.0
    %519 = vmatpush1.msra.mxu0 0.0
    %520 = vmatprep.subr.mxu0 0.0
    %521 = vmatpush1.msra.mxu0 0.0
    %522 = vmatprep.subr.mxu0 0.0
    %523 = vmatpush1.msra.mxu0 0.0
    %524 = vmatprep.subr.mxu0 0.0
    %525 = vmatpush1.msra.mxu0 0.0
    %526 = vmatprep.subr.mxu0 0.0
    %527 = vmatpush1.msra.mxu0 0.0
    %528 = vmatprep.subr.mxu0 0.0
    %529 = vmatpush1.msra.mxu0 0.0
    %530 = vmatprep.subr.mxu0 0.0
    %531 = vmatpush1.msra.mxu0 0.0
    %532 = vmatprep.subr.mxu0 0.0
    %533 = vmatpush1.msra.mxu0 0.0
    %534 = vmatprep.subr.mxu0 0.0
    %535 = vmatpush1.msra.mxu0 0.0
    %536 = vmatprep.subr.mxu0 0.0
    %537 = vmatpush1.msra.mxu0 0.0
    %538 = vmatprep.subr.mxu0 0.0
    %539 = vmatpush1.msra.mxu0 0.0
    %540 = vmatprep.subr.mxu0 0.0
    %541 = vmatpush1.msra.mxu0 %v336
    %542 = vmatprep.subr.mxu0 0.0
    %543 = vmatpush2.msra.mxu0 0.0
    %544 = vmatprep.subr.mxu0 0.0
    %545 = vmatpush2.msra.mxu0 0.0
    %546 = vmatprep.subr.mxu0 0.0
    %547 = vmatpush2.msra.mxu0 0.0
    %548 = vmatprep.subr.mxu0 0.0
    %549 = vmatpush2.msra.mxu0 0.0
    %550 = vmatprep.subr.mxu0 0.0
    %551 = vmatpush2.msra.mxu0 0.0
    %552 = vmatprep.subr.mxu0 0.0
    %553 = vmatpush2.msra.mxu0 0.0
    %554 = vmatprep.subr.mxu0 0.0
    %555 = vmatpush2.msra.mxu0 0.0
    %556 = vmatprep.subr.mxu0 0.0
    %557 = vmatpush2.msra.mxu0 0.0
    %558 = vmatprep.subr.mxu0 0.0
    %559 = vmatpush2.msra.mxu0 0.0
    %560 = vmatprep.subr.mxu0 0.0
    %561 = vmatpush2.msra.mxu0 0.0
    %562 = vmatprep.subr.mxu0 0.0
    %563 = vmatpush2.msra.mxu0 0.0
    %564 = vmatprep.subr.mxu0 0.0
    %565 = vmatpush2.msra.mxu0 0.0
    %566 = vmatprep.subr.mxu0 0.0
    %567 = vmatpush2.msra.mxu0 0.0
    %568 = vmatprep.subr.mxu0 0.0
    %569 = vmatpush2.msra.mxu0 0.0
    %570 = vmatprep.subr.mxu0 0.0
    %571 = vmatpush2.msra.mxu0 0.0
    %572 = vmatprep.subr.mxu0 0.0
    %573 = vmatpush2.msra.mxu0 0.0
    %574 = vmatprep.mubr.f32.mxu0 0.0
    %575 = vmatmul.mubr.f32.gmra.mxu0 %v508
    %v576 = vpop.f32.mrf.mxu0
    %v577 = vadd.f32 0.0, %v576
    %v578 = vpop.f32.mrf.mxu0
    %579 = vdwg.mxu0
    %v580 = vld [vmem:[%s11] sm:$0xff]
    %v581 = vld [vmem:[%s11 + $0x8] sm:$0xff]
    %v582 = vld [vmem:[%s11 + $0x10] sm:$0xff]
    %v583 = vld [vmem:[%s11 + $0x18] sm:$0xff]
    %s584 = scalar_lea.vmem %s7, 64
    %v585 = vld [vmem:[%s584] sm:$0xff]
    %v586 = vld [vmem:[%s584 + $0x8] sm:$0xff]
    %v587 = vld [vmem:[%s584 + $0x10] sm:$0xff]
    %v588 = vld [vmem:[%s584 + $0x18] sm:$0xff]
    %v589 = vld [vmem:[%s584 + $0x20] sm:$0xff]
    %v590 = vld [vmem:[%s584 + $0x28] sm:$0xff]
    %v591 = vld [vmem:[%s584 + $0x30] sm:$0xff]
    %v592 = vld [vmem:[%s584 + $0x38] sm:$0xff]
    %593 = vmatprep.subr.mxu0 0.0
    %594 = vmatpush1.msra.mxu0 0.0
    %595 = vmatprep.subr.mxu0 0.0
    %596 = vmatpush1.msra.mxu0 0.0
    %597 = vmatprep.subr.mxu0 0.0
    %598 = vmatpush1.msra.mxu0 0.0
    %599 = vmatprep.subr.mxu0 0.0
    %600 = vmatpush1.msra.mxu0 0.0
    %601 = vmatprep.subr.mxu0 0.0
    %602 = vmatpush1.msra.mxu0 0.0
    %603 = vmatprep.subr.mxu0 0.0
    %604 = vmatpush1.msra.mxu0 0.0
    %605 = vmatprep.subr.mxu0 0.0
    %606 = vmatpush1.msra.mxu0 0.0
    %607 = vmatprep.subr.mxu0 0.0
    %608 = vmatpush1.msra.mxu0 0.0
    %609 = vmatprep.subr.mxu0 0.0
    %610 = vmatpush1.msra.mxu0 %v592
    %611 = vmatprep.subr.mxu0 0.0
    %612 = vmatpush1.msra.mxu0 %v591
    %613 = vmatprep.subr.mxu0 0.0
    %614 = vmatpush1.msra.mxu0 %v590
    %615 = vmatprep.subr.mxu0 0.0
    %616 = vmatpush1.msra.mxu0 %v589
    %617 = vmatprep.subr.mxu0 0.0
    %618 = vmatpush1.msra.mxu0 %v588
    %619 = vmatprep.subr.mxu0 0.0
    %620 = vmatpush1.msra.mxu0 %v587
    %621 = vmatprep.subr.mxu0 0.0
    %622 = vmatpush1.msra.mxu0 %v586
    %623 = vmatprep.subr.mxu0 0.0
    %624 = vmatpush1.msra.mxu0 %v585
    %625 = vmatprep.subr.mxu0 0.0
    %626 = vmatpush2.msra.mxu0 0.0
    %627 = vmatprep.subr.mxu0 0.0
    %628 = vmatpush2.msra.mxu0 0.0
    %629 = vmatprep.subr.mxu0 0.0
    %630 = vmatpush2.msra.mxu0 0.0
    %631 = vmatprep.subr.mxu0 0.0
    %632 = vmatpush2.msra.mxu0 0.0
    %633 = vmatprep.subr.mxu0 0.0
    %634 = vmatpush2.msra.mxu0 0.0
    %635 = vmatprep.subr.mxu0 0.0
    %636 = vmatpush2.msra.mxu0 0.0
    %637 = vmatprep.subr.mxu0 0.0
    %638 = vmatpush2.msra.mxu0 0.0
    %639 = vmatprep.subr.mxu0 0.0
    %640 = vmatpush2.msra.mxu0 0.0
    %641 = vmatprep.subr.mxu0 0.0
    %642 = vmatpush2.msra.mxu0 0.0
    %643 = vmatprep.subr.mxu0 0.0
    %644 = vmatpush2.msra.mxu0 0.0
    %645 = vmatprep.subr.mxu0 0.0
    %646 = vmatpush2.msra.mxu0 0.0
    %647 = vmatprep.subr.mxu0 0.0
    %648 = vmatpush2.msra.mxu0 0.0
    %649 = vmatprep.subr.mxu0 0.0
    %650 = vmatpush2.msra.mxu0 0.0
    %651 = vmatprep.subr.mxu0 0.0
    %652 = vmatpush2.msra.mxu0 0.0
    %653 = vmatprep.subr.mxu0 0.0
    %654 = vmatpush2.msra.mxu0 0.0
    %655 = vmatprep.subr.mxu0 0.0
    %656 = vmatpush2.msra.mxu0 0.0
    %657 = vmatprep.mubr.f32.mxu0 0.0
    %658 = vmatmul.mubr.f32.gmra.mxu0 %v346
    %v659 = vpop.f32.mrf.mxu0
    %v660 = vadd.f32 0.0, %v659
    %v661 = vpop.f32.mrf.mxu0
    %662 = vdwg.mxu0
    %v664 = vsel %vm74, %v660, 0
    %666 = vmatprep.subr.mxu0 0.0
    %667 = vmatpush1.xpose.msra.mxu0 0.0
    %668 = vmatprep.subr.mxu0 0.0
    %669 = vmatpush1.xpose.msra.mxu0 0.0
    %670 = vmatprep.subr.mxu0 0.0
    %671 = vmatpush1.xpose.msra.mxu0 0.0
    %672 = vmatprep.subr.mxu0 0.0
    %673 = vmatpush1.xpose.msra.mxu0 0.0
    %674 = vmatprep.subr.mxu0 0.0
    %675 = vmatpush1.xpose.msra.mxu0 0.0
    %676 = vmatprep.subr.mxu0 0.0
    %677 = vmatpush1.xpose.msra.mxu0 0.0
    %678 = vmatprep.subr.mxu0 0.0
    %679 = vmatpush1.xpose.msra.mxu0 0.0
    %680 = vmatprep.subr.mxu0 0.0
    %681 = vmatpush1.xpose.msra.mxu0 0.0
    %682 = vmatprep.subr.mxu0 0.0
    %683 = vmatpush1.xpose.msra.mxu0 0.0
    %684 = vmatprep.subr.mxu0 0.0
    %685 = vmatpush1.xpose.msra.mxu0 0.0
    %686 = vmatprep.subr.mxu0 0.0
    %687 = vmatpush1.xpose.msra.mxu0 0.0
    %688 = vmatprep.subr.mxu0 0.0
    %689 = vmatpush1.xpose.msra.mxu0 0.0
    %690 = vmatprep.subr.mxu0 0.0
    %691 = vmatpush1.xpose.msra.mxu0 0.0
    %692 = vmatprep.subr.mxu0 0.0
    %693 = vmatpush1.xpose.msra.mxu0 0.0
    %694 = vmatprep.subr.mxu0 0.0
    %695 = vmatpush1.xpose.msra.mxu0 0.0
    %696 = vmatprep.subr.mxu0 0.0
    %697 = vmatpush1.xpose.msra.mxu0 %v421
    %698 = vmatprep.subr.mxu0 0.0
    %699 = vmatpush2.xpose.msra.mxu0 0.0
    %700 = vmatprep.subr.mxu0 0.0
    %701 = vmatpush2.xpose.msra.mxu0 0.0
    %702 = vmatprep.subr.mxu0 0.0
    %703 = vmatpush2.xpose.msra.mxu0 0.0
    %704 = vmatprep.subr.mxu0 0.0
    %705 = vmatpush2.xpose.msra.mxu0 0.0
    %706 = vmatprep.subr.mxu0 0.0
    %707 = vmatpush2.xpose.msra.mxu0 0.0
    %708 = vmatprep.subr.mxu0 0.0
    %709 = vmatpush2.xpose.msra.mxu0 0.0
    %710 = vmatprep.subr.mxu0 0.0
    %711 = vmatpush2.xpose.msra.mxu0 0.0
    %712 = vmatprep.subr.mxu0 0.0
    %713 = vmatpush2.xpose.msra.mxu0 0.0
    %714 = vmatprep.subr.mxu0 0.0
    %715 = vmatpush2.xpose.msra.mxu0 0.0
    %716 = vmatprep.subr.mxu0 0.0
    %717 = vmatpush2.xpose.msra.mxu0 0.0
    %718 = vmatprep.subr.mxu0 0.0
    %719 = vmatpush2.xpose.msra.mxu0 0.0
    %720 = vmatprep.subr.mxu0 0.0
    %721 = vmatpush2.xpose.msra.mxu0 0.0
    %722 = vmatprep.subr.mxu0 0.0
    %723 = vmatpush2.xpose.msra.mxu0 0.0
    %724 = vmatprep.subr.mxu0 0.0
    %725 = vmatpush2.xpose.msra.mxu0 0.0
    %726 = vmatprep.subr.mxu0 0.0
    %727 = vmatpush2.xpose.msra.mxu0 0.0
    %728 = vmatprep.subr.mxu0 0.0
    %729 = vmatpush2.xpose.msra.mxu0 0.0
    %730 = vmatprep.mubr.f32.mxu0 0.0
    %731 = vmatmul.mubr.f32.gmra.mxu0 %v664
    %v732 = vpop.f32.mrf.mxu0
    %v733 = vadd.f32 0.0, %v732
    %v734 = vpop.f32.mrf.mxu0
    %735 = vdwg.mxu0
    %v736 = vmul.f32 %v733, 0.35355338
    %v737 = vadd.f32 %v736, %v158
    %v738 = vsel %vm495, %v737, -inf
    %739 = vmax.xlane.f32.xlu0 %v738
    %v740 = vpop.xlane.xlu0 %739
    %v741 = vsub.f32 %v737, %v740
    %v742 = vmul.f32 %v741, 1.442695
    %v743 = vpow.pop %v742
    %v744 = vsel %vm495, %v743, 0.0
    %745 = vadd.xlane.f32.xlu0 %v744
    %v746 = vpop.xlane.xlu0 %745
    %v747 = vrcp.pop %v746
    %v748 = vmul.f32 %v743, %v747
    %v750 = vsel %vm495, %v748, 0
    %752 = vmatprep.subr.mxu0 0.0
    %753 = vmatpush1.msra.mxu0 0.0
    %754 = vmatprep.subr.mxu0 0.0
    %755 = vmatpush1.msra.mxu0 0.0
    %756 = vmatprep.subr.mxu0 0.0
    %757 = vmatpush1.msra.mxu0 0.0
    %758 = vmatprep.subr.mxu0 0.0
    %759 = vmatpush1.msra.mxu0 0.0
    %760 = vmatprep.subr.mxu0 0.0
    %761 = vmatpush1.msra.mxu0 0.0
    %762 = vmatprep.subr.mxu0 0.0
    %763 = vmatpush1.msra.mxu0 0.0
    %764 = vmatprep.subr.mxu0 0.0
    %765 = vmatpush1.msra.mxu0 0.0
    %766 = vmatprep.subr.mxu0 0.0
    %767 = vmatpush1.msra.mxu0 0.0
    %768 = vmatprep.subr.mxu0 0.0
    %769 = vmatpush1.msra.mxu0 0.0
    %770 = vmatprep.subr.mxu0 0.0
    %771 = vmatpush1.msra.mxu0 0.0
    %772 = vmatprep.subr.mxu0 0.0
    %773 = vmatpush1.msra.mxu0 0.0
    %774 = vmatprep.subr.mxu0 0.0
    %775 = vmatpush1.msra.mxu0 0.0
    %776 = vmatprep.subr.mxu0 0.0
    %777 = vmatpush1.msra.mxu0 0.0
    %778 = vmatprep.subr.mxu0 0.0
    %779 = vmatpush1.msra.mxu0 0.0
    %780 = vmatprep.subr.mxu0 0.0
    %781 = vmatpush1.msra.mxu0 0.0
    %782 = vmatprep.subr.mxu0 0.0
    %783 = vmatpush1.msra.mxu0 %v336
    %784 = vmatprep.subr.mxu0 0.0
    %785 = vmatpush2.msra.mxu0 0.0
    %786 = vmatprep.subr.mxu0 0.0
    %787 = vmatpush2.msra.mxu0 0.0
    %788 = vmatprep.subr.mxu0 0.0
    %789 = vmatpush2.msra.mxu0 0.0
    %790 = vmatprep.subr.mxu0 0.0
    %791 = vmatpush2.msra.mxu0 0.0
    %792 = vmatprep.subr.mxu0 0.0
    %793 = vmatpush2.msra.mxu0 0.0
    %794 = vmatprep.subr.mxu0 0.0
    %795 = vmatpush2.msra.mxu0 0.0
    %796 = vmatprep.subr.mxu0 0.0
    %797 = vmatpush2.msra.mxu0 0.0
    %798 = vmatprep.subr.mxu0 0.0
    %799 = vmatpush2.msra.mxu0 0.0
    %800 = vmatprep.subr.mxu0 0.0
    %801 = vmatpush2.msra.mxu0 0.0
    %802 = vmatprep.subr.mxu0 0.0
    %803 = vmatpush2.msra.mxu0 0.0
    %804 = vmatprep.subr.mxu0 0.0
    %805 = vmatpush2.msra.mxu0 0.0
    %806 = vmatprep.subr.mxu0 0.0
    %807 = vmatpush2.msra.mxu0 0.0
    %808 = vmatprep.subr.mxu0 0.0
    %809 = vmatpush2.msra.mxu0 0.0
    %810 = vmatprep.subr.mxu0 0.0
    %811 = vmatpush2.msra.mxu0 0.0
    %812 = vmatprep.subr.mxu0 0.0
    %813 = vmatpush2.msra.mxu0 0.0
    %814 = vmatprep.subr.mxu0 0.0
    %815 = vmatpush2.msra.mxu0 0.0
    %816 = vmatprep.mubr.f32.mxu0 0.0
    %817 = vmatmul.mubr.f32.gmra.mxu0 %v750
    %v818 = vpop.f32.mrf.mxu0
    %v819 = vadd.f32 0.0, %v818
    %v820 = vpop.f32.mrf.mxu0
    %821 = vdwg.mxu0
    %s822 = scalar_lea.vmem %s11, 32
    %v823 = vld [vmem:[%s822] sm:$0xff]
    %v824 = vld [vmem:[%s822 + $0x8] sm:$0xff]
    %v825 = vld [vmem:[%s822 + $0x10] sm:$0xff]
    %v826 = vld [vmem:[%s822 + $0x18] sm:$0xff]
    %v828 = vsel %vm74, %v819, 0
    %830 = vmatprep.subr.mxu0 0.0
    %831 = vmatpush1.msra.mxu0 0.0
    %832 = vmatprep.subr.mxu0 0.0
    %833 = vmatpush1.msra.mxu0 0.0
    %834 = vmatprep.subr.mxu0 0.0
    %835 = vmatpush1.msra.mxu0 0.0
    %836 = vmatprep.subr.mxu0 0.0
    %837 = vmatpush1.msra.mxu0 0.0
    %838 = vmatprep.subr.mxu0 0.0
    %839 = vmatpush1.msra.mxu0 0.0
    %840 = vmatprep.subr.mxu0 0.0
    %841 = vmatpush1.msra.mxu0 0.0
    %842 = vmatprep.subr.mxu0 0.0
    %843 = vmatpush1.msra.mxu0 0.0
    %844 = vmatprep.subr.mxu0 0.0
    %845 = vmatpush1.msra.mxu0 0.0
    %846 = vmatprep.subr.mxu0 0.0
    %847 = vmatpush1.msra.mxu0 0.0
    %848 = vmatprep.subr.mxu0 0.0
    %849 = vmatpush1.msra.mxu0 0.0
    %850 = vmatprep.subr.mxu0 0.0
    %851 = vmatpush1.msra.mxu0 0.0
    %852 = vmatprep.subr.mxu0 0.0
    %853 = vmatpush1.msra.mxu0 0.0
    %854 = vmatprep.subr.mxu0 0.0
    %855 = vmatpush1.msra.mxu0 %v826
    %856 = vmatprep.subr.mxu0 0.0
    %857 = vmatpush1.msra.mxu0 %v825
    %858 = vmatprep.subr.mxu0 0.0
    %859 = vmatpush1.msra.mxu0 %v824
    %860 = vmatprep.subr.mxu0 0.0
    %861 = vmatpush1.msra.mxu0 %v823
    %862 = vmatprep.subr.mxu0 0.0
    %863 = vmatpush2.msra.mxu0 0.0
    %864 = vmatprep.subr.mxu0 0.0
    %865 = vmatpush2.msra.mxu0 0.0
    %866 = vmatprep.subr.mxu0 0.0
    %867 = vmatpush2.msra.mxu0 0.0
    %868 = vmatprep.subr.mxu0 0.0
    %869 = vmatpush2.msra.mxu0 0.0
    %870 = vmatprep.subr.mxu0 0.0
    %871 = vmatpush2.msra.mxu0 0.0
    %872 = vmatprep.subr.mxu0 0.0
    %873 = vmatpush2.msra.mxu0 0.0
    %874 = vmatprep.subr.mxu0 0.0
    %875 = vmatpush2.msra.mxu0 0.0
    %876 = vmatprep.subr.mxu0 0.0
    %877 = vmatpush2.msra.mxu0 0.0
    %878 = vmatprep.subr.mxu0 0.0
    %879 = vmatpush2.msra.mxu0 0.0
    %880 = vmatprep.subr.mxu0 0.0
    %881 = vmatpush2.msra.mxu0 0.0
    %882 = vmatprep.subr.mxu0 0.0
    %883 = vmatpush2.msra.mxu0 0.0
    %884 = vmatprep.subr.mxu0 0.0
    %885 = vmatpush2.msra.mxu0 0.0
    %886 = vmatprep.subr.mxu0 0.0
    %887 = vmatpush2.msra.mxu0 0.0
    %888 = vmatprep.subr.mxu0 0.0
    %889 = vmatpush2.msra.mxu0 0.0
    %890 = vmatprep.subr.mxu0 0.0
    %891 = vmatpush2.msra.mxu0 0.0
    %892 = vmatprep.subr.mxu0 0.0
    %893 = vmatpush2.msra.mxu0 0.0
    %894 = vmatprep.mubr.f32.mxu0 0.0
    %895 = vmatmul.mubr.f32.gmra.mxu0 %v828
    %v896 = vpop.f32.mrf.mxu0
    %v897 = vadd.f32 0.0, %v896
    %v898 = vpop.f32.mrf.mxu0
    %899 = vdwg.mxu0
    %v901 = vsel %vm74, %v577, 0
    %903 = vmatprep.subr.mxu0 0.0
    %904 = vmatpush1.msra.mxu0 0.0
    %905 = vmatprep.subr.mxu0 0.0
    %906 = vmatpush1.msra.mxu0 0.0
    %907 = vmatprep.subr.mxu0 0.0
    %908 = vmatpush1.msra.mxu0 0.0
    %909 = vmatprep.subr.mxu0 0.0
    %910 = vmatpush1.msra.mxu0 0.0
    %911 = vmatprep.subr.mxu0 0.0
    %912 = vmatpush1.msra.mxu0 0.0
    %913 = vmatprep.subr.mxu0 0.0
    %914 = vmatpush1.msra.mxu0 0.0
    %915 = vmatprep.subr.mxu0 0.0
    %916 = vmatpush1.msra.mxu0 0.0
    %917 = vmatprep.subr.mxu0 0.0
    %918 = vmatpush1.msra.mxu0 0.0
    %919 = vmatprep.subr.mxu0 0.0
    %920 = vmatpush1.msra.mxu0 0.0
    %921 = vmatprep.subr.mxu0 0.0
    %922 = vmatpush1.msra.mxu0 0.0
    %923 = vmatprep.subr.mxu0 0.0
    %924 = vmatpush1.msra.mxu0 0.0
    %925 = vmatprep.subr.mxu0 0.0
    %926 = vmatpush1.msra.mxu0 0.0
    %927 = vmatprep.subr.mxu0 0.0
    %928 = vmatpush1.msra.mxu0 %v583
    %929 = vmatprep.subr.mxu0 0.0
    %930 = vmatpush1.msra.mxu0 %v582
    %931 = vmatprep.subr.mxu0 0.0
    %932 = vmatpush1.msra.mxu0 %v581
    %933 = vmatprep.subr.mxu0 0.0
    %934 = vmatpush1.msra.mxu0 %v580
    %935 = vmatprep.subr.mxu0 0.0
    %936 = vmatpush2.msra.mxu0 0.0
    %937 = vmatprep.subr.mxu0 0.0
    %938 = vmatpush2.msra.mxu0 0.0
    %939 = vmatprep.subr.mxu0 0.0
    %940 = vmatpush2.msra.mxu0 0.0
    %941 = vmatprep.subr.mxu0 0.0
    %942 = vmatpush2.msra.mxu0 0.0
    %943 = vmatprep.subr.mxu0 0.0
    %944 = vmatpush2.msra.mxu0 0.0
    %945 = vmatprep.subr.mxu0 0.0
    %946 = vmatpush2.msra.mxu0 0.0
    %947 = vmatprep.subr.mxu0 0.0
    %948 = vmatpush2.msra.mxu0 0.0
    %949 = vmatprep.subr.mxu0 0.0
    %950 = vmatpush2.msra.mxu0 0.0
    %951 = vmatprep.subr.mxu0 0.0
    %952 = vmatpush2.msra.mxu0 0.0
    %953 = vmatprep.subr.mxu0 0.0
    %954 = vmatpush2.msra.mxu0 0.0
    %955 = vmatprep.subr.mxu0 0.0
    %956 = vmatpush2.msra.mxu0 0.0
    %957 = vmatprep.subr.mxu0 0.0
    %958 = vmatpush2.msra.mxu0 0.0
    %959 = vmatprep.subr.mxu0 0.0
    %960 = vmatpush2.msra.mxu0 0.0
    %961 = vmatprep.subr.mxu0 0.0
    %962 = vmatpush2.msra.mxu0 0.0
    %963 = vmatprep.subr.mxu0 0.0
    %964 = vmatpush2.msra.mxu0 0.0
    %965 = vmatprep.subr.mxu0 0.0
    %966 = vmatpush2.msra.mxu0 0.0
    %967 = vmatprep.mubr.f32.mxu0 0.0
    %968 = vmatmul.mubr.f32.gmra.mxu0 %v901
    %v969 = vpop.f32.mrf.mxu0
    %v970 = vadd.f32 %v897, %v969
    %v971 = vpop.f32.mrf.mxu0
    %972 = vdwg.mxu0
    %s973 = scalar_lea.vmem %s7, 128
    %v974 = vld [vmem:[%s973] sm:$0xff]
    %v975 = vld [vmem:[%s973 + $0x8] sm:$0xff]
    %v976 = vld [vmem:[%s973 + $0x10] sm:$0xff]
    %v977 = vld [vmem:[%s973 + $0x18] sm:$0xff]
    %v978 = vld [vmem:[%s973 + $0x20] sm:$0xff]
    %v979 = vld [vmem:[%s973 + $0x28] sm:$0xff]
    %v980 = vld [vmem:[%s973 + $0x30] sm:$0xff]
    %v981 = vld [vmem:[%s973 + $0x38] sm:$0xff]
    %982 = vmatprep.subr.mxu0 0.0
    %983 = vmatpush1.msra.mxu0 0.0
    %984 = vmatprep.subr.mxu0 0.0
    %985 = vmatpush1.msra.mxu0 0.0
    %986 = vmatprep.subr.mxu0 0.0
    %987 = vmatpush1.msra.mxu0 0.0
    %988 = vmatprep.subr.mxu0 0.0
    %989 = vmatpush1.msra.mxu0 0.0
    %990 = vmatprep.subr.mxu0 0.0
    %991 = vmatpush1.msra.mxu0 0.0
    %992 = vmatprep.subr.mxu0 0.0
    %993 = vmatpush1.msra.mxu0 0.0
    %994 = vmatprep.subr.mxu0 0.0
    %995 = vmatpush1.msra.mxu0 0.0
    %996 = vmatprep.subr.mxu0 0.0
    %997 = vmatpush1.msra.mxu0 0.0
    %998 = vmatprep.subr.mxu0 0.0
    %999 = vmatpush1.msra.mxu0 %v981
    %1000 = vmatprep.subr.mxu0 0.0
    %1001 = vmatpush1.msra.mxu0 %v980
    %1002 = vmatprep.subr.mxu0 0.0
    %1003 = vmatpush1.msra.mxu0 %v979
    %1004 = vmatprep.subr.mxu0 0.0
    %1005 = vmatpush1.msra.mxu0 %v978
    %1006 = vmatprep.subr.mxu0 0.0
    %1007 = vmatpush1.msra.mxu0 %v977
    %1008 = vmatprep.subr.mxu0 0.0
    %1009 = vmatpush1.msra.mxu0 %v976
    %1010 = vmatprep.subr.mxu0 0.0
    %1011 = vmatpush1.msra.mxu0 %v975
    %1012 = vmatprep.subr.mxu0 0.0
    %1013 = vmatpush1.msra.mxu0 %v974
    %1014 = vmatprep.subr.mxu0 0.0
    %1015 = vmatpush2.msra.mxu0 0.0
    %1016 = vmatprep.subr.mxu0 0.0
    %1017 = vmatpush2.msra.mxu0 0.0
    %1018 = vmatprep.subr.mxu0 0.0
    %1019 = vmatpush2.msra.mxu0 0.0
    %1020 = vmatprep.subr.mxu0 0.0
    %1021 = vmatpush2.msra.mxu0 0.0
    %1022 = vmatprep.subr.mxu0 0.0
    %1023 = vmatpush2.msra.mxu0 0.0
    %1024 = vmatprep.subr.mxu0 0.0
    %1025 = vmatpush2.msra.mxu0 0.0
    %1026 = vmatprep.subr.mxu0 0.0
    %1027 = vmatpush2.msra.mxu0 0.0
    %1028 = vmatprep.subr.mxu0 0.0
    %1029 = vmatpush2.msra.mxu0 0.0
    %1030 = vmatprep.subr.mxu0 0.0
    %1031 = vmatpush2.msra.mxu0 0.0
    %1032 = vmatprep.subr.mxu0 0.0
    %1033 = vmatpush2.msra.mxu0 0.0
    %1034 = vmatprep.subr.mxu0 0.0
    %1035 = vmatpush2.msra.mxu0 0.0
    %1036 = vmatprep.subr.mxu0 0.0
    %1037 = vmatpush2.msra.mxu0 0.0
    %1038 = vmatprep.subr.mxu0 0.0
    %1039 = vmatpush2.msra.mxu0 0.0
    %1040 = vmatprep.subr.mxu0 0.0
    %1041 = vmatpush2.msra.mxu0 0.0
    %1042 = vmatprep.subr.mxu0 0.0
    %1043 = vmatpush2.msra.mxu0 0.0
    %1044 = vmatprep.subr.mxu0 0.0
    %1045 = vmatpush2.msra.mxu0 0.0
    %1046 = vmatprep.mubr.f32.mxu0 0.0
    %1047 = vmatmul.mubr.f32.gmra.mxu0 %v346
    %v1048 = vpop.f32.mrf.mxu0
    %v1049 = vadd.f32 0.0, %v1048
    %v1050 = vpop.f32.mrf.mxu0
    %1051 = vdwg.mxu0
    %v1053 = vsel %vm74, %v1049, 0
    %1055 = vmatprep.subr.mxu0 0.0
    %1056 = vmatpush1.xpose.msra.mxu0 0.0
    %1057 = vmatprep.subr.mxu0 0.0
    %1058 = vmatpush1.xpose.msra.mxu0 0.0
    %1059 = vmatprep.subr.mxu0 0.0
    %1060 = vmatpush1.xpose.msra.mxu0 0.0
    %1061 = vmatprep.subr.mxu0 0.0
    %1062 = vmatpush1.xpose.msra.mxu0 0.0
    %1063 = vmatprep.subr.mxu0 0.0
    %1064 = vmatpush1.xpose.msra.mxu0 0.0
    %1065 = vmatprep.subr.mxu0 0.0
    %1066 = vmatpush1.xpose.msra.mxu0 0.0
    %1067 = vmatprep.subr.mxu0 0.0
    %1068 = vmatpush1.xpose.msra.mxu0 0.0
    %1069 = vmatprep.subr.mxu0 0.0
    %1070 = vmatpush1.xpose.msra.mxu0 0.0
    %1071 = vmatprep.subr.mxu0 0.0
    %1072 = vmatpush1.xpose.msra.mxu0 0.0
    %1073 = vmatprep.subr.mxu0 0.0
    %1074 = vmatpush1.xpose.msra.mxu0 0.0
    %1075 = vmatprep.subr.mxu0 0.0
    %1076 = vmatpush1.xpose.msra.mxu0 0.0
    %1077 = vmatprep.subr.mxu0 0.0
    %1078 = vmatpush1.xpose.msra.mxu0 0.0
    %1079 = vmatprep.subr.mxu0 0.0
    %1080 = vmatpush1.xpose.msra.mxu0 0.0
    %1081 = vmatprep.subr.mxu0 0.0
    %1082 = vmatpush1.xpose.msra.mxu0 0.0
    %1083 = vmatprep.subr.mxu0 0.0
    %1084 = vmatpush1.xpose.msra.mxu0 0.0
    %1085 = vmatprep.subr.mxu0 0.0
    %1086 = vmatpush1.xpose.msra.mxu0 %v421
    %1087 = vmatprep.subr.mxu0 0.0
    %1088 = vmatpush2.xpose.msra.mxu0 0.0
    %1089 = vmatprep.subr.mxu0 0.0
    %1090 = vmatpush2.xpose.msra.mxu0 0.0
    %1091 = vmatprep.subr.mxu0 0.0
    %1092 = vmatpush2.xpose.msra.mxu0 0.0
    %1093 = vmatprep.subr.mxu0 0.0
    %1094 = vmatpush2.xpose.msra.mxu0 0.0
    %1095 = vmatprep.subr.mxu0 0.0
    %1096 = vmatpush2.xpose.msra.mxu0 0.0
    %1097 = vmatprep.subr.mxu0 0.0
    %1098 = vmatpush2.xpose.msra.mxu0 0.0
    %1099 = vmatprep.subr.mxu0 0.0
    %1100 = vmatpush2.xpose.msra.mxu0 0.0
    %1101 = vmatprep.subr.mxu0 0.0
    %1102 = vmatpush2.xpose.msra.mxu0 0.0
    %1103 = vmatprep.subr.mxu0 0.0
    %1104 = vmatpush2.xpose.msra.mxu0 0.0
    %1105 = vmatprep.subr.mxu0 0.0
    %1106 = vmatpush2.xpose.msra.mxu0 0.0
    %1107 = vmatprep.subr.mxu0 0.0
    %1108 = vmatpush2.xpose.msra.mxu0 0.0
    %1109 = vmatprep.subr.mxu0 0.0
    %1110 = vmatpush2.xpose.msra.mxu0 0.0
    %1111 = vmatprep.subr.mxu0 0.0
    %1112 = vmatpush2.xpose.msra.mxu0 0.0
    %1113 = vmatprep.subr.mxu0 0.0
    %1114 = vmatpush2.xpose.msra.mxu0 0.0
    %1115 = vmatprep.subr.mxu0 0.0
    %1116 = vmatpush2.xpose.msra.mxu0 0.0
    %1117 = vmatprep.subr.mxu0 0.0
    %1118 = vmatpush2.xpose.msra.mxu0 0.0
    %1119 = vmatprep.mubr.f32.mxu0 0.0
    %1120 = vmatmul.mubr.f32.gmra.mxu0 %v1053
    %v1121 = vpop.f32.mrf.mxu0
    %v1122 = vadd.f32 0.0, %v1121
    %v1123 = vpop.f32.mrf.mxu0
    %1124 = vdwg.mxu0
    %v1125 = vmul.f32 %v1122, 0.35355338
    %v1126 = vadd.f32 %v1125, %v158
    %v1127 = vsel %vm495, %v1126, -inf
    %1128 = vmax.xlane.f32.xlu0 %v1127
    %v1129 = vpop.xlane.xlu0 %1128
    %v1130 = vsub.f32 %v1126, %v1129
    %v1131 = vmul.f32 %v1130, 1.442695
    %v1132 = vpow.pop %v1131
    %v1133 = vsel %vm495, %v1132, 0.0
    %1134 = vadd.xlane.f32.xlu0 %v1133
    %v1135 = vpop.xlane.xlu0 %1134
    %v1136 = vrcp.pop %v1135
    %v1137 = vmul.f32 %v1132, %v1136
    %v1139 = vsel %vm495, %v1137, 0
    %1141 = vmatprep.subr.mxu0 0.0
    %1142 = vmatpush1.msra.mxu0 0.0
    %1143 = vmatprep.subr.mxu0 0.0
    %1144 = vmatpush1.msra.mxu0 0.0
    %1145 = vmatprep.subr.mxu0 0.0
    %1146 = vmatpush1.msra.mxu0 0.0
    %1147 = vmatprep.subr.mxu0 0.0
    %1148 = vmatpush1.msra.mxu0 0.0
    %1149 = vmatprep.subr.mxu0 0.0
    %1150 = vmatpush1.msra.mxu0 0.0
    %1151 = vmatprep.subr.mxu0 0.0
    %1152 = vmatpush1.msra.mxu0 0.0
    %1153 = vmatprep.subr.mxu0 0.0
    %1154 = vmatpush1.msra.mxu0 0.0
    %1155 = vmatprep.subr.mxu0 0.0
    %1156 = vmatpush1.msra.mxu0 0.0
    %1157 = vmatprep.subr.mxu0 0.0
    %1158 = vmatpush1.msra.mxu0 0.0
    %1159 = vmatprep.subr.mxu0 0.0
    %1160 = vmatpush1.msra.mxu0 0.0
    %1161 = vmatprep.subr.mxu0 0.0
    %1162 = vmatpush1.msra.mxu0 0.0
    %1163 = vmatprep.subr.mxu0 0.0
    %1164 = vmatpush1.msra.mxu0 0.0
    %1165 = vmatprep.subr.mxu0 0.0
    %1166 = vmatpush1.msra.mxu0 0.0
    %1167 = vmatprep.subr.mxu0 0.0
    %1168 = vmatpush1.msra.mxu0 0.0
    %1169 = vmatprep.subr.mxu0 0.0
    %1170 = vmatpush1.msra.mxu0 0.0
    %1171 = vmatprep.subr.mxu0 0.0
    %1172 = vmatpush1.msra.mxu0 %v336
    %1173 = vmatprep.subr.mxu0 0.0
    %1174 = vmatpush2.msra.mxu0 0.0
    %1175 = vmatprep.subr.mxu0 0.0
    %1176 = vmatpush2.msra.mxu0 0.0
    %1177 = vmatprep.subr.mxu0 0.0
    %1178 = vmatpush2.msra.mxu0 0.0
    %1179 = vmatprep.subr.mxu0 0.0
    %1180 = vmatpush2.msra.mxu0 0.0
    %1181 = vmatprep.subr.mxu0 0.0
    %1182 = vmatpush2.msra.mxu0 0.0
    %1183 = vmatprep.subr.mxu0 0.0
    %1184 = vmatpush2.msra.mxu0 0.0
    %1185 = vmatprep.subr.mxu0 0.0
    %1186 = vmatpush2.msra.mxu0 0.0
    %1187 = vmatprep.subr.mxu0 0.0
    %1188 = vmatpush2.msra.mxu0 0.0
    %1189 = vmatprep.subr.mxu0 0.0
    %1190 = vmatpush2.msra.mxu0 0.0
    %1191 = vmatprep.subr.mxu0 0.0
    %1192 = vmatpush2.msra.mxu0 0.0
    %1193 = vmatprep.subr.mxu0 0.0
    %1194 = vmatpush2.msra.mxu0 0.0
    %1195 = vmatprep.subr.mxu0 0.0
    %1196 = vmatpush2.msra.mxu0 0.0
    %1197 = vmatprep.subr.mxu0 0.0
    %1198 = vmatpush2.msra.mxu0 0.0
    %1199 = vmatprep.subr.mxu0 0.0
    %1200 = vmatpush2.msra.mxu0 0.0
    %1201 = vmatprep.subr.mxu0 0.0
    %1202 = vmatpush2.msra.mxu0 0.0
    %1203 = vmatprep.subr.mxu0 0.0
    %1204 = vmatpush2.msra.mxu0 0.0
    %1205 = vmatprep.mubr.f32.mxu0 0.0
    %1206 = vmatmul.mubr.f32.gmra.mxu0 %v1139
    %v1207 = vpop.f32.mrf.mxu0
    %v1208 = vadd.f32 0.0, %v1207
    %v1209 = vpop.f32.mrf.mxu0
    %1210 = vdwg.mxu0
    %s1211 = scalar_lea.vmem %s11, 64
    %v1212 = vld [vmem:[%s1211] sm:$0xff]
    %v1213 = vld [vmem:[%s1211 + $0x8] sm:$0xff]
    %v1214 = vld [vmem:[%s1211 + $0x10] sm:$0xff]
    %v1215 = vld [vmem:[%s1211 + $0x18] sm:$0xff]
    %v1217 = vsel %vm74, %v1208, 0
    %1219 = vmatprep.subr.mxu0 0.0
    %1220 = vmatpush1.msra.mxu0 0.0
    %1221 = vmatprep.subr.mxu0 0.0
    %1222 = vmatpush1.msra.mxu0 0.0
    %1223 = vmatprep.subr.mxu0 0.0
    %1224 = vmatpush1.msra.mxu0 0.0
    %1225 = vmatprep.subr.mxu0 0.0
    %1226 = vmatpush1.msra.mxu0 0.0
    %1227 = vmatprep.subr.mxu0 0.0
    %1228 = vmatpush1.msra.mxu0 0.0
    %1229 = vmatprep.subr.mxu0 0.0
    %1230 = vmatpush1.msra.mxu0 0.0
    %1231 = vmatprep.subr.mxu0 0.0
    %1232 = vmatpush1.msra.mxu0 0.0
    %1233 = vmatprep.subr.mxu0 0.0
    %1234 = vmatpush1.msra.mxu0 0.0
    %1235 = vmatprep.subr.mxu0 0.0
    %1236 = vmatpush1.msra.mxu0 0.0
    %1237 = vmatprep.subr.mxu0 0.0
    %1238 = vmatpush1.msra.mxu0 0.0
    %1239 = vmatprep.subr.mxu0 0.0
    %1240 = vmatpush1.msra.mxu0 0.0
    %1241 = vmatprep.subr.mxu0 0.0
    %1242 = vmatpush1.msra.mxu0 0.0
    %1243 = vmatprep.subr.mxu0 0.0
    %1244 = vmatpush1.msra.mxu0 %v1215
    %1245 = vmatprep.subr.mxu0 0.0
    %1246 = vmatpush1.msra.mxu0 %v1214
    %1247 = vmatprep.subr.mxu0 0.0
    %1248 = vmatpush1.msra.mxu0 %v1213
    %1249 = vmatprep.subr.mxu0 0.0
    %1250 = vmatpush1.msra.mxu0 %v1212
    %1251 = vmatprep.subr.mxu0 0.0
    %1252 = vmatpush2.msra.mxu0 0.0
    %1253 = vmatprep.subr.mxu0 0.0
    %1254 = vmatpush2.msra.mxu0 0.0
    %1255 = vmatprep.subr.mxu0 0.0
    %1256 = vmatpush2.msra.mxu0 0.0
    %1257 = vmatprep.subr.mxu0 0.0
    %1258 = vmatpush2.msra.mxu0 0.0
    %1259 = vmatprep.subr.mxu0 0.0
    %1260 = vmatpush2.msra.mxu0 0.0
    %1261 = vmatprep.subr.mxu0 0.0
    %1262 = vmatpush2.msra.mxu0 0.0
    %1263 = vmatprep.subr.mxu0 0.0
    %1264 = vmatpush2.msra.mxu0 0.0
    %1265 = vmatprep.subr.mxu0 0.0
    %1266 = vmatpush2.msra.mxu0 0.0
    %1267 = vmatprep.subr.mxu0 0.0
    %1268 = vmatpush2.msra.mxu0 0.0
    %1269 = vmatprep.subr.mxu0 0.0
    %1270 = vmatpush2.msra.mxu0 0.0
    %1271 = vmatprep.subr.mxu0 0.0
    %1272 = vmatpush2.msra.mxu0 0.0
    %1273 = vmatprep.subr.mxu0 0.0
    %1274 = vmatpush2.msra.mxu0 0.0
    %1275 = vmatprep.subr.mxu0 0.0
    %1276 = vmatpush2.msra.mxu0 0.0
    %1277 = vmatprep.subr.mxu0 0.0
    %1278 = vmatpush2.msra.mxu0 0.0
    %1279 = vmatprep.subr.mxu0 0.0
    %1280 = vmatpush2.msra.mxu0 0.0
    %1281 = vmatprep.subr.mxu0 0.0
    %1282 = vmatpush2.msra.mxu0 0.0
    %1283 = vmatprep.mubr.f32.mxu0 0.0
    %1284 = vmatmul.mubr.f32.gmra.mxu0 %v1217
    %v1285 = vpop.f32.mrf.mxu0
    %v1286 = vadd.f32 0.0, %v1285
    %v1287 = vpop.f32.mrf.mxu0
    %1288 = vdwg.mxu0
    %v1289 = vadd.f32 %v970, %v1286
    %s1290 = scalar_lea.vmem %s7, 192
    %v1291 = vld [vmem:[%s1290] sm:$0xff]
    %v1292 = vld [vmem:[%s1290 + $0x8] sm:$0xff]
    %v1293 = vld [vmem:[%s1290 + $0x10] sm:$0xff]
    %v1294 = vld [vmem:[%s1290 + $0x18] sm:$0xff]
    %v1295 = vld [vmem:[%s1290 + $0x20] sm:$0xff]
    %v1296 = vld [vmem:[%s1290 + $0x28] sm:$0xff]
    %v1297 = vld [vmem:[%s1290 + $0x30] sm:$0xff]
    %v1298 = vld [vmem:[%s1290 + $0x38] sm:$0xff]
    %1299 = vmatprep.subr.mxu0 0.0
    %1300 = vmatpush1.msra.mxu0 0.0
    %1301 = vmatprep.subr.mxu0 0.0
    %1302 = vmatpush1.msra.mxu0 0.0
    %1303 = vmatprep.subr.mxu0 0.0
    %1304 = vmatpush1.msra.mxu0 0.0
    %1305 = vmatprep.subr.mxu0 0.0
    %1306 = vmatpush1.msra.mxu0 0.0
    %1307 = vmatprep.subr.mxu0 0.0
    %1308 = vmatpush1.msra.mxu0 0.0
    %1309 = vmatprep.subr.mxu0 0.0
    %1310 = vmatpush1.msra.mxu0 0.0
    %1311 = vmatprep.subr.mxu0 0.0
    %1312 = vmatpush1.msra.mxu0 0.0
    %1313 = vmatprep.subr.mxu0 0.0
    %1314 = vmatpush1.msra.mxu0 0.0
    %1315 = vmatprep.subr.mxu0 0.0
    %1316 = vmatpush1.msra.mxu0 %v1298
    %1317 = vmatprep.subr.mxu0 0.0
    %1318 = vmatpush1.msra.mxu0 %v1297
    %1319 = vmatprep.subr.mxu0 0.0
    %1320 = vmatpush1.msra.mxu0 %v1296
    %1321 = vmatprep.subr.mxu0 0.0
    %1322 = vmatpush1.msra.mxu0 %v1295
    %1323 = vmatprep.subr.mxu0 0.0
    %1324 = vmatpush1.msra.mxu0 %v1294
    %1325 = vmatprep.subr.mxu0 0.0
    %1326 = vmatpush1.msra.mxu0 %v1293
    %1327 = vmatprep.subr.mxu0 0.0
    %1328 = vmatpush1.msra.mxu0 %v1292
    %1329 = vmatprep.subr.mxu0 0.0
    %1330 = vmatpush1.msra.mxu0 %v1291
    %1331 = vmatprep.subr.mxu0 0.0
    %1332 = vmatpush2.msra.mxu0 0.0
    %1333 = vmatprep.subr.mxu0 0.0
    %1334 = vmatpush2.msra.mxu0 0.0
    %1335 = vmatprep.subr.mxu0 0.0
    %1336 = vmatpush2.msra.mxu0 0.0
    %1337 = vmatprep.subr.mxu0 0.0
    %1338 = vmatpush2.msra.mxu0 0.0
    %1339 = vmatprep.subr.mxu0 0.0
    %1340 = vmatpush2.msra.mxu0 0.0
    %1341 = vmatprep.subr.mxu0 0.0
    %1342 = vmatpush2.msra.mxu0 0.0
    %1343 = vmatprep.subr.mxu0 0.0
    %1344 = vmatpush2.msra.mxu0 0.0
    %1345 = vmatprep.subr.mxu0 0.0
    %1346 = vmatpush2.msra.mxu0 0.0
    %1347 = vmatprep.subr.mxu0 0.0
    %1348 = vmatpush2.msra.mxu0 0.0
    %1349 = vmatprep.subr.mxu0 0.0
    %1350 = vmatpush2.msra.mxu0 0.0
    %1351 = vmatprep.subr.mxu0 0.0
    %1352 = vmatpush2.msra.mxu0 0.0
    %1353 = vmatprep.subr.mxu0 0.0
    %1354 = vmatpush2.msra.mxu0 0.0
    %1355 = vmatprep.subr.mxu0 0.0
    %1356 = vmatpush2.msra.mxu0 0.0
    %1357 = vmatprep.subr.mxu0 0.0
    %1358 = vmatpush2.msra.mxu0 0.0
    %1359 = vmatprep.subr.mxu0 0.0
    %1360 = vmatpush2.msra.mxu0 0.0
    %1361 = vmatprep.subr.mxu0 0.0
    %1362 = vmatpush2.msra.mxu0 0.0
    %1363 = vmatprep.mubr.f32.mxu0 0.0
    %1364 = vmatmul.mubr.f32.gmra.mxu0 %v346
    %v1365 = vpop.f32.mrf.mxu0
    %v1366 = vadd.f32 0.0, %v1365
    %v1367 = vpop.f32.mrf.mxu0
    %1368 = vdwg.mxu0
    %v1370 = vsel %vm74, %v1366, 0
    %1372 = vmatprep.subr.mxu0 0.0
    %1373 = vmatpush1.xpose.msra.mxu0 0.0
    %1374 = vmatprep.subr.mxu0 0.0
    %1375 = vmatpush1.xpose.msra.mxu0 0.0
    %1376 = vmatprep.subr.mxu0 0.0
    %1377 = vmatpush1.xpose.msra.mxu0 0.0
    %1378 = vmatprep.subr.mxu0 0.0
    %1379 = vmatpush1.xpose.msra.mxu0 0.0
    %1380 = vmatprep.subr.mxu0 0.0
    %1381 = vmatpush1.xpose.msra.mxu0 0.0
    %1382 = vmatprep.subr.mxu0 0.0
    %1383 = vmatpush1.xpose.msra.mxu0 0.0
    %1384 = vmatprep.subr.mxu0 0.0
    %1385 = vmatpush1.xpose.msra.mxu0 0.0
    %1386 = vmatprep.subr.mxu0 0.0
    %1387 = vmatpush1.xpose.msra.mxu0 0.0
    %1388 = vmatprep.subr.mxu0 0.0
    %1389 = vmatpush1.xpose.msra.mxu0 0.0
    %1390 = vmatprep.subr.mxu0 0.0
    %1391 = vmatpush1.xpose.msra.mxu0 0.0
    %1392 = vmatprep.subr.mxu0 0.0
    %1393 = vmatpush1.xpose.msra.mxu0 0.0
    %1394 = vmatprep.subr.mxu0 0.0
    %1395 = vmatpush1.xpose.msra.mxu0 0.0
    %1396 = vmatprep.subr.mxu0 0.0
    %1397 = vmatpush1.xpose.msra.mxu0 0.0
    %1398 = vmatprep.subr.mxu0 0.0
    %1399 = vmatpush1.xpose.msra.mxu0 0.0
    %1400 = vmatprep.subr.mxu0 0.0
    %1401 = vmatpush1.xpose.msra.mxu0 0.0
    %1402 = vmatprep.subr.mxu0 0.0
    %1403 = vmatpush1.xpose.msra.mxu0 %v421
    %1404 = vmatprep.subr.mxu0 0.0
    %1405 = vmatpush2.xpose.msra.mxu0 0.0
    %1406 = vmatprep.subr.mxu0 0.0
    %1407 = vmatpush2.xpose.msra.mxu0 0.0
    %1408 = vmatprep.subr.mxu0 0.0
    %1409 = vmatpush2.xpose.msra.mxu0 0.0
    %1410 = vmatprep.subr.mxu0 0.0
    %1411 = vmatpush2.xpose.msra.mxu0 0.0
    %1412 = vmatprep.subr.mxu0 0.0
    %1413 = vmatpush2.xpose.msra.mxu0 0.0
    %1414 = vmatprep.subr.mxu0 0.0
    %1415 = vmatpush2.xpose.msra.mxu0 0.0
    %1416 = vmatprep.subr.mxu0 0.0
    %1417 = vmatpush2.xpose.msra.mxu0 0.0
    %1418 = vmatprep.subr.mxu0 0.0
    %1419 = vmatpush2.xpose.msra.mxu0 0.0
    %1420 = vmatprep.subr.mxu0 0.0
    %1421 = vmatpush2.xpose.msra.mxu0 0.0
    %1422 = vmatprep.subr.mxu0 0.0
    %1423 = vmatpush2.xpose.msra.mxu0 0.0
    %1424 = vmatprep.subr.mxu0 0.0
    %1425 = vmatpush2.xpose.msra.mxu0 0.0
    %1426 = vmatprep.subr.mxu0 0.0
    %1427 = vmatpush2.xpose.msra.mxu0 0.0
    %1428 = vmatprep.subr.mxu0 0.0
    %1429 = vmatpush2.xpose.msra.mxu0 0.0
    %1430 = vmatprep.subr.mxu0 0.0
    %1431 = vmatpush2.xpose.msra.mxu0 0.0
    %1432 = vmatprep.subr.mxu0 0.0
    %1433 = vmatpush2.xpose.msra.mxu0 0.0
    %1434 = vmatprep.subr.mxu0 0.0
    %1435 = vmatpush2.xpose.msra.mxu0 0.0
    %1436 = vmatprep.mubr.f32.mxu0 0.0
    %1437 = vmatmul.mubr.f32.gmra.mxu0 %v1370
    %v1438 = vpop.f32.mrf.mxu0
    %v1439 = vadd.f32 0.0, %v1438
    %v1440 = vpop.f32.mrf.mxu0
    %1441 = vdwg.mxu0
    %v1442 = vmul.f32 %v1439, 0.35355338
    %v1443 = vadd.f32 %v1442, %v158
    %v1444 = vsel %vm495, %v1443, -inf
    %1445 = vmax.xlane.f32.xlu0 %v1444
    %v1446 = vpop.xlane.xlu0 %1445
    %v1447 = vsub.f32 %v1443, %v1446
    %v1448 = vmul.f32 %v1447, 1.442695
    %v1449 = vpow.pop %v1448
    %v1450 = vsel %vm495, %v1449, 0.0
    %1451 = vadd.xlane.f32.xlu0 %v1450
    %v1452 = vpop.xlane.xlu0 %1451
    %v1453 = vrcp.pop %v1452
    %v1454 = vmul.f32 %v1449, %v1453
    %v1456 = vsel %vm495, %v1454, 0
    %1458 = vmatprep.subr.mxu0 0.0
    %1459 = vmatpush1.msra.mxu0 0.0
    %1460 = vmatprep.subr.mxu0 0.0
    %1461 = vmatpush1.msra.mxu0 0.0
    %1462 = vmatprep.subr.mxu0 0.0
    %1463 = vmatpush1.msra.mxu0 0.0
    %1464 = vmatprep.subr.mxu0 0.0
    %1465 = vmatpush1.msra.mxu0 0.0
    %1466 = vmatprep.subr.mxu0 0.0
    %1467 = vmatpush1.msra.mxu0 0.0
    %1468 = vmatprep.subr.mxu0 0.0
    %1469 = vmatpush1.msra.mxu0 0.0
    %1470 = vmatprep.subr.mxu0 0.0
    %1471 = vmatpush1.msra.mxu0 0.0
    %1472 = vmatprep.subr.mxu0 0.0
    %1473 = vmatpush1.msra.mxu0 0.0
    %1474 = vmatprep.subr.mxu0 0.0
    %1475 = vmatpush1.msra.mxu0 0.0
    %1476 = vmatprep.subr.mxu0 0.0
    %1477 = vmatpush1.msra.mxu0 0.0
    %1478 = vmatprep.subr.mxu0 0.0
    %1479 = vmatpush1.msra.mxu0 0.0
    %1480 = vmatprep.subr.mxu0 0.0
    %1481 = vmatpush1.msra.mxu0 0.0
    %1482 = vmatprep.subr.mxu0 0.0
    %1483 = vmatpush1.msra.mxu0 0.0
    %1484 = vmatprep.subr.mxu0 0.0
    %1485 = vmatpush1.msra.mxu0 0.0
    %1486 = vmatprep.subr.mxu0 0.0
    %1487 = vmatpush1.msra.mxu0 0.0
    %1488 = vmatprep.subr.mxu0 0.0
    %1489 = vmatpush1.msra.mxu0 %v336
    %1490 = vmatprep.subr.mxu0 0.0
    %1491 = vmatpush2.msra.mxu0 0.0
    %1492 = vmatprep.subr.mxu0 0.0
    %1493 = vmatpush2.msra.mxu0 0.0
    %1494 = vmatprep.subr.mxu0 0.0
    %1495 = vmatpush2.msra.mxu0 0.0
    %1496 = vmatprep.subr.mxu0 0.0
    %1497 = vmatpush2.msra.mxu0 0.0
    %1498 = vmatprep.subr.mxu0 0.0
    %1499 = vmatpush2.msra.mxu0 0.0
    %1500 = vmatprep.subr.mxu0 0.0
    %1501 = vmatpush2.msra.mxu0 0.0
    %1502 = vmatprep.subr.mxu0 0.0
    %1503 = vmatpush2.msra.mxu0 0.0
    %1504 = vmatprep.subr.mxu0 0.0
    %1505 = vmatpush2.msra.mxu0 0.0
    %1506 = vmatprep.subr.mxu0 0.0
    %1507 = vmatpush2.msra.mxu0 0.0
    %1508 = vmatprep.subr.mxu0 0.0
    %1509 = vmatpush2.msra.mxu0 0.0
    %1510 = vmatprep.subr.mxu0 0.0
    %1511 = vmatpush2.msra.mxu0 0.0
    %1512 = vmatprep.subr.mxu0 0.0
    %1513 = vmatpush2.msra.mxu0 0.0
    %1514 = vmatprep.subr.mxu0 0.0
    %1515 = vmatpush2.msra.mxu0 0.0
    %1516 = vmatprep.subr.mxu0 0.0
    %1517 = vmatpush2.msra.mxu0 0.0
    %1518 = vmatprep.subr.mxu0 0.0
    %1519 = vmatpush2.msra.mxu0 0.0
    %1520 = vmatprep.subr.mxu0 0.0
    %1521 = vmatpush2.msra.mxu0 0.0
    %1522 = vmatprep.mubr.f32.mxu0 0.0
    %1523 = vmatmul.mubr.f32.gmra.mxu0 %v1456
    %v1524 = vpop.f32.mrf.mxu0
    %v1525 = vadd.f32 0.0, %v1524
    %v1526 = vpop.f32.mrf.mxu0
    %1527 = vdwg.mxu0
    %s1528 = scalar_lea.vmem %s11, 96
    %v1529 = vld [vmem:[%s1528] sm:$0xff]
    %v1530 = vld [vmem:[%s1528 + $0x8] sm:$0xff]
    %v1531 = vld [vmem:[%s1528 + $0x10] sm:$0xff]
    %v1532 = vld [vmem:[%s1528 + $0x18] sm:$0xff]
    %v1534 = vsel %vm74, %v1525, 0
    %1536 = vmatprep.subr.mxu0 0.0
    %1537 = vmatpush1.msra.mxu0 0.0
    %1538 = vmatprep.subr.mxu0 0.0
    %1539 = vmatpush1.msra.mxu0 0.0
    %1540 = vmatprep.subr.mxu0 0.0
    %1541 = vmatpush1.msra.mxu0 0.0
    %1542 = vmatprep.subr.mxu0 0.0
    %1543 = vmatpush1.msra.mxu0 0.0
    %1544 = vmatprep.subr.mxu0 0.0
    %1545 = vmatpush1.msra.mxu0 0.0
    %1546 = vmatprep.subr.mxu0 0.0
    %1547 = vmatpush1.msra.mxu0 0.0
    %1548 = vmatprep.subr.mxu0 0.0
    %1549 = vmatpush1.msra.mxu0 0.0
    %1550 = vmatprep.subr.mxu0 0.0
    %1551 = vmatpush1.msra.mxu0 0.0
    %1552 = vmatprep.subr.mxu0 0.0
    %1553 = vmatpush1.msra.mxu0 0.0
    %1554 = vmatprep.subr.mxu0 0.0
    %1555 = vmatpush1.msra.mxu0 0.0
    %1556 = vmatprep.subr.mxu0 0.0
    %1557 = vmatpush1.msra.mxu0 0.0
    %1558 = vmatprep.subr.mxu0 0.0
    %1559 = vmatpush1.msra.mxu0 0.0
    %1560 = vmatprep.subr.mxu0 0.0
    %1561 = vmatpush1.msra.mxu0 %v1532
    %1562 = vmatprep.subr.mxu0 0.0
    %1563 = vmatpush1.msra.mxu0 %v1531
    %1564 = vmatprep.subr.mxu0 0.0
    %1565 = vmatpush1.msra.mxu0 %v1530
    %1566 = vmatprep.subr.mxu0 0.0
    %1567 = vmatpush1.msra.mxu0 %v1529
    %1568 = vmatprep.subr.mxu0 0.0
    %1569 = vmatpush2.msra.mxu0 0.0
    %1570 = vmatprep.subr.mxu0 0.0
    %1571 = vmatpush2.msra.mxu0 0.0
    %1572 = vmatprep.subr.mxu0 0.0
    %1573 = vmatpush2.msra.mxu0 0.0
    %1574 = vmatprep.subr.mxu0 0.0
    %1575 = vmatpush2.msra.mxu0 0.0
    %1576 = vmatprep.subr.mxu0 0.0
    %1577 = vmatpush2.msra.mxu0 0.0
    %1578 = vmatprep.subr.mxu0 0.0
    %1579 = vmatpush2.msra.mxu0 0.0
    %1580 = vmatprep.subr.mxu0 0.0
    %1581 = vmatpush2.msra.mxu0 0.0
    %1582 = vmatprep.subr.mxu0 0.0
    %1583 = vmatpush2.msra.mxu0 0.0
    %1584 = vmatprep.subr.mxu0 0.0
    %1585 = vmatpush2.msra.mxu0 0.0
    %1586 = vmatprep.subr.mxu0 0.0
    %1587 = vmatpush2.msra.mxu0 0.0
    %1588 = vmatprep.subr.mxu0 0.0
    %1589 = vmatpush2.msra.mxu0 0.0
    %1590 = vmatprep.subr.mxu0 0.0
    %1591 = vmatpush2.msra.mxu0 0.0
    %1592 = vmatprep.subr.mxu0 0.0
    %1593 = vmatpush2.msra.mxu0 0.0
    %1594 = vmatprep.subr.mxu0 0.0
    %1595 = vmatpush2.msra.mxu0 0.0
    %1596 = vmatprep.subr.mxu0 0.0
    %1597 = vmatpush2.msra.mxu0 0.0
    %1598 = vmatprep.subr.mxu0 0.0
    %1599 = vmatpush2.msra.mxu0 0.0
    %1600 = vmatprep.mubr.f32.mxu0 0.0
    %1601 = vmatmul.mubr.f32.gmra.mxu0 %v1534
    %v1602 = vpop.f32.mrf.mxu0
    %v1603 = vadd.f32 0.0, %v1602
    %v1604 = vpop.f32.mrf.mxu0
    %1605 = vdwg.mxu0
    %v1606 = vadd.f32 %v1289, %v1603
    %v1607 = vadd.f32 %v145, %v1606
    %v1608 = vld [vmem:[%s12] sm:$0x1]
    %v1609 = vmul.f32 %v1607, %v1607
    %v1610 = vsel %vm74, %v1609, 0.0
    %1611 = vadd.xlane.f32.xlu0 %v1610
    %v1612 = vpop.xlane.xlu0 %1611
    %v1613 = vmul.f32 %v1612, %v164
    %v1614 = vadd.f32 %v1613, 1e-06
    %v1615 = vrsqrt.pop %v1614
    %v1616 = vmul.f32 %v1607, %v1615
    %v1618 = vlaneseq
    %v1619 = vshrl.u32 %v1618, 7
    %v1620 = vsub.s32 0, %v1619
    %v1621 = vrot.slane %v1608, %v1620
    %v1623 = vmul.f32 %v1616, %v1621
    %v1624 = vld [vmem:[%s13] sm:$0xff]
    %v1625 = vld [vmem:[%s13 + $0x8] sm:$0xff]
    %v1626 = vld [vmem:[%s13 + $0x10] sm:$0xff]
    %v1627 = vld [vmem:[%s13 + $0x18] sm:$0xff]
    %v1629 = vsel %vm74, %v1623, 0
    %1631 = vmatprep.subr.mxu0 0.0
    %1632 = vmatpush1.msra.mxu0 0.0
    %1633 = vmatprep.subr.mxu0 0.0
    %1634 = vmatpush1.msra.mxu0 0.0
    %1635 = vmatprep.subr.mxu0 0.0
    %1636 = vmatpush1.msra.mxu0 0.0
    %1637 = vmatprep.subr.mxu0 0.0
    %1638 = vmatpush1.msra.mxu0 0.0
    %1639 = vmatprep.subr.mxu0 0.0
    %1640 = vmatpush1.msra.mxu0 0.0
    %1641 = vmatprep.subr.mxu0 0.0
    %1642 = vmatpush1.msra.mxu0 0.0
    %1643 = vmatprep.subr.mxu0 0.0
    %1644 = vmatpush1.msra.mxu0 0.0
    %1645 = vmatprep.subr.mxu0 0.0
    %1646 = vmatpush1.msra.mxu0 0.0
    %1647 = vmatprep.subr.mxu0 0.0
    %1648 = vmatpush1.msra.mxu0 0.0
    %1649 = vmatprep.subr.mxu0 0.0
    %1650 = vmatpush1.msra.mxu0 0.0
    %1651 = vmatprep.subr.mxu0 0.0
    %1652 = vmatpush1.msra.mxu0 0.0
    %1653 = vmatprep.subr.mxu0 0.0
    %1654 = vmatpush1.msra.mxu0 0.0
    %1655 = vmatprep.subr.mxu0 0.0
    %1656 = vmatpush1.msra.mxu0 %v1627
    %1657 = vmatprep.subr.mxu0 0.0
    %1658 = vmatpush1.msra.mxu0 %v1626
    %1659 = vmatprep.subr.mxu0 0.0
    %1660 = vmatpush1.msra.mxu0 %v1625
    %1661 = vmatprep.subr.mxu0 0.0
    %1662 = vmatpush1.msra.mxu0 %v1624
    %1663 = vmatprep.subr.mxu0 0.0
    %1664 = vmatpush2.msra.mxu0 0.0
    %1665 = vmatprep.subr.mxu0 0.0
    %1666 = vmatpush2.msra.mxu0 0.0
    %1667 = vmatprep.subr.mxu0 0.0
    %1668 = vmatpush2.msra.mxu0 0.0
    %1669 = vmatprep.subr.mxu0 0.0
    %1670 = vmatpush2.msra.mxu0 0.0
    %1671 = vmatprep.subr.mxu0 0.0
    %1672 = vmatpush2.msra.mxu0 0.0
    %1673 = vmatprep.subr.mxu0 0.0
    %1674 = vmatpush2.msra.mxu0 0.0
    %1675 = vmatprep.subr.mxu0 0.0
    %1676 = vmatpush2.msra.mxu0 0.0
    %1677 = vmatprep.subr.mxu0 0.0
    %1678 = vmatpush2.msra.mxu0 0.0
    %1679 = vmatprep.subr.mxu0 0.0
    %1680 = vmatpush2.msra.mxu0 0.0
    %1681 = vmatprep.subr.mxu0 0.0
    %1682 = vmatpush2.msra.mxu0 0.0
    %1683 = vmatprep.subr.mxu0 0.0
    %1684 = vmatpush2.msra.mxu0 0.0
    %1685 = vmatprep.subr.mxu0 0.0
    %1686 = vmatpush2.msra.mxu0 0.0
    %1687 = vmatprep.subr.mxu0 0.0
    %1688 = vmatpush2.msra.mxu0 0.0
    %1689 = vmatprep.subr.mxu0 0.0
    %1690 = vmatpush2.msra.mxu0 0.0
    %1691 = vmatprep.subr.mxu0 0.0
    %1692 = vmatpush2.msra.mxu0 0.0
    %1693 = vmatprep.subr.mxu0 0.0
    %1694 = vmatpush2.msra.mxu0 0.0
    %1695 = vmatprep.mubr.f32.mxu0 0.0
    %1696 = vmatmul.mubr.f32.gmra.mxu0 %v1629
    %v1697 = vpop.f32.mrf.mxu0
    %v1698 = vadd.f32 0.0, %v1697
    %v1699 = vpop.f32.mrf.mxu0
    %1700 = vdwg.mxu0
    %v1701 = vld [vmem:[%s14] sm:$0xff]
    %v1702 = vld [vmem:[%s14 + $0x8] sm:$0xff]
    %v1703 = vld [vmem:[%s14 + $0x10] sm:$0xff]
    %v1704 = vld [vmem:[%s14 + $0x18] sm:$0xff]
    %1705 = vmatprep.subr.mxu0 0.0
    %1706 = vmatpush1.msra.mxu0 0.0
    %1707 = vmatprep.subr.mxu0 0.0
    %1708 = vmatpush1.msra.mxu0 0.0
    %1709 = vmatprep.subr.mxu0 0.0
    %1710 = vmatpush1.msra.mxu0 0.0
    %1711 = vmatprep.subr.mxu0 0.0
    %1712 = vmatpush1.msra.mxu0 0.0
    %1713 = vmatprep.subr.mxu0 0.0
    %1714 = vmatpush1.msra.mxu0 0.0
    %1715 = vmatprep.subr.mxu0 0.0
    %1716 = vmatpush1.msra.mxu0 0.0
    %1717 = vmatprep.subr.mxu0 0.0
    %1718 = vmatpush1.msra.mxu0 0.0
    %1719 = vmatprep.subr.mxu0 0.0
    %1720 = vmatpush1.msra.mxu0 0.0
    %1721 = vmatprep.subr.mxu0 0.0
    %1722 = vmatpush1.msra.mxu0 0.0
    %1723 = vmatprep.subr.mxu0 0.0
    %1724 = vmatpush1.msra.mxu0 0.0
    %1725 = vmatprep.subr.mxu0 0.0
    %1726 = vmatpush1.msra.mxu0 0.0
    %1727 = vmatprep.subr.mxu0 0.0
    %1728 = vmatpush1.msra.mxu0 0.0
    %1729 = vmatprep.subr.mxu0 0.0
    %1730 = vmatpush1.msra.mxu0 %v1704
    %1731 = vmatprep.subr.mxu0 0.0
    %1732 = vmatpush1.msra.mxu0 %v1703
    %1733 = vmatprep.subr.mxu0 0.0
    %1734 = vmatpush1.msra.mxu0 %v1702
    %1735 = vmatprep.subr.mxu0 0.0
    %1736 = vmatpush1.msra.mxu0 %v1701
    %1737 = vmatprep.subr.mxu0 0.0
    %1738 = vmatpush2.msra.mxu0 0.0
    %1739 = vmatprep.subr.mxu0 0.0
    %1740 = vmatpush2.msra.mxu0 0.0
    %1741 = vmatprep.subr.mxu0 0.0
    %1742 = vmatpush2.msra.mxu0 0.0
    %1743 = vmatprep.subr.mxu0 0.0
    %1744 = vmatpush2.msra.mxu0 0.0
    %1745 = vmatprep.subr.mxu0 0.0
    %1746 = vmatpush2.msra.mxu0 0.0
    %1747 = vmatprep.subr.mxu0 0.0
    %1748 = vmatpush2.msra.mxu0 0.0
    %1749 = vmatprep.subr.mxu0 0.0
    %1750 = vmatpush2.msra.mxu0 0.0
    %1751 = vmatprep.subr.mxu0 0.0
    %1752 = vmatpush2.msra.mxu0 0.0
    %1753 = vmatprep.subr.mxu0 0.0
    %1754 = vmatpush2.msra.mxu0 0.0
    %1755 = vmatprep.subr.mxu0 0.0
    %1756 = vmatpush2.msra.mxu0 0.0
    %1757 = vmatprep.subr.mxu0 0.0
    %1758 = vmatpush2.msra.mxu0 0.0
    %1759 = vmatprep.subr.mxu0 0.0
    %1760 = vmatpush2.msra.mxu0 0.0
    %1761 = vmatprep.subr.mxu0 0.0
    %1762 = vmatpush2.msra.mxu0 0.0
    %1763 = vmatprep.subr.mxu0 0.0
    %1764 = vmatpush2.msra.mxu0 0.0
    %1765 = vmatprep.subr.mxu0 0.0
    %1766 = vmatpush2.msra.mxu0 0.0
    %1767 = vmatprep.subr.mxu0 0.0
    %1768 = vmatpush2.msra.mxu0 0.0
    %1769 = vmatprep.mubr.f32.mxu0 0.0
    %1770 = vmatmul.mubr.f32.gmra.mxu0 %v1629
    %v1771 = vpop.f32.mrf.mxu0
    %v1772 = vadd.f32 0.0, %v1771
    %v1773 = vpop.f32.mrf.mxu0
    %1774 = vdwg.mxu0
    %v1775 = vxor.u32 %v1698, 2147483648
    %v1776 = vmul.f32 %v1775, 1.442695
    %v1777 = vpow.pop %v1776
    %v1778 = vadd.f32 %v1777, 1.0
    %v1779 = vrcp.pop %v1778
    %v1780 = vmul.f32 1.0, %v1779
    %v1781 = vmul.f32 %v1698, %v1780
    %v1782 = vmul.f32 %v1781, %v1772
    %v1783 = vld [vmem:[%s15] sm:$0xff]
    %v1784 = vld [vmem:[%s15 + $0x8] sm:$0xff]
    %v1785 = vld [vmem:[%s15 + $0x10] sm:$0xff]
    %v1786 = vld [vmem:[%s15 + $0x18] sm:$0xff]
    %v1787 = vld [vmem:[%s15 + $0x20] sm:$0xff]
    %v1788 = vld [vmem:[%s15 + $0x28] sm:$0xff]
    %v1789 = vld [vmem:[%s15 + $0x30] sm:$0xff]
    %v1790 = vld [vmem:[%s15 + $0x38] sm:$0xff]
    %v1792 = vsel %vm261, %v1782, 0
    %1794 = vmatprep.subr.mxu0 0.0
    %1795 = vmatpush1.msra.mxu0 0.0
    %1796 = vmatprep.subr.mxu0 0.0
    %1797 = vmatpush1.msra.mxu0 0.0
    %1798 = vmatprep.subr.mxu0 0.0
    %1799 = vmatpush1.msra.mxu0 0.0
    %1800 = vmatprep.subr.mxu0 0.0
    %1801 = vmatpush1.msra.mxu0 0.0
    %1802 = vmatprep.subr.mxu0 0.0
    %1803 = vmatpush1.msra.mxu0 0.0
    %1804 = vmatprep.subr.mxu0 0.0
    %1805 = vmatpush1.msra.mxu0 0.0
    %1806 = vmatprep.subr.mxu0 0.0
    %1807 = vmatpush1.msra.mxu0 0.0
    %1808 = vmatprep.subr.mxu0 0.0
    %1809 = vmatpush1.msra.mxu0 0.0
    %1810 = vmatprep.subr.mxu0 0.0
    %1811 = vmatpush1.msra.mxu0 %v1790
    %1812 = vmatprep.subr.mxu0 0.0
    %1813 = vmatpush1.msra.mxu0 %v1789
    %1814 = vmatprep.subr.mxu0 0.0
    %1815 = vmatpush1.msra.mxu0 %v1788
    %1816 = vmatprep.subr.mxu0 0.0
    %1817 = vmatpush1.msra.mxu0 %v1787
    %1818 = vmatprep.subr.mxu0 0.0
    %1819 = vmatpush1.msra.mxu0 %v1786
    %1820 = vmatprep.subr.mxu0 0.0
    %1821 = vmatpush1.msra.mxu0 %v1785
    %1822 = vmatprep.subr.mxu0 0.0
    %1823 = vmatpush1.msra.mxu0 %v1784
    %1824 = vmatprep.subr.mxu0 0.0
    %1825 = vmatpush1.msra.mxu0 %v1783
    %1826 = vmatprep.subr.mxu0 0.0
    %1827 = vmatpush2.msra.mxu0 0.0
    %1828 = vmatprep.subr.mxu0 0.0
    %1829 = vmatpush2.msra.mxu0 0.0
    %1830 = vmatprep.subr.mxu0 0.0
    %1831 = vmatpush2.msra.mxu0 0.0
    %1832 = vmatprep.subr.mxu0 0.0
    %1833 = vmatpush2.msra.mxu0 0.0
    %1834 = vmatprep.subr.mxu0 0.0
    %1835 = vmatpush2.msra.mxu0 0.0
    %1836 = vmatprep.subr.mxu0 0.0
    %1837 = vmatpush2.msra.mxu0 0.0
    %1838 = vmatprep.subr.mxu0 0.0
    %1839 = vmatpush2.msra.mxu0 0.0
    %1840 = vmatprep.subr.mxu0 0.0
    %1841 = vmatpush2.msra.mxu0 0.0
    %1842 = vmatprep.subr.mxu0 0.0
    %1843 = vmatpush2.msra.mxu0 0.0
    %1844 = vmatprep.subr.mxu0 0.0
    %1845 = vmatpush2.msra.mxu0 0.0
    %1846 = vmatprep.subr.mxu0 0.0
    %1847 = vmatpush2.msra.mxu0 0.0
    %1848 = vmatprep.subr.mxu0 0.0
    %1849 = vmatpush2.msra.mxu0 0.0
    %1850 = vmatprep.subr.mxu0 0.0
    %1851 = vmatpush2.msra.mxu0 0.0
    %1852 = vmatprep.subr.mxu0 0.0
    %1853 = vmatpush2.msra.mxu0 0.0
    %1854 = vmatprep.subr.mxu0 0.0
    %1855 = vmatpush2.msra.mxu0 0.0
    %1856 = vmatprep.subr.mxu0 0.0
    %1857 = vmatpush2.msra.mxu0 0.0
    %1858 = vmatprep.mubr.f32.mxu0 0.0
    %1859 = vmatmul.mubr.f32.gmra.mxu0 %v1792
    %v1860 = vpop.f32.mrf.mxu0
    %v1861 = vadd.f32 0.0, %v1860
    %v1862 = vpop.f32.mrf.mxu0
    %1863 = vdwg.mxu0
    %v1864 = vadd.f32 %v1607, %v1861
    %s1865 = scalar_lea.vmem %s8, 1
    %v1866 = vld [vmem:[%s1865] sm:$0x1]
    %v1867 = vmul.f32 %v1864, %v1864
    %v1868 = vsel %vm74, %v1867, 0.0
    %1869 = vadd.xlane.f32.xlu0 %v1868
    %v1870 = vpop.xlane.xlu0 %1869
    %v1871 = vmul.f32 %v1870, %v164
    %v1872 = vadd.f32 %v1871, 1e-06
    %v1873 = vrsqrt.pop %v1872
    %v1874 = vmul.f32 %v1864, %v1873
    %v1876 = vlaneseq
    %v1877 = vshrl.u32 %v1876, 7
    %v1878 = vsub.s32 0, %v1877
    %v1879 = vrot.slane %v1866, %v1878
    %v1881 = vmul.f32 %v1874, %v1879
    %s1882 = scalar_lea.vmem %s9, 32
    %v1883 = vld [vmem:[%s1882] sm:$0xff]
    %v1884 = vld [vmem:[%s1882 + $0x8] sm:$0xff]
    %v1885 = vld [vmem:[%s1882 + $0x10] sm:$0xff]
    %v1886 = vld [vmem:[%s1882 + $0x18] sm:$0xff]
    %s1887 = scalar_lea.vmem %s10, 1
    %v1888 = vld [vmem:[%s1887] sm:$0x1]
    %v1890 = vlaneseq
    %v1891 = vshrl.u32 %v1890, 7
    %v1892 = vsub.s32 0, %v1891
    %v1893 = vrot.slane %v1888, %v1892
    %v1896 = vsel %vm74, %v1881, 0
    %1898 = vmatprep.subr.mxu0 0.0
    %1899 = vmatpush1.msra.mxu0 0.0
    %1900 = vmatprep.subr.mxu0 0.0
    %1901 = vmatpush1.msra.mxu0 0.0
    %1902 = vmatprep.subr.mxu0 0.0
    %1903 = vmatpush1.msra.mxu0 0.0
    %1904 = vmatprep.subr.mxu0 0.0
    %1905 = vmatpush1.msra.mxu0 0.0
    %1906 = vmatprep.subr.mxu0 0.0
    %1907 = vmatpush1.msra.mxu0 0.0
    %1908 = vmatprep.subr.mxu0 0.0
    %1909 = vmatpush1.msra.mxu0 0.0
    %1910 = vmatprep.subr.mxu0 0.0
    %1911 = vmatpush1.msra.mxu0 0.0
    %1912 = vmatprep.subr.mxu0 0.0
    %1913 = vmatpush1.msra.mxu0 0.0
    %1914 = vmatprep.subr.mxu0 0.0
    %1915 = vmatpush1.msra.mxu0 0.0
    %1916 = vmatprep.subr.mxu0 0.0
    %1917 = vmatpush1.msra.mxu0 0.0
    %1918 = vmatprep.subr.mxu0 0.0
    %1919 = vmatpush1.msra.mxu0 0.0
    %1920 = vmatprep.subr.mxu0 0.0
    %1921 = vmatpush1.msra.mxu0 0.0
    %1922 = vmatprep.subr.mxu0 0.0
    %1923 = vmatpush1.msra.mxu0 %v1886
    %1924 = vmatprep.subr.mxu0 0.0
    %1925 = vmatpush1.msra.mxu0 %v1885
    %1926 = vmatprep.subr.mxu0 0.0
    %1927 = vmatpush1.msra.mxu0 %v1884
    %1928 = vmatprep.subr.mxu0 0.0
    %1929 = vmatpush1.msra.mxu0 %v1883
    %1930 = vmatprep.subr.mxu0 0.0
    %1931 = vmatpush2.msra.mxu0 0.0
    %1932 = vmatprep.subr.mxu0 0.0
    %1933 = vmatpush2.msra.mxu0 0.0
    %1934 = vmatprep.subr.mxu0 0.0
    %1935 = vmatpush2.msra.mxu0 0.0
    %1936 = vmatprep.subr.mxu0 0.0
    %1937 = vmatpush2.msra.mxu0 0.0
    %1938 = vmatprep.subr.mxu0 0.0
    %1939 = vmatpush2.msra.mxu0 0.0
    %1940 = vmatprep.subr.mxu0 0.0
    %1941 = vmatpush2.msra.mxu0 0.0
    %1942 = vmatprep.subr.mxu0 0.0
    %1943 = vmatpush2.msra.mxu0 0.0
    %1944 = vmatprep.subr.mxu0 0.0
    %1945 = vmatpush2.msra.mxu0 0.0
    %1946 = vmatprep.subr.mxu0 0.0
    %1947 = vmatpush2.msra.mxu0 0.0
    %1948 = vmatprep.subr.mxu0 0.0
    %1949 = vmatpush2.msra.mxu0 0.0
    %1950 = vmatprep.subr.mxu0 0.0
    %1951 = vmatpush2.msra.mxu0 0.0
    %1952 = vmatprep.subr.mxu0 0.0
    %1953 = vmatpush2.msra.mxu0 0.0
    %1954 = vmatprep.subr.mxu0 0.0
    %1955 = vmatpush2.msra.mxu0 0.0
    %1956 = vmatprep.subr.mxu0 0.0
    %1957 = vmatpush2.msra.mxu0 0.0
    %1958 = vmatprep.subr.mxu0 0.0
    %1959 = vmatpush2.msra.mxu0 0.0
    %1960 = vmatprep.subr.mxu0 0.0
    %1961 = vmatpush2.msra.mxu0 0.0
    %1962 = vmatprep.mubr.f32.mxu0 0.0
    %1963 = vmatmul.mubr.f32.gmra.mxu0 %v1896
    %v1964 = vpop.f32.mrf.mxu0
    %v1965 = vadd.f32 %v1893, %v1964
    %v1966 = vpop.f32.mrf.mxu0
    %1967 = vdwg.mxu0
    %v1968 = vmul.f32 %v1965, %v148
    %v1970 = vsel %vm261, %v1965, 0
    %1972 = vmatprep.subr.mxu0 0.0
    %1973 = vmatpush1.msra.mxu0 0.0
    %1974 = vmatprep.subr.mxu0 0.0
    %1975 = vmatpush1.msra.mxu0 0.0
    %1976 = vmatprep.subr.mxu0 0.0
    %1977 = vmatpush1.msra.mxu0 0.0
    %1978 = vmatprep.subr.mxu0 0.0
    %1979 = vmatpush1.msra.mxu0 0.0
    %1980 = vmatprep.subr.mxu0 0.0
    %1981 = vmatpush1.msra.mxu0 0.0
    %1982 = vmatprep.subr.mxu0 0.0
    %1983 = vmatpush1.msra.mxu0 0.0
    %1984 = vmatprep.subr.mxu0 0.0
    %1985 = vmatpush1.msra.mxu0 0.0
    %1986 = vmatprep.subr.mxu0 0.0
    %1987 = vmatpush1.msra.mxu0 0.0
    %1988 = vmatprep.subr.mxu0 0.0
    %1989 = vmatpush1.msra.mxu0 %v157
    %1990 = vmatprep.subr.mxu0 0.0
    %1991 = vmatpush1.msra.mxu0 %v156
    %1992 = vmatprep.subr.mxu0 0.0
    %1993 = vmatpush1.msra.mxu0 %v155
    %1994 = vmatprep.subr.mxu0 0.0
    %1995 = vmatpush1.msra.mxu0 %v154
    %1996 = vmatprep.subr.mxu0 0.0
    %1997 = vmatpush1.msra.mxu0 %v153
    %1998 = vmatprep.subr.mxu0 0.0
    %1999 = vmatpush1.msra.mxu0 %v152
    %2000 = vmatprep.subr.mxu0 0.0
    %2001 = vmatpush1.msra.mxu0 %v151
    %2002 = vmatprep.subr.mxu0 0.0
    %2003 = vmatpush1.msra.mxu0 %v150
    %2004 = vmatprep.subr.mxu0 0.0
    %2005 = vmatpush2.msra.mxu0 0.0
    %2006 = vmatprep.subr.mxu0 0.0
    %2007 = vmatpush2.msra.mxu0 0.0
    %2008 = vmatprep.subr.mxu0 0.0
    %2009 = vmatpush2.msra.mxu0 0.0
    %2010 = vmatprep.subr.mxu0 0.0
    %2011 = vmatpush2.msra.mxu0 0.0
    %2012 = vmatprep.subr.mxu0 0.0
    %2013 = vmatpush2.msra.mxu0 0.0
    %2014 = vmatprep.subr.mxu0 0.0
    %2015 = vmatpush2.msra.mxu0 0.0
    %2016 = vmatprep.subr.mxu0 0.0
    %2017 = vmatpush2.msra.mxu0 0.0
    %2018 = vmatprep.subr.mxu0 0.0
    %2019 = vmatpush2.msra.mxu0 0.0
    %2020 = vmatprep.subr.mxu0 0.0
    %2021 = vmatpush2.msra.mxu0 0.0
    %2022 = vmatprep.subr.mxu0 0.0
    %2023 = vmatpush2.msra.mxu0 0.0
    %2024 = vmatprep.subr.mxu0 0.0
    %2025 = vmatpush2.msra.mxu0 0.0
    %2026 = vmatprep.subr.mxu0 0.0
    %2027 = vmatpush2.msra.mxu0 0.0
    %2028 = vmatprep.subr.mxu0 0.0
    %2029 = vmatpush2.msra.mxu0 0.0
    %2030 = vmatprep.subr.mxu0 0.0
    %2031 = vmatpush2.msra.mxu0 0.0
    %2032 = vmatprep.subr.mxu0 0.0
    %2033 = vmatpush2.msra.mxu0 0.0
    %2034 = vmatprep.subr.mxu0 0.0
    %2035 = vmatpush2.msra.mxu0 0.0
    %2036 = vmatprep.mubr.f32.mxu0 0.0
    %2037 = vmatmul.mubr.f32.gmra.mxu0 %v1970
    %v2038 = vpop.f32.mrf.mxu0
    %v2039 = vadd.f32 0.0, %v2038
    %v2040 = vpop.f32.mrf.mxu0
    %2041 = vdwg.mxu0
    %v2042 = vmul.f32 %v2039, %v149
    %v2043 = vadd.f32 %v1968, %v2042
    %v2045 = vsel %vm261, %v2043, 0
    %2047 = vmatprep.subr.mxu0 0.0
    %2048 = vmatpush1.msra.mxu0 0.0
    %2049 = vmatprep.subr.mxu0 0.0
    %2050 = vmatpush1.msra.mxu0 0.0
    %2051 = vmatprep.subr.mxu0 0.0
    %2052 = vmatpush1.msra.mxu0 0.0
    %2053 = vmatprep.subr.mxu0 0.0
    %2054 = vmatpush1.msra.mxu0 0.0
    %2055 = vmatprep.subr.mxu0 0.0
    %2056 = vmatpush1.msra.mxu0 0.0
    %2057 = vmatprep.subr.mxu0 0.0
    %2058 = vmatpush1.msra.mxu0 0.0
    %2059 = vmatprep.subr.mxu0 0.0
    %2060 = vmatpush1.msra.mxu0 0.0
    %2061 = vmatprep.subr.mxu0 0.0
    %2062 = vmatpush1.msra.mxu0 0.0
    %2063 = vmatprep.subr.mxu0 0.0
    %2064 = vmatpush1.msra.mxu0 %v344
    %2065 = vmatprep.subr.mxu0 0.0
    %2066 = vmatpush1.msra.mxu0 %v343
    %2067 = vmatprep.subr.mxu0 0.0
    %2068 = vmatpush1.msra.mxu0 %v342
    %2069 = vmatprep.subr.mxu0 0.0
    %2070 = vmatpush1.msra.mxu0 %v341
    %2071 = vmatprep.subr.mxu0 0.0
    %2072 = vmatpush1.msra.mxu0 %v340
    %2073 = vmatprep.subr.mxu0 0.0
    %2074 = vmatpush1.msra.mxu0 %v339
    %2075 = vmatprep.subr.mxu0 0.0
    %2076 = vmatpush1.msra.mxu0 %v338
    %2077 = vmatprep.subr.mxu0 0.0
    %2078 = vmatpush1.msra.mxu0 %v337
    %2079 = vmatprep.subr.mxu0 0.0
    %2080 = vmatpush2.msra.mxu0 0.0
    %2081 = vmatprep.subr.mxu0 0.0
    %2082 = vmatpush2.msra.mxu0 0.0
    %2083 = vmatprep.subr.mxu0 0.0
    %2084 = vmatpush2.msra.mxu0 0.0
    %2085 = vmatprep.subr.mxu0 0.0
    %2086 = vmatpush2.msra.mxu0 0.0
    %2087 = vmatprep.subr.mxu0 0.0
    %2088 = vmatpush2.msra.mxu0 0.0
    %2089 = vmatprep.subr.mxu0 0.0
    %2090 = vmatpush2.msra.mxu0 0.0
    %2091 = vmatprep.subr.mxu0 0.0
    %2092 = vmatpush2.msra.mxu0 0.0
    %2093 = vmatprep.subr.mxu0 0.0
    %2094 = vmatpush2.msra.mxu0 0.0
    %2095 = vmatprep.subr.mxu0 0.0
    %2096 = vmatpush2.msra.mxu0 0.0
    %2097 = vmatprep.subr.mxu0 0.0
    %2098 = vmatpush2.msra.mxu0 0.0
    %2099 = vmatprep.subr.mxu0 0.0
    %2100 = vmatpush2.msra.mxu0 0.0
    %2101 = vmatprep.subr.mxu0 0.0
    %2102 = vmatpush2.msra.mxu0 0.0
    %2103 = vmatprep.subr.mxu0 0.0
    %2104 = vmatpush2.msra.mxu0 0.0
    %2105 = vmatprep.subr.mxu0 0.0
    %2106 = vmatpush2.msra.mxu0 0.0
    %2107 = vmatprep.subr.mxu0 0.0
    %2108 = vmatpush2.msra.mxu0 0.0
    %2109 = vmatprep.subr.mxu0 0.0
    %2110 = vmatpush2.msra.mxu0 0.0
    %2111 = vmatprep.mubr.f32.mxu0 0.0
    %2112 = vmatmul.mubr.f32.gmra.mxu0 %v2045
    %v2113 = vpop.f32.mrf.mxu0
    %v2114 = vadd.f32 0.0, %v2113
    %v2115 = vpop.f32.mrf.mxu0
    %2116 = vdwg.mxu0
    %v2118 = vsel %vm74, %v2114, 0
    %v2120 = vsel %vm74, %v2043, 0
    %2122 = vmatprep.subr.mxu0 0.0
    %2123 = vmatpush1.xpose.msra.mxu0 0.0
    %2124 = vmatprep.subr.mxu0 0.0
    %2125 = vmatpush1.xpose.msra.mxu0 0.0
    %2126 = vmatprep.subr.mxu0 0.0
    %2127 = vmatpush1.xpose.msra.mxu0 0.0
    %2128 = vmatprep.subr.mxu0 0.0
    %2129 = vmatpush1.xpose.msra.mxu0 0.0
    %2130 = vmatprep.subr.mxu0 0.0
    %2131 = vmatpush1.xpose.msra.mxu0 0.0
    %2132 = vmatprep.subr.mxu0 0.0
    %2133 = vmatpush1.xpose.msra.mxu0 0.0
    %2134 = vmatprep.subr.mxu0 0.0
    %2135 = vmatpush1.xpose.msra.mxu0 0.0
    %2136 = vmatprep.subr.mxu0 0.0
    %2137 = vmatpush1.xpose.msra.mxu0 0.0
    %2138 = vmatprep.subr.mxu0 0.0
    %2139 = vmatpush1.xpose.msra.mxu0 0.0
    %2140 = vmatprep.subr.mxu0 0.0
    %2141 = vmatpush1.xpose.msra.mxu0 0.0
    %2142 = vmatprep.subr.mxu0 0.0
    %2143 = vmatpush1.xpose.msra.mxu0 0.0
    %2144 = vmatprep.subr.mxu0 0.0
    %2145 = vmatpush1.xpose.msra.mxu0 0.0
    %2146 = vmatprep.subr.mxu0 0.0
    %2147 = vmatpush1.xpose.msra.mxu0 0.0
    %2148 = vmatprep.subr.mxu0 0.0
    %2149 = vmatpush1.xpose.msra.mxu0 0.0
    %2150 = vmatprep.subr.mxu0 0.0
    %2151 = vmatpush1.xpose.msra.mxu0 0.0
    %2152 = vmatprep.subr.mxu0 0.0
    %2153 = vmatpush1.xpose.msra.mxu0 %v2120
    %2154 = vmatprep.subr.mxu0 0.0
    %2155 = vmatpush2.xpose.msra.mxu0 0.0
    %2156 = vmatprep.subr.mxu0 0.0
    %2157 = vmatpush2.xpose.msra.mxu0 0.0
    %2158 = vmatprep.subr.mxu0 0.0
    %2159 = vmatpush2.xpose.msra.mxu0 0.0
    %2160 = vmatprep.subr.mxu0 0.0
    %2161 = vmatpush2.xpose.msra.mxu0 0.0
    %2162 = vmatprep.subr.mxu0 0.0
    %2163 = vmatpush2.xpose.msra.mxu0 0.0
    %2164 = vmatprep.subr.mxu0 0.0
    %2165 = vmatpush2.xpose.msra.mxu0 0.0
    %2166 = vmatprep.subr.mxu0 0.0
    %2167 = vmatpush2.xpose.msra.mxu0 0.0
    %2168 = vmatprep.subr.mxu0 0.0
    %2169 = vmatpush2.xpose.msra.mxu0 0.0
    %2170 = vmatprep.subr.mxu0 0.0
    %2171 = vmatpush2.xpose.msra.mxu0 0.0
    %2172 = vmatprep.subr.mxu0 0.0
    %2173 = vmatpush2.xpose.msra.mxu0 0.0
    %2174 = vmatprep.subr.mxu0 0.0
    %2175 = vmatpush2.xpose.msra.mxu0 0.0
    %2176 = vmatprep.subr.mxu0 0.0
    %2177 = vmatpush2.xpose.msra.mxu0 0.0
    %2178 = vmatprep.subr.mxu0 0.0
    %2179 = vmatpush2.xpose.msra.mxu0 0.0
    %2180 = vmatprep.subr.mxu0 0.0
    %2181 = vmatpush2.xpose.msra.mxu0 0.0
    %2182 = vmatprep.subr.mxu0 0.0
    %2183 = vmatpush2.xpose.msra.mxu0 0.0
    %2184 = vmatprep.subr.mxu0 0.0
    %2185 = vmatpush2.xpose.msra.mxu0 0.0
    %2186 = vmatprep.mubr.f32.mxu0 0.0
    %2187 = vmatmul.mubr.f32.gmra.mxu0 %v2118
    %v2188 = vpop.f32.mrf.mxu0
    %v2189 = vadd.f32 0.0, %v2188
    %v2190 = vpop.f32.mrf.mxu0
    %2191 = vdwg.mxu0
    %v2192 = vmul.f32 %v2189, 0.35355338
    %v2193 = vadd.f32 %v2192, %v158
    %v2194 = vsel %vm495, %v2193, -inf
    %2195 = vmax.xlane.f32.xlu0 %v2194
    %v2196 = vpop.xlane.xlu0 %2195
    %v2197 = vsub.f32 %v2193, %v2196
    %v2198 = vmul.f32 %v2197, 1.442695
    %v2199 = vpow.pop %v2198
    %v2200 = vsel %vm495, %v2199, 0.0
    %2201 = vadd.xlane.f32.xlu0 %v2200
    %v2202 = vpop.xlane.xlu0 %2201
    %v2203 = vrcp.pop %v2202
    %v2204 = vmul.f32 %v2199, %v2203
    %v2206 = vsel %vm495, %v2204, 0
    %2208 = vmatprep.subr.mxu0 0.0
    %2209 = vmatpush1.msra.mxu0 0.0
    %2210 = vmatprep.subr.mxu0 0.0
    %2211 = vmatpush1.msra.mxu0 0.0
    %2212 = vmatprep.subr.mxu0 0.0
    %2213 = vmatpush1.msra.mxu0 0.0
    %2214 = vmatprep.subr.mxu0 0.0
    %2215 = vmatpush1.msra.mxu0 0.0
    %2216 = vmatprep.subr.mxu0 0.0
    %2217 = vmatpush1.msra.mxu0 0.0
    %2218 = vmatprep.subr.mxu0 0.0
    %2219 = vmatpush1.msra.mxu0 0.0
    %2220 = vmatprep.subr.mxu0 0.0
    %2221 = vmatpush1.msra.mxu0 0.0
    %2222 = vmatprep.subr.mxu0 0.0
    %2223 = vmatpush1.msra.mxu0 0.0
    %2224 = vmatprep.subr.mxu0 0.0
    %2225 = vmatpush1.msra.mxu0 0.0
    %2226 = vmatprep.subr.mxu0 0.0
    %2227 = vmatpush1.msra.mxu0 0.0
    %2228 = vmatprep.subr.mxu0 0.0
    %2229 = vmatpush1.msra.mxu0 0.0
    %2230 = vmatprep.subr.mxu0 0.0
    %2231 = vmatpush1.msra.mxu0 0.0
    %2232 = vmatprep.subr.mxu0 0.0
    %2233 = vmatpush1.msra.mxu0 0.0
    %2234 = vmatprep.subr.mxu0 0.0
    %2235 = vmatpush1.msra.mxu0 0.0
    %2236 = vmatprep.subr.mxu0 0.0
    %2237 = vmatpush1.msra.mxu0 0.0
    %2238 = vmatprep.subr.mxu0 0.0
    %2239 = vmatpush1.msra.mxu0 %v2043
    %2240 = vmatprep.subr.mxu0 0.0
    %2241 = vmatpush2.msra.mxu0 0.0
    %2242 = vmatprep.subr.mxu0 0.0
    %2243 = vmatpush2.msra.mxu0 0.0
    %2244 = vmatprep.subr.mxu0 0.0
    %2245 = vmatpush2.msra.mxu0 0.0
    %2246 = vmatprep.subr.mxu0 0.0
    %2247 = vmatpush2.msra.mxu0 0.0
    %2248 = vmatprep.subr.mxu0 0.0
    %2249 = vmatpush2.msra.mxu0 0.0
    %2250 = vmatprep.subr.mxu0 0.0
    %2251 = vmatpush2.msra.mxu0 0.0
    %2252 = vmatprep.subr.mxu0 0.0
    %2253 = vmatpush2.msra.mxu0 0.0
    %2254 = vmatprep.subr.mxu0 0.0
    %2255 = vmatpush2.msra.mxu0 0.0
    %2256 = vmatprep.subr.mxu0 0.0
    %2257 = vmatpush2.msra.mxu0 0.0
    %2258 = vmatprep.subr.mxu0 0.0
    %2259 = vmatpush2.msra.mxu0 0.0
    %2260 = vmatprep.subr.mxu0 0.0
    %2261 = vmatpush2.msra.mxu0 0.0
    %2262 = vmatprep.subr.mxu0 0.0
    %2263 = vmatpush2.msra.mxu0 0.0
    %2264 = vmatprep.subr.mxu0 0.0
    %2265 = vmatpush2.msra.mxu0 0.0
    %2266 = vmatprep.subr.mxu0 0.0
    %2267 = vmatpush2.msra.mxu0 0.0
    %2268 = vmatprep.subr.mxu0 0.0
    %2269 = vmatpush2.msra.mxu0 0.0
    %2270 = vmatprep.subr.mxu0 0.0
    %2271 = vmatpush2.msra.mxu0 0.0
    %2272 = vmatprep.mubr.f32.mxu0 0.0
    %2273 = vmatmul.mubr.f32.gmra.mxu0 %v2206
    %v2274 = vpop.f32.mrf.mxu0
    %v2275 = vadd.f32 0.0, %v2274
    %v2276 = vpop.f32.mrf.mxu0
    %2277 = vdwg.mxu0
    %s2278 = scalar_lea.vmem %s11, 128
    %v2279 = vld [vmem:[%s2278] sm:$0xff]
    %v2280 = vld [vmem:[%s2278 + $0x8] sm:$0xff]
    %v2281 = vld [vmem:[%s2278 + $0x10] sm:$0xff]
    %v2282 = vld [vmem:[%s2278 + $0x18] sm:$0xff]
    %2283 = vmatprep.subr.mxu0 0.0
    %2284 = vmatpush1.msra.mxu0 0.0
    %2285 = vmatprep.subr.mxu0 0.0
    %2286 = vmatpush1.msra.mxu0 0.0
    %2287 = vmatprep.subr.mxu0 0.0
    %2288 = vmatpush1.msra.mxu0 0.0
    %2289 = vmatprep.subr.mxu0 0.0
    %2290 = vmatpush1.msra.mxu0 0.0
    %2291 = vmatprep.subr.mxu0 0.0
    %2292 = vmatpush1.msra.mxu0 0.0
    %2293 = vmatprep.subr.mxu0 0.0
    %2294 = vmatpush1.msra.mxu0 0.0
    %2295 = vmatprep.subr.mxu0 0.0
    %2296 = vmatpush1.msra.mxu0 0.0
    %2297 = vmatprep.subr.mxu0 0.0
    %2298 = vmatpush1.msra.mxu0 0.0
    %2299 = vmatprep.subr.mxu0 0.0
    %2300 = vmatpush1.msra.mxu0 %v592
    %2301 = vmatprep.subr.mxu0 0.0
    %2302 = vmatpush1.msra.mxu0 %v591
    %2303 = vmatprep.subr.mxu0 0.0
    %2304 = vmatpush1.msra.mxu0 %v590
    %2305 = vmatprep.subr.mxu0 0.0
    %2306 = vmatpush1.msra.mxu0 %v589
    %2307 = vmatprep.subr.mxu0 0.0
    %2308 = vmatpush1.msra.mxu0 %v588
    %2309 = vmatprep.subr.mxu0 0.0
    %2310 = vmatpush1.msra.mxu0 %v587
    %2311 = vmatprep.subr.mxu0 0.0
    %2312 = vmatpush1.msra.mxu0 %v586
    %2313 = vmatprep.subr.mxu0 0.0
    %2314 = vmatpush1.msra.mxu0 %v585
    %2315 = vmatprep.subr.mxu0 0.0
    %2316 = vmatpush2.msra.mxu0 0.0
    %2317 = vmatprep.subr.mxu0 0.0
    %2318 = vmatpush2.msra.mxu0 0.0
    %2319 = vmatprep.subr.mxu0 0.0
    %2320 = vmatpush2.msra.mxu0 0.0
    %2321 = vmatprep.subr.mxu0 0.0
    %2322 = vmatpush2.msra.mxu0 0.0
    %2323 = vmatprep.subr.mxu0 0.0
    %2324 = vmatpush2.msra.mxu0 0.0
    %2325 = vmatprep.subr.mxu0 0.0
    %2326 = vmatpush2.msra.mxu0 0.0
    %2327 = vmatprep.subr.mxu0 0.0
    %2328 = vmatpush2.msra.mxu0 0.0
    %2329 = vmatprep.subr.mxu0 0.0
    %2330 = vmatpush2.msra.mxu0 0.0
    %2331 = vmatprep.subr.mxu0 0.0
    %2332 = vmatpush2.msra.mxu0 0.0
    %2333 = vmatprep.subr.mxu0 0.0
    %2334 = vmatpush2.msra.mxu0 0.0
    %2335 = vmatprep.subr.mxu0 0.0
    %2336 = vmatpush2.msra.mxu0 0.0
    %2337 = vmatprep.subr.mxu0 0.0
    %2338 = vmatpush2.msra.mxu0 0.0
    %2339 = vmatprep.subr.mxu0 0.0
    %2340 = vmatpush2.msra.mxu0 0.0
    %2341 = vmatprep.subr.mxu0 0.0
    %2342 = vmatpush2.msra.mxu0 0.0
    %2343 = vmatprep.subr.mxu0 0.0
    %2344 = vmatpush2.msra.mxu0 0.0
    %2345 = vmatprep.subr.mxu0 0.0
    %2346 = vmatpush2.msra.mxu0 0.0
    %2347 = vmatprep.mubr.f32.mxu0 0.0
    %2348 = vmatmul.mubr.f32.gmra.mxu0 %v2045
    %v2349 = vpop.f32.mrf.mxu0
    %v2350 = vadd.f32 0.0, %v2349
    %v2351 = vpop.f32.mrf.mxu0
    %2352 = vdwg.mxu0
    %v2354 = vsel %vm74, %v2350, 0
    %2356 = vmatprep.subr.mxu0 0.0
    %2357 = vmatpush1.xpose.msra.mxu0 0.0
    %2358 = vmatprep.subr.mxu0 0.0
    %2359 = vmatpush1.xpose.msra.mxu0 0.0
    %2360 = vmatprep.subr.mxu0 0.0
    %2361 = vmatpush1.xpose.msra.mxu0 0.0
    %2362 = vmatprep.subr.mxu0 0.0
    %2363 = vmatpush1.xpose.msra.mxu0 0.0
    %2364 = vmatprep.subr.mxu0 0.0
    %2365 = vmatpush1.xpose.msra.mxu0 0.0
    %2366 = vmatprep.subr.mxu0 0.0
    %2367 = vmatpush1.xpose.msra.mxu0 0.0
    %2368 = vmatprep.subr.mxu0 0.0
    %2369 = vmatpush1.xpose.msra.mxu0 0.0
    %2370 = vmatprep.subr.mxu0 0.0
    %2371 = vmatpush1.xpose.msra.mxu0 0.0
    %2372 = vmatprep.subr.mxu0 0.0
    %2373 = vmatpush1.xpose.msra.mxu0 0.0
    %2374 = vmatprep.subr.mxu0 0.0
    %2375 = vmatpush1.xpose.msra.mxu0 0.0
    %2376 = vmatprep.subr.mxu0 0.0
    %2377 = vmatpush1.xpose.msra.mxu0 0.0
    %2378 = vmatprep.subr.mxu0 0.0
    %2379 = vmatpush1.xpose.msra.mxu0 0.0
    %2380 = vmatprep.subr.mxu0 0.0
    %2381 = vmatpush1.xpose.msra.mxu0 0.0
    %2382 = vmatprep.subr.mxu0 0.0
    %2383 = vmatpush1.xpose.msra.mxu0 0.0
    %2384 = vmatprep.subr.mxu0 0.0
    %2385 = vmatpush1.xpose.msra.mxu0 0.0
    %2386 = vmatprep.subr.mxu0 0.0
    %2387 = vmatpush1.xpose.msra.mxu0 %v2120
    %2388 = vmatprep.subr.mxu0 0.0
    %2389 = vmatpush2.xpose.msra.mxu0 0.0
    %2390 = vmatprep.subr.mxu0 0.0
    %2391 = vmatpush2.xpose.msra.mxu0 0.0
    %2392 = vmatprep.subr.mxu0 0.0
    %2393 = vmatpush2.xpose.msra.mxu0 0.0
    %2394 = vmatprep.subr.mxu0 0.0
    %2395 = vmatpush2.xpose.msra.mxu0 0.0
    %2396 = vmatprep.subr.mxu0 0.0
    %2397 = vmatpush2.xpose.msra.mxu0 0.0
    %2398 = vmatprep.subr.mxu0 0.0
    %2399 = vmatpush2.xpose.msra.mxu0 0.0
    %2400 = vmatprep.subr.mxu0 0.0
    %2401 = vmatpush2.xpose.msra.mxu0 0.0
    %2402 = vmatprep.subr.mxu0 0.0
    %2403 = vmatpush2.xpose.msra.mxu0 0.0
    %2404 = vmatprep.subr.mxu0 0.0
    %2405 = vmatpush2.xpose.msra.mxu0 0.0
    %2406 = vmatprep.subr.mxu0 0.0
    %2407 = vmatpush2.xpose.msra.mxu0 0.0
    %2408 = vmatprep.subr.mxu0 0.0
    %2409 = vmatpush2.xpose.msra.mxu0 0.0
    %2410 = vmatprep.subr.mxu0 0.0
    %2411 = vmatpush2.xpose.msra.mxu0 0.0
    %2412 = vmatprep.subr.mxu0 0.0
    %2413 = vmatpush2.xpose.msra.mxu0 0.0
    %2414 = vmatprep.subr.mxu0 0.0
    %2415 = vmatpush2.xpose.msra.mxu0 0.0
    %2416 = vmatprep.subr.mxu0 0.0
    %2417 = vmatpush2.xpose.msra.mxu0 0.0
    %2418 = vmatprep.subr.mxu0 0.0
    %2419 = vmatpush2.xpose.msra.mxu0 0.0
    %2420 = vmatprep.mubr.f32.mxu0 0.0
    %2421 = vmatmul.mubr.f32.gmra.mxu0 %v2354
    %v2422 = vpop.f32.mrf.mxu0
    %v2423 = vadd.f32 0.0, %v2422
    %v2424 = vpop.f32.mrf.mxu0
    %2425 = vdwg.mxu0
    %v2426 = vmul.f32 %v2423, 0.35355338
    %v2427 = vadd.f32 %v2426, %v158
    %v2428 = vsel %vm495, %v2427, -inf
    %2429 = vmax.xlane.f32.xlu0 %v2428
    %v2430 = vpop.xlane.xlu0 %2429
    %v2431 = vsub.f32 %v2427, %v2430
    %v2432 = vmul.f32 %v2431, 1.442695
    %v2433 = vpow.pop %v2432
    %v2434 = vsel %vm495, %v2433, 0.0
    %2435 = vadd.xlane.f32.xlu0 %v2434
    %v2436 = vpop.xlane.xlu0 %2435
    %v2437 = vrcp.pop %v2436
    %v2438 = vmul.f32 %v2433, %v2437
    %v2440 = vsel %vm495, %v2438, 0
    %2442 = vmatprep.subr.mxu0 0.0
    %2443 = vmatpush1.msra.mxu0 0.0
    %2444 = vmatprep.subr.mxu0 0.0
    %2445 = vmatpush1.msra.mxu0 0.0
    %2446 = vmatprep.subr.mxu0 0.0
    %2447 = vmatpush1.msra.mxu0 0.0
    %2448 = vmatprep.subr.mxu0 0.0
    %2449 = vmatpush1.msra.mxu0 0.0
    %2450 = vmatprep.subr.mxu0 0.0
    %2451 = vmatpush1.msra.mxu0 0.0
    %2452 = vmatprep.subr.mxu0 0.0
    %2453 = vmatpush1.msra.mxu0 0.0
    %2454 = vmatprep.subr.mxu0 0.0
    %2455 = vmatpush1.msra.mxu0 0.0
    %2456 = vmatprep.subr.mxu0 0.0
    %2457 = vmatpush1.msra.mxu0 0.0
    %2458 = vmatprep.subr.mxu0 0.0
    %2459 = vmatpush1.msra.mxu0 0.0
    %2460 = vmatprep.subr.mxu0 0.0
    %2461 = vmatpush1.msra.mxu0 0.0
    %2462 = vmatprep.subr.mxu0 0.0
    %2463 = vmatpush1.msra.mxu0 0.0
    %2464 = vmatprep.subr.mxu0 0.0
    %2465 = vmatpush1.msra.mxu0 0.0
    %2466 = vmatprep.subr.mxu0 0.0
    %2467 = vmatpush1.msra.mxu0 0.0
    %2468 = vmatprep.subr.mxu0 0.0
    %2469 = vmatpush1.msra.mxu0 0.0
    %2470 = vmatprep.subr.mxu0 0.0
    %2471 = vmatpush1.msra.mxu0 0.0
    %2472 = vmatprep.subr.mxu0 0.0
    %2473 = vmatpush1.msra.mxu0 %v2043
    %2474 = vmatprep.subr.mxu0 0.0
    %2475 = vmatpush2.msra.mxu0 0.0
    %2476 = vmatprep.subr.mxu0 0.0
    %2477 = vmatpush2.msra.mxu0 0.0
    %2478 = vmatprep.subr.mxu0 0.0
    %2479 = vmatpush2.msra.mxu0 0.0
    %2480 = vmatprep.subr.mxu0 0.0
    %2481 = vmatpush2.msra.mxu0 0.0
    %2482 = vmatprep.subr.mxu0 0.0
    %2483 = vmatpush2.msra.mxu0 0.0
    %2484 = vmatprep.subr.mxu0 0.0
    %2485 = vmatpush2.msra.mxu0 0.0
    %2486 = vmatprep.subr.mxu0 0.0
    %2487 = vmatpush2.msra.mxu0 0.0
    %2488 = vmatprep.subr.mxu0 0.0
    %2489 = vmatpush2.msra.mxu0 0.0
    %2490 = vmatprep.subr.mxu0 0.0
    %2491 = vmatpush2.msra.mxu0 0.0
    %2492 = vmatprep.subr.mxu0 0.0
    %2493 = vmatpush2.msra.mxu0 0.0
    %2494 = vmatprep.subr.mxu0 0.0
    %2495 = vmatpush2.msra.mxu0 0.0
    %2496 = vmatprep.subr.mxu0 0.0
    %2497 = vmatpush2.msra.mxu0 0.0
    %2498 = vmatprep.subr.mxu0 0.0
    %2499 = vmatpush2.msra.mxu0 0.0
    %2500 = vmatprep.subr.mxu0 0.0
    %2501 = vmatpush2.msra.mxu0 0.0
    %2502 = vmatprep.subr.mxu0 0.0
    %2503 = vmatpush2.msra.mxu0 0.0
    %2504 = vmatprep.subr.mxu0 0.0
    %2505 = vmatpush2.msra.mxu0 0.0
    %2506 = vmatprep.mubr.f32.mxu0 0.0
    %2507 = vmatmul.mubr.f32.gmra.mxu0 %v2440
    %v2508 = vpop.f32.mrf.mxu0
    %v2509 = vadd.f32 0.0, %v2508
    %v2510 = vpop.f32.mrf.mxu0
    %2511 = vdwg.mxu0
    %s2512 = scalar_lea.vmem %s11, 160
    %v2513 = vld [vmem:[%s2512] sm:$0xff]
    %v2514 = vld [vmem:[%s2512 + $0x8] sm:$0xff]
    %v2515 = vld [vmem:[%s2512 + $0x10] sm:$0xff]
    %v2516 = vld [vmem:[%s2512 + $0x18] sm:$0xff]
    %v2518 = vsel %vm74, %v2509, 0
    %2520 = vmatprep.subr.mxu0 0.0
    %2521 = vmatpush1.msra.mxu0 0.0
    %2522 = vmatprep.subr.mxu0 0.0
    %2523 = vmatpush1.msra.mxu0 0.0
    %2524 = vmatprep.subr.mxu0 0.0
    %2525 = vmatpush1.msra.mxu0 0.0
    %2526 = vmatprep.subr.mxu0 0.0
    %2527 = vmatpush1.msra.mxu0 0.0
    %2528 = vmatprep.subr.mxu0 0.0
    %2529 = vmatpush1.msra.mxu0 0.0
    %2530 = vmatprep.subr.mxu0 0.0
    %2531 = vmatpush1.msra.mxu0 0.0
    %2532 = vmatprep.subr.mxu0 0.0
    %2533 = vmatpush1.msra.mxu0 0.0
    %2534 = vmatprep.subr.mxu0 0.0
    %2535 = vmatpush1.msra.mxu0 0.0
    %2536 = vmatprep.subr.mxu0 0.0
    %2537 = vmatpush1.msra.mxu0 0.0
    %2538 = vmatprep.subr.mxu0 0.0
    %2539 = vmatpush1.msra.mxu0 0.0
    %2540 = vmatprep.subr.mxu0 0.0
    %2541 = vmatpush1.msra.mxu0 0.0
    %2542 = vmatprep.subr.mxu0 0.0
    %2543 = vmatpush1.msra.mxu0 0.0
    %2544 = vmatprep.subr.mxu0 0.0
    %2545 = vmatpush1.msra.mxu0 %v2516
    %2546 = vmatprep.subr.mxu0 0.0
    %2547 = vmatpush1.msra.mxu0 %v2515
    %2548 = vmatprep.subr.mxu0 0.0
    %2549 = vmatpush1.msra.mxu0 %v2514
    %2550 = vmatprep.subr.mxu0 0.0
    %2551 = vmatpush1.msra.mxu0 %v2513
    %2552 = vmatprep.subr.mxu0 0.0
    %2553 = vmatpush2.msra.mxu0 0.0
    %2554 = vmatprep.subr.mxu0 0.0
    %2555 = vmatpush2.msra.mxu0 0.0
    %2556 = vmatprep.subr.mxu0 0.0
    %2557 = vmatpush2.msra.mxu0 0.0
    %2558 = vmatprep.subr.mxu0 0.0
    %2559 = vmatpush2.msra.mxu0 0.0
    %2560 = vmatprep.subr.mxu0 0.0
    %2561 = vmatpush2.msra.mxu0 0.0
    %2562 = vmatprep.subr.mxu0 0.0
    %2563 = vmatpush2.msra.mxu0 0.0
    %2564 = vmatprep.subr.mxu0 0.0
    %2565 = vmatpush2.msra.mxu0 0.0
    %2566 = vmatprep.subr.mxu0 0.0
    %2567 = vmatpush2.msra.mxu0 0.0
    %2568 = vmatprep.subr.mxu0 0.0
    %2569 = vmatpush2.msra.mxu0 0.0
    %2570 = vmatprep.subr.mxu0 0.0
    %2571 = vmatpush2.msra.mxu0 0.0
    %2572 = vmatprep.subr.mxu0 0.0
    %2573 = vmatpush2.msra.mxu0 0.0
    %2574 = vmatprep.subr.mxu0 0.0
    %2575 = vmatpush2.msra.mxu0 0.0
    %2576 = vmatprep.subr.mxu0 0.0
    %2577 = vmatpush2.msra.mxu0 0.0
    %2578 = vmatprep.subr.mxu0 0.0
    %2579 = vmatpush2.msra.mxu0 0.0
    %2580 = vmatprep.subr.mxu0 0.0
    %2581 = vmatpush2.msra.mxu0 0.0
    %2582 = vmatprep.subr.mxu0 0.0
    %2583 = vmatpush2.msra.mxu0 0.0
    %2584 = vmatprep.mubr.f32.mxu0 0.0
    %2585 = vmatmul.mubr.f32.gmra.mxu0 %v2518
    %v2586 = vpop.f32.mrf.mxu0
    %v2587 = vadd.f32 0.0, %v2586
    %v2588 = vpop.f32.mrf.mxu0
    %2589 = vdwg.mxu0
    %v2591 = vsel %vm74, %v2275, 0
    %2593 = vmatprep.subr.mxu0 0.0
    %2594 = vmatpush1.msra.mxu0 0.0
    %2595 = vmatprep.subr.mxu0 0.0
    %2596 = vmatpush1.msra.mxu0 0.0
    %2597 = vmatprep.subr.mxu0 0.0
    %2598 = vmatpush1.msra.mxu0 0.0
    %2599 = vmatprep.subr.mxu0 0.0
    %2600 = vmatpush1.msra.mxu0 0.0
    %2601 = vmatprep.subr.mxu0 0.0
    %2602 = vmatpush1.msra.mxu0 0.0
    %2603 = vmatprep.subr.mxu0 0.0
    %2604 = vmatpush1.msra.mxu0 0.0
    %2605 = vmatprep.subr.mxu0 0.0
    %2606 = vmatpush1.msra.mxu0 0.0
    %2607 = vmatprep.subr.mxu0 0.0
    %2608 = vmatpush1.msra.mxu0 0.0
    %2609 = vmatprep.subr.mxu0 0.0
    %2610 = vmatpush1.msra.mxu0 0.0
    %2611 = vmatprep.subr.mxu0 0.0
    %2612 = vmatpush1.msra.mxu0 0.0
    %2613 = vmatprep.subr.mxu0 0.0
    %2614 = vmatpush1.msra.mxu0 0.0
    %2615 = vmatprep.subr.mxu0 0.0
    %2616 = vmatpush1.msra.mxu0 0.0
    %2617 = vmatprep.subr.mxu0 0.0
    %2618 = vmatpush1.msra.mxu0 %v2282
    %2619 = vmatprep.subr.mxu0 0.0
    %2620 = vmatpush1.msra.mxu0 %v2281
    %2621 = vmatprep.subr.mxu0 0.0
    %2622 = vmatpush1.msra.mxu0 %v2280
    %2623 = vmatprep.subr.mxu0 0.0
    %2624 = vmatpush1.msra.mxu0 %v2279
    %2625 = vmatprep.subr.mxu0 0.0
    %2626 = vmatpush2.msra.mxu0 0.0
    %2627 = vmatprep.subr.mxu0 0.0
    %2628 = vmatpush2.msra.mxu0 0.0
    %2629 = vmatprep.subr.mxu0 0.0
    %2630 = vmatpush2.msra.mxu0 0.0
    %2631 = vmatprep.subr.mxu0 0.0
    %2632 = vmatpush2.msra.mxu0 0.0
    %2633 = vmatprep.subr.mxu0 0.0
    %2634 = vmatpush2.msra.mxu0 0.0
    %2635 = vmatprep.subr.mxu0 0.0
    %2636 = vmatpush2.msra.mxu0 0.0
    %2637 = vmatprep.subr.mxu0 0.0
    %2638 = vmatpush2.msra.mxu0 0.0
    %2639 = vmatprep.subr.mxu0 0.0
    %2640 = vmatpush2.msra.mxu0 0.0
    %2641 = vmatprep.subr.mxu0 0.0
    %2642 = vmatpush2.msra.mxu0 0.0
    %2643 = vmatprep.subr.mxu0 0.0
    %2644 = vmatpush2.msra.mxu0 0.0
    %2645 = vmatprep.subr.mxu0 0.0
    %2646 = vmatpush2.msra.mxu0 0.0
    %2647 = vmatprep.subr.mxu0 0.0
    %2648 = vmatpush2.msra.mxu0 0.0
    %2649 = vmatprep.subr.mxu0 0.0
    %2650 = vmatpush2.msra.mxu0 0.0
    %2651 = vmatprep.subr.mxu0 0.0
    %2652 = vmatpush2.msra.mxu0 0.0
    %2653 = vmatprep.subr.mxu0 0.0
    %2654 = vmatpush2.msra.mxu0 0.0
    %2655 = vmatprep.subr.mxu0 0.0
    %2656 = vmatpush2.msra.mxu0 0.0
    %2657 = vmatprep.mubr.f32.mxu0 0.0
    %2658 = vmatmul.mubr.f32.gmra.mxu0 %v2591
    %v2659 = vpop.f32.mrf.mxu0
    %v2660 = vadd.f32 %v2587, %v2659
    %v2661 = vpop.f32.mrf.mxu0
    %2662 = vdwg.mxu0
    %2663 = vmatprep.subr.mxu0 0.0
    %2664 = vmatpush1.msra.mxu0 0.0
    %2665 = vmatprep.subr.mxu0 0.0
    %2666 = vmatpush1.msra.mxu0 0.0
    %2667 = vmatprep.subr.mxu0 0.0
    %2668 = vmatpush1.msra.mxu0 0.0
    %2669 = vmatprep.subr.mxu0 0.0
    %2670 = vmatpush1.msra.mxu0 0.0
    %2671 = vmatprep.subr.mxu0 0.0
    %2672 = vmatpush1.msra.mxu0 0.0
    %2673 = vmatprep.subr.mxu0 0.0
    %2674 = vmatpush1.msra.mxu0 0.0
    %2675 = vmatprep.subr.mxu0 0.0
    %2676 = vmatpush1.msra.mxu0 0.0
    %2677 = vmatprep.subr.mxu0 0.0
    %2678 = vmatpush1.msra.mxu0 0.0
    %2679 = vmatprep.subr.mxu0 0.0
    %2680 = vmatpush1.msra.mxu0 %v981
    %2681 = vmatprep.subr.mxu0 0.0
    %2682 = vmatpush1.msra.mxu0 %v980
    %2683 = vmatprep.subr.mxu0 0.0
    %2684 = vmatpush1.msra.mxu0 %v979
    %2685 = vmatprep.subr.mxu0 0.0
    %2686 = vmatpush1.msra.mxu0 %v978
    %2687 = vmatprep.subr.mxu0 0.0
    %2688 = vmatpush1.msra.mxu0 %v977
    %2689 = vmatprep.subr.mxu0 0.0
    %2690 = vmatpush1.msra.mxu0 %v976
    %2691 = vmatprep.subr.mxu0 0.0
    %2692 = vmatpush1.msra.mxu0 %v975
    %2693 = vmatprep.subr.mxu0 0.0
    %2694 = vmatpush1.msra.mxu0 %v974
    %2695 = vmatprep.subr.mxu0 0.0
    %2696 = vmatpush2.msra.mxu0 0.0
    %2697 = vmatprep.subr.mxu0 0.0
    %2698 = vmatpush2.msra.mxu0 0.0
    %2699 = vmatprep.subr.mxu0 0.0
    %2700 = vmatpush2.msra.mxu0 0.0
    %2701 = vmatprep.subr.mxu0 0.0
    %2702 = vmatpush2.msra.mxu0 0.0
    %2703 = vmatprep.subr.mxu0 0.0
    %2704 = vmatpush2.msra.mxu0 0.0
    %2705 = vmatprep.subr.mxu0 0.0
    %2706 = vmatpush2.msra.mxu0 0.0
    %2707 = vmatprep.subr.mxu0 0.0
    %2708 = vmatpush2.msra.mxu0 0.0
    %2709 = vmatprep.subr.mxu0 0.0
    %2710 = vmatpush2.msra.mxu0 0.0
    %2711 = vmatprep.subr.mxu0 0.0
    %2712 = vmatpush2.msra.mxu0 0.0
    %2713 = vmatprep.subr.mxu0 0.0
    %2714 = vmatpush2.msra.mxu0 0.0
    %2715 = vmatprep.subr.mxu0 0.0
    %2716 = vmatpush2.msra.mxu0 0.0
    %2717 = vmatprep.subr.mxu0 0.0
    %2718 = vmatpush2.msra.mxu0 0.0
    %2719 = vmatprep.subr.mxu0 0.0
    %2720 = vmatpush2.msra.mxu0 0.0
    %2721 = vmatprep.subr.mxu0 0.0
    %2722 = vmatpush2.msra.mxu0 0.0
    %2723 = vmatprep.subr.mxu0 0.0
    %2724 = vmatpush2.msra.mxu0 0.0
    %2725 = vmatprep.subr.mxu0 0.0
    %2726 = vmatpush2.msra.mxu0 0.0
    %2727 = vmatprep.mubr.f32.mxu0 0.0
    %2728 = vmatmul.mubr.f32.gmra.mxu0 %v2045
    %v2729 = vpop.f32.mrf.mxu0
    %v2730 = vadd.f32 0.0, %v2729
    %v2731 = vpop.f32.mrf.mxu0
    %2732 = vdwg.mxu0
    %v2734 = vsel %vm74, %v2730, 0
    %2736 = vmatprep.subr.mxu0 0.0
    %2737 = vmatpush1.xpose.msra.mxu0 0.0
    %2738 = vmatprep.subr.mxu0 0.0
    %2739 = vmatpush1.xpose.msra.mxu0 0.0
    %2740 = vmatprep.subr.mxu0 0.0
    %2741 = vmatpush1.xpose.msra.mxu0 0.0
    %2742 = vmatprep.subr.mxu0 0.0
    %2743 = vmatpush1.xpose.msra.mxu0 0.0
    %2744 = vmatprep.subr.mxu0 0.0
    %2745 = vmatpush1.xpose.msra.mxu0 0.0
    %2746 = vmatprep.subr.mxu0 0.0
    %2747 = vmatpush1.xpose.msra.mxu0 0.0
    %2748 = vmatprep.subr.mxu0 0.0
    %2749 = vmatpush1.xpose.msra.mxu0 0.0
    %2750 = vmatprep.subr.mxu0 0.0
    %2751 = vmatpush1.xpose.msra.mxu0 0.0
    %2752 = vmatprep.subr.mxu0 0.0
    %2753 = vmatpush1.xpose.msra.mxu0 0.0
    %2754 = vmatprep.subr.mxu0 0.0
    %2755 = vmatpush1.xpose.msra.mxu0 0.0
    %2756 = vmatprep.subr.mxu0 0.0
    %2757 = vmatpush1.xpose.msra.mxu0 0.0
    %2758 = vmatprep.subr.mxu0 0.0
    %2759 = vmatpush1.xpose.msra.mxu0 0.0
    %2760 = vmatprep.subr.mxu0 0.0
    %2761 = vmatpush1.xpose.msra.mxu0 0.0
    %2762 = vmatprep.subr.mxu0 0.0
    %2763 = vmatpush1.xpose.msra.mxu0 0.0
    %2764 = vmatprep.subr.mxu0 0.0
    %2765 = vmatpush1.xpose.msra.mxu0 0.0
    %2766 = vmatprep.subr.mxu0 0.0
    %2767 = vmatpush1.xpose.msra.mxu0 %v2120
    %2768 = vmatprep.subr.mxu0 0.0
    %2769 = vmatpush2.xpose.msra.mxu0 0.0
    %2770 = vmatprep.subr.mxu0 0.0
    %2771 = vmatpush2.xpose.msra.mxu0 0.0
    %2772 = vmatprep.subr.mxu0 0.0
    %2773 = vmatpush2.xpose.msra.mxu0 0.0
    %2774 = vmatprep.subr.mxu0 0.0
    %2775 = vmatpush2.xpose.msra.mxu0 0.0
    %2776 = vmatprep.subr.mxu0 0.0
    %2777 = vmatpush2.xpose.msra.mxu0 0.0
    %2778 = vmatprep.subr.mxu0 0.0
    %2779 = vmatpush2.xpose.msra.mxu0 0.0
    %2780 = vmatprep.subr.mxu0 0.0
    %2781 = vmatpush2.xpose.msra.mxu0 0.0
    %2782 = vmatprep.subr.mxu0 0.0
    %2783 = vmatpush2.xpose.msra.mxu0 0.0
    %2784 = vmatprep.subr.mxu0 0.0
    %2785 = vmatpush2.xpose.msra.mxu0 0.0
    %2786 = vmatprep.subr.mxu0 0.0
    %2787 = vmatpush2.xpose.msra.mxu0 0.0
    %2788 = vmatprep.subr.mxu0 0.0
    %2789 = vmatpush2.xpose.msra.mxu0 0.0
    %2790 = vmatprep.subr.mxu0 0.0
    %2791 = vmatpush2.xpose.msra.mxu0 0.0
    %2792 = vmatprep.subr.mxu0 0.0
    %2793 = vmatpush2.xpose.msra.mxu0 0.0
    %2794 = vmatprep.subr.mxu0 0.0
    %2795 = vmatpush2.xpose.msra.mxu0 0.0
    %2796 = vmatprep.subr.mxu0 0.0
    %2797 = vmatpush2.xpose.msra.mxu0 0.0
    %2798 = vmatprep.subr.mxu0 0.0
    %2799 = vmatpush2.xpose.msra.mxu0 0.0
    %2800 = vmatprep.mubr.f32.mxu0 0.0
    %2801 = vmatmul.mubr.f32.gmra.mxu0 %v2734
    %v2802 = vpop.f32.mrf.mxu0
    %v2803 = vadd.f32 0.0, %v2802
    %v2804 = vpop.f32.mrf.mxu0
    %2805 = vdwg.mxu0
    %v2806 = vmul.f32 %v2803, 0.35355338
    %v2807 = vadd.f32 %v2806, %v158
    %v2808 = vsel %vm495, %v2807, -inf
    %2809 = vmax.xlane.f32.xlu0 %v2808
    %v2810 = vpop.xlane.xlu0 %2809
    %v2811 = vsub.f32 %v2807, %v2810
    %v2812 = vmul.f32 %v2811, 1.442695
    %v2813 = vpow.pop %v2812
    %v2814 = vsel %vm495, %v2813, 0.0
    %2815 = vadd.xlane.f32.xlu0 %v2814
    %v2816 = vpop.xlane.xlu0 %2815
    %v2817 = vrcp.pop %v2816
    %v2818 = vmul.f32 %v2813, %v2817
    %v2820 = vsel %vm495, %v2818, 0
    %2822 = vmatprep.subr.mxu0 0.0
    %2823 = vmatpush1.msra.mxu0 0.0
    %2824 = vmatprep.subr.mxu0 0.0
    %2825 = vmatpush1.msra.mxu0 0.0
    %2826 = vmatprep.subr.mxu0 0.0
    %2827 = vmatpush1.msra.mxu0 0.0
    %2828 = vmatprep.subr.mxu0 0.0
    %2829 = vmatpush1.msra.mxu0 0.0
    %2830 = vmatprep.subr.mxu0 0.0
    %2831 = vmatpush1.msra.mxu0 0.0
    %2832 = vmatprep.subr.mxu0 0.0
    %2833 = vmatpush1.msra.mxu0 0.0
    %2834 = vmatprep.subr.mxu0 0.0
    %2835 = vmatpush1.msra.mxu0 0.0
    %2836 = vmatprep.subr.mxu0 0.0
    %2837 = vmatpush1.msra.mxu0 0.0
    %2838 = vmatprep.subr.mxu0 0.0
    %2839 = vmatpush1.msra.mxu0 0.0
    %2840 = vmatprep.subr.mxu0 0.0
    %2841 = vmatpush1.msra.mxu0 0.0
    %2842 = vmatprep.subr.mxu0 0.0
    %2843 = vmatpush1.msra.mxu0 0.0
    %2844 = vmatprep.subr.mxu0 0.0
    %2845 = vmatpush1.msra.mxu0 0.0
    %2846 = vmatprep.subr.mxu0 0.0
    %2847 = vmatpush1.msra.mxu0 0.0
    %2848 = vmatprep.subr.mxu0 0.0
    %2849 = vmatpush1.msra.mxu0 0.0
    %2850 = vmatprep.subr.mxu0 0.0
    %2851 = vmatpush1.msra.mxu0 0.0
    %2852 = vmatprep.subr.mxu0 0.0
    %2853 = vmatpush1.msra.mxu0 %v2043
    %2854 = vmatprep.subr.mxu0 0.0
    %2855 = vmatpush2.msra.mxu0 0.0
    %2856 = vmatprep.subr.mxu0 0.0
    %2857 = vmatpush2.msra.mxu0 0.0
    %2858 = vmatprep.subr.mxu0 0.0
    %2859 = vmatpush2.msra.mxu0 0.0
    %2860 = vmatprep.subr.mxu0 0.0
    %2861 = vmatpush2.msra.mxu0 0.0
    %2862 = vmatprep.subr.mxu0 0.0
    %2863 = vmatpush2.msra.mxu0 0.0
    %2864 = vmatprep.subr.mxu0 0.0
    %2865 = vmatpush2.msra.mxu0 0.0
    %2866 = vmatprep.subr.mxu0 0.0
    %2867 = vmatpush2.msra.mxu0 0.0
    %2868 = vmatprep.subr.mxu0 0.0
    %2869 = vmatpush2.msra.mxu0 0.0
    %2870 = vmatprep.subr.mxu0 0.0
    %2871 = vmatpush2.msra.mxu0 0.0
    %2872 = vmatprep.subr.mxu0 0.0
    %2873 = vmatpush2.msra.mxu0 0.0
    %2874 = vmatprep.subr.mxu0 0.0
    %2875 = vmatpush2.msra.mxu0 0.0
    %2876 = vmatprep.subr.mxu0 0.0
    %2877 = vmatpush2.msra.mxu0 0.0
    %2878 = vmatprep.subr.mxu0 0.0
    %2879 = vmatpush2.msra.mxu0 0.0
    %2880 = vmatprep.subr.mxu0 0.0
    %2881 = vmatpush2.msra.mxu0 0.0
    %2882 = vmatprep.subr.mxu0 0.0
    %2883 = vmatpush2.msra.mxu0 0.0
    %2884 = vmatprep.subr.mxu0 0.0
    %2885 = vmatpush2.msra.mxu0 0.0
    %2886 = vmatprep.mubr.f32.mxu0 0.0
    %2887 = vmatmul.mubr.f32.gmra.mxu0 %v2820
    %v2888 = vpop.f32.mrf.mxu0
    %v2889 = vadd.f32 0.0, %v2888
    %v2890 = vpop.f32.mrf.mxu0
    %2891 = vdwg.mxu0
    %s2892 = scalar_lea.vmem %s11, 192
    %v2893 = vld [vmem:[%s2892] sm:$0xff]
    %v2894 = vld [vmem:[%s2892 + $0x8] sm:$0xff]
    %v2895 = vld [vmem:[%s2892 + $0x10] sm:$0xff]
    %v2896 = vld [vmem:[%s2892 + $0x18] sm:$0xff]
    %v2898 = vsel %vm74, %v2889, 0
    %2900 = vmatprep.subr.mxu0 0.0
    %2901 = vmatpush1.msra.mxu0 0.0
    %2902 = vmatprep.subr.mxu0 0.0
    %2903 = vmatpush1.msra.mxu0 0.0
    %2904 = vmatprep.subr.mxu0 0.0
    %2905 = vmatpush1.msra.mxu0 0.0
    %2906 = vmatprep.subr.mxu0 0.0
    %2907 = vmatpush1.msra.mxu0 0.0
    %2908 = vmatprep.subr.mxu0 0.0
    %2909 = vmatpush1.msra.mxu0 0.0
    %2910 = vmatprep.subr.mxu0 0.0
    %2911 = vmatpush1.msra.mxu0 0.0
    %2912 = vmatprep.subr.mxu0 0.0
    %2913 = vmatpush1.msra.mxu0 0.0
    %2914 = vmatprep.subr.mxu0 0.0
    %2915 = vmatpush1.msra.mxu0 0.0
    %2916 = vmatprep.subr.mxu0 0.0
    %2917 = vmatpush1.msra.mxu0 0.0
    %2918 = vmatprep.subr.mxu0 0.0
    %2919 = vmatpush1.msra.mxu0 0.0
    %2920 = vmatprep.subr.mxu0 0.0
    %2921 = vmatpush1.msra.mxu0 0.0
    %2922 = vmatprep.subr.mxu0 0.0
    %2923 = vmatpush1.msra.mxu0 0.0
    %2924 = vmatprep.subr.mxu0 0.0
    %2925 = vmatpush1.msra.mxu0 %v2896
    %2926 = vmatprep.subr.mxu0 0.0
    %2927 = vmatpush1.msra.mxu0 %v2895
    %2928 = vmatprep.subr.mxu0 0.0
    %2929 = vmatpush1.msra.mxu0 %v2894
    %2930 = vmatprep.subr.mxu0 0.0
    %2931 = vmatpush1.msra.mxu0 %v2893
    %2932 = vmatprep.subr.mxu0 0.0
    %2933 = vmatpush2.msra.mxu0 0.0
    %2934 = vmatprep.subr.mxu0 0.0
    %2935 = vmatpush2.msra.mxu0 0.0
    %2936 = vmatprep.subr.mxu0 0.0
    %2937 = vmatpush2.msra.mxu0 0.0
    %2938 = vmatprep.subr.mxu0 0.0
    %2939 = vmatpush2.msra.mxu0 0.0
    %2940 = vmatprep.subr.mxu0 0.0
    %2941 = vmatpush2.msra.mxu0 0.0
    %2942 = vmatprep.subr.mxu0 0.0
    %2943 = vmatpush2.msra.mxu0 0.0
    %2944 = vmatprep.subr.mxu0 0.0
    %2945 = vmatpush2.msra.mxu0 0.0
    %2946 = vmatprep.subr.mxu0 0.0
    %2947 = vmatpush2.msra.mxu0 0.0
    %2948 = vmatprep.subr.mxu0 0.0
    %2949 = vmatpush2.msra.mxu0 0.0
    %2950 = vmatprep.subr.mxu0 0.0
    %2951 = vmatpush2.msra.mxu0 0.0
    %2952 = vmatprep.subr.mxu0 0.0
    %2953 = vmatpush2.msra.mxu0 0.0
    %2954 = vmatprep.subr.mxu0 0.0
    %2955 = vmatpush2.msra.mxu0 0.0
    %2956 = vmatprep.subr.mxu0 0.0
    %2957 = vmatpush2.msra.mxu0 0.0
    %2958 = vmatprep.subr.mxu0 0.0
    %2959 = vmatpush2.msra.mxu0 0.0
    %2960 = vmatprep.subr.mxu0 0.0
    %2961 = vmatpush2.msra.mxu0 0.0
    %2962 = vmatprep.subr.mxu0 0.0
    %2963 = vmatpush2.msra.mxu0 0.0
    %2964 = vmatprep.mubr.f32.mxu0 0.0
    %2965 = vmatmul.mubr.f32.gmra.mxu0 %v2898
    %v2966 = vpop.f32.mrf.mxu0
    %v2967 = vadd.f32 0.0, %v2966
    %v2968 = vpop.f32.mrf.mxu0
    %2969 = vdwg.mxu0
    %v2970 = vadd.f32 %v2660, %v2967
    %2971 = vmatprep.subr.mxu0 0.0
    %2972 = vmatpush1.msra.mxu0 0.0
    %2973 = vmatprep.subr.mxu0 0.0
    %2974 = vmatpush1.msra.mxu0 0.0
    %2975 = vmatprep.subr.mxu0 0.0
    %2976 = vmatpush1.msra.mxu0 0.0
    %2977 = vmatprep.subr.mxu0 0.0
    %2978 = vmatpush1.msra.mxu0 0.0
    %2979 = vmatprep.subr.mxu0 0.0
    %2980 = vmatpush1.msra.mxu0 0.0
    %2981 = vmatprep.subr.mxu0 0.0
    %2982 = vmatpush1.msra.mxu0 0.0
    %2983 = vmatprep.subr.mxu0 0.0
    %2984 = vmatpush1.msra.mxu0 0.0
    %2985 = vmatprep.subr.mxu0 0.0
    %2986 = vmatpush1.msra.mxu0 0.0
    %2987 = vmatprep.subr.mxu0 0.0
    %2988 = vmatpush1.msra.mxu0 %v1298
    %2989 = vmatprep.subr.mxu0 0.0
    %2990 = vmatpush1.msra.mxu0 %v1297
    %2991 = vmatprep.subr.mxu0 0.0
    %2992 = vmatpush1.msra.mxu0 %v1296
    %2993 = vmatprep.subr.mxu0 0.0
    %2994 = vmatpush1.msra.mxu0 %v1295
    %2995 = vmatprep.subr.mxu0 0.0
    %2996 = vmatpush1.msra.mxu0 %v1294
    %2997 = vmatprep.subr.mxu0 0.0
    %2998 = vmatpush1.msra.mxu0 %v1293
    %2999 = vmatprep.subr.mxu0 0.0
    %3000 = vmatpush1.msra.mxu0 %v1292
    %3001 = vmatprep.subr.mxu0 0.0
    %3002 = vmatpush1.msra.mxu0 %v1291
    %3003 = vmatprep.subr.mxu0 0.0
    %3004 = vmatpush2.msra.mxu0 0.0
    %3005 = vmatprep.subr.mxu0 0.0
    %3006 = vmatpush2.msra.mxu0 0.0
    %3007 = vmatprep.subr.mxu0 0.0
    %3008 = vmatpush2.msra.mxu0 0.0
    %3009 = vmatprep.subr.mxu0 0.0
    %3010 = vmatpush2.msra.mxu0 0.0
    %3011 = vmatprep.subr.mxu0 0.0
    %3012 = vmatpush2.msra.mxu0 0.0
    %3013 = vmatprep.subr.mxu0 0.0
    %3014 = vmatpush2.msra.mxu0 0.0
    %3015 = vmatprep.subr.mxu0 0.0
    %3016 = vmatpush2.msra.mxu0 0.0
    %3017 = vmatprep.subr.mxu0 0.0
    %3018 = vmatpush2.msra.mxu0 0.0
    %3019 = vmatprep.subr.mxu0 0.0
    %3020 = vmatpush2.msra.mxu0 0.0
    %3021 = vmatprep.subr.mxu0 0.0
    %3022 = vmatpush2.msra.mxu0 0.0
    %3023 = vmatprep.subr.mxu0 0.0
    %3024 = vmatpush2.msra.mxu0 0.0
    %3025 = vmatprep.subr.mxu0 0.0
    %3026 = vmatpush2.msra.mxu0 0.0
    %3027 = vmatprep.subr.mxu0 0.0
    %3028 = vmatpush2.msra.mxu0 0.0
    %3029 = vmatprep.subr.mxu0 0.0
    %3030 = vmatpush2.msra.mxu0 0.0
    %3031 = vmatprep.subr.mxu0 0.0
    %3032 = vmatpush2.msra.mxu0 0.0
    %3033 = vmatprep.subr.mxu0 0.0
    %3034 = vmatpush2.msra.mxu0 0.0
    %3035 = vmatprep.mubr.f32.mxu0 0.0
    %3036 = vmatmul.mubr.f32.gmra.mxu0 %v2045
    %v3037 = vpop.f32.mrf.mxu0
    %v3038 = vadd.f32 0.0, %v3037
    %v3039 = vpop.f32.mrf.mxu0
    %3040 = vdwg.mxu0
    %v3042 = vsel %vm74, %v3038, 0
    %3044 = vmatprep.subr.mxu0 0.0
    %3045 = vmatpush1.xpose.msra.mxu0 0.0
    %3046 = vmatprep.subr.mxu0 0.0
    %3047 = vmatpush1.xpose.msra.mxu0 0.0
    %3048 = vmatprep.subr.mxu0 0.0
    %3049 = vmatpush1.xpose.msra.mxu0 0.0
    %3050 = vmatprep.subr.mxu0 0.0
    %3051 = vmatpush1.xpose.msra.mxu0 0.0
    %3052 = vmatprep.subr.mxu0 0.0
    %3053 = vmatpush1.xpose.msra.mxu0 0.0
    %3054 = vmatprep.subr.mxu0 0.0
    %3055 = vmatpush1.xpose.msra.mxu0 0.0
    %3056 = vmatprep.subr.mxu0 0.0
    %3057 = vmatpush1.xpose.msra.mxu0 0.0
    %3058 = vmatprep.subr.mxu0 0.0
    %3059 = vmatpush1.xpose.msra.mxu0 0.0
    %3060 = vmatprep.subr.mxu0 0.0
    %3061 = vmatpush1.xpose.msra.mxu0 0.0
    %3062 = vmatprep.subr.mxu0 0.0
    %3063 = vmatpush1.xpose.msra.mxu0 0.0
    %3064 = vmatprep.subr.mxu0 0.0
    %3065 = vmatpush1.xpose.msra.mxu0 0.0
    %3066 = vmatprep.subr.mxu0 0.0
    %3067 = vmatpush1.xpose.msra.mxu0 0.0
    %3068 = vmatprep.subr.mxu0 0.0
    %3069 = vmatpush1.xpose.msra.mxu0 0.0
    %3070 = vmatprep.subr.mxu0 0.0
    %3071 = vmatpush1.xpose.msra.mxu0 0.0
    %3072 = vmatprep.subr.mxu0 0.0
    %3073 = vmatpush1.xpose.msra.mxu0 0.0
    %3074 = vmatprep.subr.mxu0 0.0
    %3075 = vmatpush1.xpose.msra.mxu0 %v2120
    %3076 = vmatprep.subr.mxu0 0.0
    %3077 = vmatpush2.xpose.msra.mxu0 0.0
    %3078 = vmatprep.subr.mxu0 0.0
    %3079 = vmatpush2.xpose.msra.mxu0 0.0
    %3080 = vmatprep.subr.mxu0 0.0
    %3081 = vmatpush2.xpose.msra.mxu0 0.0
    %3082 = vmatprep.subr.mxu0 0.0
    %3083 = vmatpush2.xpose.msra.mxu0 0.0
    %3084 = vmatprep.subr.mxu0 0.0
    %3085 = vmatpush2.xpose.msra.mxu0 0.0
    %3086 = vmatprep.subr.mxu0 0.0
    %3087 = vmatpush2.xpose.msra.mxu0 0.0
    %3088 = vmatprep.subr.mxu0 0.0
    %3089 = vmatpush2.xpose.msra.mxu0 0.0
    %3090 = vmatprep.subr.mxu0 0.0
    %3091 = vmatpush2.xpose.msra.mxu0 0.0
    %3092 = vmatprep.subr.mxu0 0.0
    %3093 = vmatpush2.xpose.msra.mxu0 0.0
    %3094 = vmatprep.subr.mxu0 0.0
    %3095 = vmatpush2.xpose.msra.mxu0 0.0
    %3096 = vmatprep.subr.mxu0 0.0
    %3097 = vmatpush2.xpose.msra.mxu0 0.0
    %3098 = vmatprep.subr.mxu0 0.0
    %3099 = vmatpush2.xpose.msra.mxu0 0.0
    %3100 = vmatprep.subr.mxu0 0.0
    %3101 = vmatpush2.xpose.msra.mxu0 0.0
    %3102 = vmatprep.subr.mxu0 0.0
    %3103 = vmatpush2.xpose.msra.mxu0 0.0
    %3104 = vmatprep.subr.mxu0 0.0
    %3105 = vmatpush2.xpose.msra.mxu0 0.0
    %3106 = vmatprep.subr.mxu0 0.0
    %3107 = vmatpush2.xpose.msra.mxu0 0.0
    %3108 = vmatprep.mubr.f32.mxu0 0.0
    %3109 = vmatmul.mubr.f32.gmra.mxu0 %v3042
    %v3110 = vpop.f32.mrf.mxu0
    %v3111 = vadd.f32 0.0, %v3110
    %v3112 = vpop.f32.mrf.mxu0
    %3113 = vdwg.mxu0
    %v3114 = vmul.f32 %v3111, 0.35355338
    %v3115 = vadd.f32 %v3114, %v158
    %v3116 = vsel %vm495, %v3115, -inf
    %3117 = vmax.xlane.f32.xlu0 %v3116
    %v3118 = vpop.xlane.xlu0 %3117
    %v3119 = vsub.f32 %v3115, %v3118
    %v3120 = vmul.f32 %v3119, 1.442695
    %v3121 = vpow.pop %v3120
    %v3122 = vsel %vm495, %v3121, 0.0
    %3123 = vadd.xlane.f32.xlu0 %v3122
    %v3124 = vpop.xlane.xlu0 %3123
    %v3125 = vrcp.pop %v3124
    %v3126 = vmul.f32 %v3121, %v3125
    %v3128 = vsel %vm495, %v3126, 0
    %3130 = vmatprep.subr.mxu0 0.0
    %3131 = vmatpush1.msra.mxu0 0.0
    %3132 = vmatprep.subr.mxu0 0.0
    %3133 = vmatpush1.msra.mxu0 0.0
    %3134 = vmatprep.subr.mxu0 0.0
    %3135 = vmatpush1.msra.mxu0 0.0
    %3136 = vmatprep.subr.mxu0 0.0
    %3137 = vmatpush1.msra.mxu0 0.0
    %3138 = vmatprep.subr.mxu0 0.0
    %3139 = vmatpush1.msra.mxu0 0.0
    %3140 = vmatprep.subr.mxu0 0.0
    %3141 = vmatpush1.msra.mxu0 0.0
    %3142 = vmatprep.subr.mxu0 0.0
    %3143 = vmatpush1.msra.mxu0 0.0
    %3144 = vmatprep.subr.mxu0 0.0
    %3145 = vmatpush1.msra.mxu0 0.0
    %3146 = vmatprep.subr.mxu0 0.0
    %3147 = vmatpush1.msra.mxu0 0.0
    %3148 = vmatprep.subr.mxu0 0.0
    %3149 = vmatpush1.msra.mxu0 0.0
    %3150 = vmatprep.subr.mxu0 0.0
    %3151 = vmatpush1.msra.mxu0 0.0
    %3152 = vmatprep.subr.mxu0 0.0
    %3153 = vmatpush1.msra.mxu0 0.0
    %3154 = vmatprep.subr.mxu0 0.0
    %3155 = vmatpush1.msra.mxu0 0.0
    %3156 = vmatprep.subr.mxu0 0.0
    %3157 = vmatpush1.msra.mxu0 0.0
    %3158 = vmatprep.subr.mxu0 0.0
    %3159 = vmatpush1.msra.mxu0 0.0
    %3160 = vmatprep.subr.mxu0 0.0
    %3161 = vmatpush1.msra.mxu0 %v2043
    %3162 = vmatprep.subr.mxu0 0.0
    %3163 = vmatpush2.msra.mxu0 0.0
    %3164 = vmatprep.subr.mxu0 0.0
    %3165 = vmatpush2.msra.mxu0 0.0
    %3166 = vmatprep.subr.mxu0 0.0
    %3167 = vmatpush2.msra.mxu0 0.0
    %3168 = vmatprep.subr.mxu0 0.0
    %3169 = vmatpush2.msra.mxu0 0.0
    %3170 = vmatprep.subr.mxu0 0.0
    %3171 = vmatpush2.msra.mxu0 0.0
    %3172 = vmatprep.subr.mxu0 0.0
    %3173 = vmatpush2.msra.mxu0 0.0
    %3174 = vmatprep.subr.mxu0 0.0
    %3175 = vmatpush2.msra.mxu0 0.0
    %3176 = vmatprep.subr.mxu0 0.0
    %3177 = vmatpush2.msra.mxu0 0.0
    %3178 = vmatprep.subr.mxu0 0.0
    %3179 = vmatpush2.msra.mxu0 0.0
    %3180 = vmatprep.subr.mxu0 0.0
    %3181 = vmatpush2.msra.mxu0 0.0
    %3182 = vmatprep.subr.mxu0 0.0
    %3183 = vmatpush2.msra.mxu0 0.0
    %3184 = vmatprep.subr.mxu0 0.0
    %3185 = vmatpush2.msra.mxu0 0.0
    %3186 = vmatprep.subr.mxu0 0.0
    %3187 = vmatpush2.msra.mxu0 0.0
    %3188 = vmatprep.subr.mxu0 0.0
    %3189 = vmatpush2.msra.mxu0 0.0
    %3190 = vmatprep.subr.mxu0 0.0
    %3191 = vmatpush2.msra.mxu0 0.0
    %3192 = vmatprep.subr.mxu0 0.0
    %3193 = vmatpush2.msra.mxu0 0.0
    %3194 = vmatprep.mubr.f32.mxu0 0.0
    %3195 = vmatmul.mubr.f32.gmra.mxu0 %v3128
    %v3196 = vpop.f32.mrf.mxu0
    %v3197 = vadd.f32 0.0, %v3196
    %v3198 = vpop.f32.mrf.mxu0
    %3199 = vdwg.mxu0
    %s3200 = scalar_lea.vmem %s11, 224
    %v3201 = vld [vmem:[%s3200] sm:$0xff]
    %v3202 = vld [vmem:[%s3200 + $0x8] sm:$0xff]
    %v3203 = vld [vmem:[%s3200 + $0x10] sm:$0xff]
    %v3204 = vld [vmem:[%s3200 + $0x18] sm:$0xff]
    %v3206 = vsel %vm74, %v3197, 0
    %3208 = vmatprep.subr.mxu0 0.0
    %3209 = vmatpush1.msra.mxu0 0.0
    %3210 = vmatprep.subr.mxu0 0.0
    %3211 = vmatpush1.msra.mxu0 0.0
    %3212 = vmatprep.subr.mxu0 0.0
    %3213 = vmatpush1.msra.mxu0 0.0
    %3214 = vmatprep.subr.mxu0 0.0
    %3215 = vmatpush1.msra.mxu0 0.0
    %3216 = vmatprep.subr.mxu0 0.0
    %3217 = vmatpush1.msra.mxu0 0.0
    %3218 = vmatprep.subr.mxu0 0.0
    %3219 = vmatpush1.msra.mxu0 0.0
    %3220 = vmatprep.subr.mxu0 0.0
    %3221 = vmatpush1.msra.mxu0 0.0
    %3222 = vmatprep.subr.mxu0 0.0
    %3223 = vmatpush1.msra.mxu0 0.0
    %3224 = vmatprep.subr.mxu0 0.0
    %3225 = vmatpush1.msra.mxu0 0.0
    %3226 = vmatprep.subr.mxu0 0.0
    %3227 = vmatpush1.msra.mxu0 0.0
    %3228 = vmatprep.subr.mxu0 0.0
    %3229 = vmatpush1.msra.mxu0 0.0
    %3230 = vmatprep.subr.mxu0 0.0
    %3231 = vmatpush1.msra.mxu0 0.0
    %3232 = vmatprep.subr.mxu0 0.0
    %3233 = vmatpush1.msra.mxu0 %v3204
    %3234 = vmatprep.subr.mxu0 0.0
    %3235 = vmatpush1.msra.mxu0 %v3203
    %3236 = vmatprep.subr.mxu0 0.0
    %3237 = vmatpush1.msra.mxu0 %v3202
    %3238 = vmatprep.subr.mxu0 0.0
    %3239 = vmatpush1.msra.mxu0 %v3201
    %3240 = vmatprep.subr.mxu0 0.0
    %3241 = vmatpush2.msra.mxu0 0.0
    %3242 = vmatprep.subr.mxu0 0.0
    %3243 = vmatpush2.msra.mxu0 0.0
    %3244 = vmatprep.subr.mxu0 0.0
    %3245 = vmatpush2.msra.mxu0 0.0
    %3246 = vmatprep.subr.mxu0 0.0
    %3247 = vmatpush2.msra.mxu0 0.0
    %3248 = vmatprep.subr.mxu0 0.0
    %3249 = vmatpush2.msra.mxu0 0.0
    %3250 = vmatprep.subr.mxu0 0.0
    %3251 = vmatpush2.msra.mxu0 0.0
    %3252 = vmatprep.subr.mxu0 0.0
    %3253 = vmatpush2.msra.mxu0 0.0
    %3254 = vmatprep.subr.mxu0 0.0
    %3255 = vmatpush2.msra.mxu0 0.0
    %3256 = vmatprep.subr.mxu0 0.0
    %3257 = vmatpush2.msra.mxu0 0.0
    %3258 = vmatprep.subr.mxu0 0.0
    %3259 = vmatpush2.msra.mxu0 0.0
    %3260 = vmatprep.subr.mxu0 0.0
    %3261 = vmatpush2.msra.mxu0 0.0
    %3262 = vmatprep.subr.mxu0 0.0
    %3263 = vmatpush2.msra.mxu0 0.0
    %3264 = vmatprep.subr.mxu0 0.0
    %3265 = vmatpush2.msra.mxu0 0.0
    %3266 = vmatprep.subr.mxu0 0.0
    %3267 = vmatpush2.msra.mxu0 0.0
    %3268 = vmatprep.subr.mxu0 0.0
    %3269 = vmatpush2.msra.mxu0 0.0
    %3270 = vmatprep.subr.mxu0 0.0
    %3271 = vmatpush2.msra.mxu0 0.0
    %3272 = vmatprep.mubr.f32.mxu0 0.0
    %3273 = vmatmul.mubr.f32.gmra.mxu0 %v3206
    %v3274 = vpop.f32.mrf.mxu0
    %v3275 = vadd.f32 0.0, %v3274
    %v3276 = vpop.f32.mrf.mxu0
    %3277 = vdwg.mxu0
    %v3278 = vadd.f32 %v2970, %v3275
    %v3279 = vadd.f32 %v1864, %v3278
    %s3280 = scalar_lea.vmem %s12, 1
    %v3281 = vld [vmem:[%s3280] sm:$0x1]
    %v3282 = vmul.f32 %v3279, %v3279
    %v3283 = vsel %vm74, %v3282, 0.0
    %3284 = vadd.xlane.f32.xlu0 %v3283
    %v3285 = vpop.xlane.xlu0 %3284
    %v3286 = vmul.f32 %v3285, %v164
    %v3287 = vadd.f32 %v3286, 1e-06
    %v3288 = vrsqrt.pop %v3287
    %v3289 = vmul.f32 %v3279, %v3288
    %v3291 = vlaneseq
    %v3292 = vshrl.u32 %v3291, 7
    %v3293 = vsub.s32 0, %v3292
    %v3294 = vrot.slane %v3281, %v3293
    %v3296 = vmul.f32 %v3289, %v3294
    %s3297 = scalar_lea.vmem %s13, 32
    %v3298 = vld [vmem:[%s3297] sm:$0xff]
    %v3299 = vld [vmem:[%s3297 + $0x8] sm:$0xff]
    %v3300 = vld [vmem:[%s3297 + $0x10] sm:$0xff]
    %v3301 = vld [vmem:[%s3297 + $0x18] sm:$0xff]
    %v3303 = vsel %vm74, %v3296, 0
    %3305 = vmatprep.subr.mxu0 0.0
    %3306 = vmatpush1.msra.mxu0 0.0
    %3307 = vmatprep.subr.mxu0 0.0
    %3308 = vmatpush1.msra.mxu0 0.0
    %3309 = vmatprep.subr.mxu0 0.0
    %3310 = vmatpush1.msra.mxu0 0.0
    %3311 = vmatprep.subr.mxu0 0.0
    %3312 = vmatpush1.msra.mxu0 0.0
    %3313 = vmatprep.subr.mxu0 0.0
    %3314 = vmatpush1.msra.mxu0 0.0
    %3315 = vmatprep.subr.mxu0 0.0
    %3316 = vmatpush1.msra.mxu0 0.0
    %3317 = vmatprep.subr.mxu0 0.0
    %3318 = vmatpush1.msra.mxu0 0.0
    %3319 = vmatprep.subr.mxu0 0.0
    %3320 = vmatpush1.msra.mxu0 0.0
    %3321 = vmatprep.subr.mxu0 0.0
    %3322 = vmatpush1.msra.mxu0 0.0
    %3323 = vmatprep.subr.mxu0 0.0
    %3324 = vmatpush1.msra.mxu0 0.0
    %3325 = vmatprep.subr.mxu0 0.0
    %3326 = vmatpush1.msra.mxu0 0.0
    %3327 = vmatprep.subr.mxu0 0.0
    %3328 = vmatpush1.msra.mxu0 0.0
    %3329 = vmatprep.subr.mxu0 0.0
    %3330 = vmatpush1.msra.mxu0 %v3301
    %3331 = vmatprep.subr.mxu0 0.0
    %3332 = vmatpush1.msra.mxu0 %v3300
    %3333 = vmatprep.subr.mxu0 0.0
    %3334 = vmatpush1.msra.mxu0 %v3299
    %3335 = vmatprep.subr.mxu0 0.0
    %3336 = vmatpush1.msra.mxu0 %v3298
    %3337 = vmatprep.subr.mxu0 0.0
    %3338 = vmatpush2.msra.mxu0 0.0
    %3339 = vmatprep.subr.mxu0 0.0
    %3340 = vmatpush2.msra.mxu0 0.0
    %3341 = vmatprep.subr.mxu0 0.0
    %3342 = vmatpush2.msra.mxu0 0.0
    %3343 = vmatprep.subr.mxu0 0.0
    %3344 = vmatpush2.msra.mxu0 0.0
    %3345 = vmatprep.subr.mxu0 0.0
    %3346 = vmatpush2.msra.mxu0 0.0
    %3347 = vmatprep.subr.mxu0 0.0
    %3348 = vmatpush2.msra.mxu0 0.0
    %3349 = vmatprep.subr.mxu0 0.0
    %3350 = vmatpush2.msra.mxu0 0.0
    %3351 = vmatprep.subr.mxu0 0.0
    %3352 = vmatpush2.msra.mxu0 0.0
    %3353 = vmatprep.subr.mxu0 0.0
    %3354 = vmatpush2.msra.mxu0 0.0
    %3355 = vmatprep.subr.mxu0 0.0
    %3356 = vmatpush2.msra.mxu0 0.0
    %3357 = vmatprep.subr.mxu0 0.0
    %3358 = vmatpush2.msra.mxu0 0.0
    %3359 = vmatprep.subr.mxu0 0.0
    %3360 = vmatpush2.msra.mxu0 0.0
    %3361 = vmatprep.subr.mxu0 0.0
    %3362 = vmatpush2.msra.mxu0 0.0
    %3363 = vmatprep.subr.mxu0 0.0
    %3364 = vmatpush2.msra.mxu0 0.0
    %3365 = vmatprep.subr.mxu0 0.0
    %3366 = vmatpush2.msra.mxu0 0.0
    %3367 = vmatprep.subr.mxu0 0.0
    %3368 = vmatpush2.msra.mxu0 0.0
    %3369 = vmatprep.mubr.f32.mxu0 0.0
    %3370 = vmatmul.mubr.f32.gmra.mxu0 %v3303
    %v3371 = vpop.f32.mrf.mxu0
    %v3372 = vadd.f32 0.0, %v3371
    %v3373 = vpop.f32.mrf.mxu0
    %3374 = vdwg.mxu0
    %s3375 = scalar_lea.vmem %s14, 32
    %v3376 = vld [vmem:[%s3375] sm:$0xff]
    %v3377 = vld [vmem:[%s3375 + $0x8] sm:$0xff]
    %v3378 = vld [vmem:[%s3375 + $0x10] sm:$0xff]
    %v3379 = vld [vmem:[%s3375 + $0x18] sm:$0xff]
    %3380 = vmatprep.subr.mxu0 0.0
    %3381 = vmatpush1.msra.mxu0 0.0
    %3382 = vmatprep.subr.mxu0 0.0
    %3383 = vmatpush1.msra.mxu0 0.0
    %3384 = vmatprep.subr.mxu0 0.0
    %3385 = vmatpush1.msra.mxu0 0.0
    %3386 = vmatprep.subr.mxu0 0.0
    %3387 = vmatpush1.msra.mxu0 0.0
    %3388 = vmatprep.subr.mxu0 0.0
    %3389 = vmatpush1.msra.mxu0 0.0
    %3390 = vmatprep.subr.mxu0 0.0
    %3391 = vmatpush1.msra.mxu0 0.0
    %3392 = vmatprep.subr.mxu0 0.0
    %3393 = vmatpush1.msra.mxu0 0.0
    %3394 = vmatprep.subr.mxu0 0.0
    %3395 = vmatpush1.msra.mxu0 0.0
    %3396 = vmatprep.subr.mxu0 0.0
    %3397 = vmatpush1.msra.mxu0 0.0
    %3398 = vmatprep.subr.mxu0 0.0
    %3399 = vmatpush1.msra.mxu0 0.0
    %3400 = vmatprep.subr.mxu0 0.0
    %3401 = vmatpush1.msra.mxu0 0.0
    %3402 = vmatprep.subr.mxu0 0.0
    %3403 = vmatpush1.msra.mxu0 0.0
    %3404 = vmatprep.subr.mxu0 0.0
    %3405 = vmatpush1.msra.mxu0 %v3379
    %3406 = vmatprep.subr.mxu0 0.0
    %3407 = vmatpush1.msra.mxu0 %v3378
    %3408 = vmatprep.subr.mxu0 0.0
    %3409 = vmatpush1.msra.mxu0 %v3377
    %3410 = vmatprep.subr.mxu0 0.0
    %3411 = vmatpush1.msra.mxu0 %v3376
    %3412 = vmatprep.subr.mxu0 0.0
    %3413 = vmatpush2.msra.mxu0 0.0
    %3414 = vmatprep.subr.mxu0 0.0
    %3415 = vmatpush2.msra.mxu0 0.0
    %3416 = vmatprep.subr.mxu0 0.0
    %3417 = vmatpush2.msra.mxu0 0.0
    %3418 = vmatprep.subr.mxu0 0.0
    %3419 = vmatpush2.msra.mxu0 0.0
    %3420 = vmatprep.subr.mxu0 0.0
    %3421 = vmatpush2.msra.mxu0 0.0
    %3422 = vmatprep.subr.mxu0 0.0
    %3423 = vmatpush2.msra.mxu0 0.0
    %3424 = vmatprep.subr.mxu0 0.0
    %3425 = vmatpush2.msra.mxu0 0.0
    %3426 = vmatprep.subr.mxu0 0.0
    %3427 = vmatpush2.msra.mxu0 0.0
    %3428 = vmatprep.subr.mxu0 0.0
    %3429 = vmatpush2.msra.mxu0 0.0
    %3430 = vmatprep.subr.mxu0 0.0
    %3431 = vmatpush2.msra.mxu0 0.0
    %3432 = vmatprep.subr.mxu0 0.0
    %3433 = vmatpush2.msra.mxu0 0.0
    %3434 = vmatprep.subr.mxu0 0.0
    %3435 = vmatpush2.msra.mxu0 0.0
    %3436 = vmatprep.subr.mxu0 0.0
    %3437 = vmatpush2.msra.mxu0 0.0
    %3438 = vmatprep.subr.mxu0 0.0
    %3439 = vmatpush2.msra.mxu0 0.0
    %3440 = vmatprep.subr.mxu0 0.0
    %3441 = vmatpush2.msra.mxu0 0.0
    %3442 = vmatprep.subr.mxu0 0.0
    %3443 = vmatpush2.msra.mxu0 0.0
    %3444 = vmatprep.mubr.f32.mxu0 0.0
    %3445 = vmatmul.mubr.f32.gmra.mxu0 %v3303
    %v3446 = vpop.f32.mrf.mxu0
    %v3447 = vadd.f32 0.0, %v3446
    %v3448 = vpop.f32.mrf.mxu0
    %3449 = vdwg.mxu0
    %v3450 = vxor.u32 %v3372, 2147483648
    %v3451 = vmul.f32 %v3450, 1.442695
    %v3452 = vpow.pop %v3451
    %v3453 = vadd.f32 %v3452, 1.0
    %v3454 = vrcp.pop %v3453
    %v3455 = vmul.f32 1.0, %v3454
    %v3456 = vmul.f32 %v3372, %v3455
    %v3457 = vmul.f32 %v3456, %v3447
    %s3458 = scalar_lea.vmem %s15, 64
    %v3459 = vld [vmem:[%s3458] sm:$0xff]
    %v3460 = vld [vmem:[%s3458 + $0x8] sm:$0xff]
    %v3461 = vld [vmem:[%s3458 + $0x10] sm:$0xff]
    %v3462 = vld [vmem:[%s3458 + $0x18] sm:$0xff]
    %v3463 = vld [vmem:[%s3458 + $0x20] sm:$0xff]
    %v3464 = vld [vmem:[%s3458 + $0x28] sm:$0xff]
    %v3465 = vld [vmem:[%s3458 + $0x30] sm:$0xff]
    %v3466 = vld [vmem:[%s3458 + $0x38] sm:$0xff]
    %v3468 = vsel %vm261, %v3457, 0
    %3470 = vmatprep.subr.mxu0 0.0
    %3471 = vmatpush1.msra.mxu0 0.0
    %3472 = vmatprep.subr.mxu0 0.0
    %3473 = vmatpush1.msra.mxu0 0.0
    %3474 = vmatprep.subr.mxu0 0.0
    %3475 = vmatpush1.msra.mxu0 0.0
    %3476 = vmatprep.subr.mxu0 0.0
    %3477 = vmatpush1.msra.mxu0 0.0
    %3478 = vmatprep.subr.mxu0 0.0
    %3479 = vmatpush1.msra.mxu0 0.0
    %3480 = vmatprep.subr.mxu0 0.0
    %3481 = vmatpush1.msra.mxu0 0.0
    %3482 = vmatprep.subr.mxu0 0.0
    %3483 = vmatpush1.msra.mxu0 0.0
    %3484 = vmatprep.subr.mxu0 0.0
    %3485 = vmatpush1.msra.mxu0 0.0
    %3486 = vmatprep.subr.mxu0 0.0
    %3487 = vmatpush1.msra.mxu0 %v3466
    %3488 = vmatprep.subr.mxu0 0.0
    %3489 = vmatpush1.msra.mxu0 %v3465
    %3490 = vmatprep.subr.mxu0 0.0
    %3491 = vmatpush1.msra.mxu0 %v3464
    %3492 = vmatprep.subr.mxu0 0.0
    %3493 = vmatpush1.msra.mxu0 %v3463
    %3494 = vmatprep.subr.mxu0 0.0
    %3495 = vmatpush1.msra.mxu0 %v3462
    %3496 = vmatprep.subr.mxu0 0.0
    %3497 = vmatpush1.msra.mxu0 %v3461
    %3498 = vmatprep.subr.mxu0 0.0
    %3499 = vmatpush1.msra.mxu0 %v3460
    %3500 = vmatprep.subr.mxu0 0.0
    %3501 = vmatpush1.msra.mxu0 %v3459
    %3502 = vmatprep.subr.mxu0 0.0
    %3503 = vmatpush2.msra.mxu0 0.0
    %3504 = vmatprep.subr.mxu0 0.0
    %3505 = vmatpush2.msra.mxu0 0.0
    %3506 = vmatprep.subr.mxu0 0.0
    %3507 = vmatpush2.msra.mxu0 0.0
    %3508 = vmatprep.subr.mxu0 0.0
    %3509 = vmatpush2.msra.mxu0 0.0
    %3510 = vmatprep.subr.mxu0 0.0
    %3511 = vmatpush2.msra.mxu0 0.0
    %3512 = vmatprep.subr.mxu0 0.0
    %3513 = vmatpush2.msra.mxu0 0.0
    %3514 = vmatprep.subr.mxu0 0.0
    %3515 = vmatpush2.msra.mxu0 0.0
    %3516 = vmatprep.subr.mxu0 0.0
    %3517 = vmatpush2.msra.mxu0 0.0
    %3518 = vmatprep.subr.mxu0 0.0
    %3519 = vmatpush2.msra.mxu0 0.0
    %3520 = vmatprep.subr.mxu0 0.0
    %3521 = vmatpush2.msra.mxu0 0.0
    %3522 = vmatprep.subr.mxu0 0.0
    %3523 = vmatpush2.msra.mxu0 0.0
    %3524 = vmatprep.subr.mxu0 0.0
    %3525 = vmatpush2.msra.mxu0 0.0
    %3526 = vmatprep.subr.mxu0 0.0
    %3527 = vmatpush2.msra.mxu0 0.0
    %3528 = vmatprep.subr.mxu0 0.0
    %3529 = vmatpush2.msra.mxu0 0.0
    %3530 = vmatprep.subr.mxu0 0.0
    %3531 = vmatpush2.msra.mxu0 0.0
    %3532 = vmatprep.subr.mxu0 0.0
    %3533 = vmatpush2.msra.mxu0 0.0
    %3534 = vmatprep.mubr.f32.mxu0 0.0
    %3535 = vmatmul.mubr.f32.gmra.mxu0 %v3468
    %v3536 = vpop.f32.mrf.mxu0
    %v3537 = vadd.f32 0.0, %v3536
    %v3538 = vpop.f32.mrf.mxu0
    %3539 = vdwg.mxu0
    %v3540 = vadd.f32 %v3279, %v3537
    %3541 = vrot.lane.b32.xlu0 %v2043, 32
    %v3542 = vpop.permute.xlu0 %3541
    %v3544 = vsel %vm74, %v336, %v3542
    %3545 = vst.msk [vmem:[%s19] sm:$0xff] %vm261, %v3544
    %v3546 = vlaneseq
    %v3547 = vand.u32 %v3546, 127
    %vm3548 = vcmp.eq.s32.totalorder %v3547, 7
    %v3549 = vsel %vm3548, 1, 0
    %v3550 = vcvt.s32.f32 %v3549
    %v3552 = vsel %vm495, %v3550, 0
    %3554 = vmatprep.subr.mxu0 0.0
    %3555 = vmatpush1.msra.mxu0 0.0
    %3556 = vmatprep.subr.mxu0 0.0
    %3557 = vmatpush1.msra.mxu0 0.0
    %3558 = vmatprep.subr.mxu0 0.0
    %3559 = vmatpush1.msra.mxu0 0.0
    %3560 = vmatprep.subr.mxu0 0.0
    %3561 = vmatpush1.msra.mxu0 0.0
    %3562 = vmatprep.subr.mxu0 0.0
    %3563 = vmatpush1.msra.mxu0 0.0
    %3564 = vmatprep.subr.mxu0 0.0
    %3565 = vmatpush1.msra.mxu0 0.0
    %3566 = vmatprep.subr.mxu0 0.0
    %3567 = vmatpush1.msra.mxu0 0.0
    %3568 = vmatprep.subr.mxu0 0.0
    %3569 = vmatpush1.msra.mxu0 0.0
    %3570 = vmatprep.subr.mxu0 0.0
    %3571 = vmatpush1.msra.mxu0 0.0
    %3572 = vmatprep.subr.mxu0 0.0
    %3573 = vmatpush1.msra.mxu0 0.0
    %3574 = vmatprep.subr.mxu0 0.0
    %3575 = vmatpush1.msra.mxu0 0.0
    %3576 = vmatprep.subr.mxu0 0.0
    %3577 = vmatpush1.msra.mxu0 0.0
    %3578 = vmatprep.subr.mxu0 0.0
    %3579 = vmatpush1.msra.mxu0 0.0
    %3580 = vmatprep.subr.mxu0 0.0
    %3581 = vmatpush1.msra.mxu0 0.0
    %3582 = vmatprep.subr.mxu0 0.0
    %3583 = vmatpush1.msra.mxu0 0.0
    %3584 = vmatprep.subr.mxu0 0.0
    %3585 = vmatpush1.msra.mxu0 %v3540
    %3586 = vmatprep.subr.mxu0 0.0
    %3587 = vmatpush2.msra.mxu0 0.0
    %3588 = vmatprep.subr.mxu0 0.0
    %3589 = vmatpush2.msra.mxu0 0.0
    %3590 = vmatprep.subr.mxu0 0.0
    %3591 = vmatpush2.msra.mxu0 0.0
    %3592 = vmatprep.subr.mxu0 0.0
    %3593 = vmatpush2.msra.mxu0 0.0
    %3594 = vmatprep.subr.mxu0 0.0
    %3595 = vmatpush2.msra.mxu0 0.0
    %3596 = vmatprep.subr.mxu0 0.0
    %3597 = vmatpush2.msra.mxu0 0.0
    %3598 = vmatprep.subr.mxu0 0.0
    %3599 = vmatpush2.msra.mxu0 0.0
    %3600 = vmatprep.subr.mxu0 0.0
    %3601 = vmatpush2.msra.mxu0 0.0
    %3602 = vmatprep.subr.mxu0 0.0
    %3603 = vmatpush2.msra.mxu0 0.0
    %3604 = vmatprep.subr.mxu0 0.0
    %3605 = vmatpush2.msra.mxu0 0.0
    %3606 = vmatprep.subr.mxu0 0.0
    %3607 = vmatpush2.msra.mxu0 0.0
    %3608 = vmatprep.subr.mxu0 0.0
    %3609 = vmatpush2.msra.mxu0 0.0
    %3610 = vmatprep.subr.mxu0 0.0
    %3611 = vmatpush2.msra.mxu0 0.0
    %3612 = vmatprep.subr.mxu0 0.0
    %3613 = vmatpush2.msra.mxu0 0.0
    %3614 = vmatprep.subr.mxu0 0.0
    %3615 = vmatpush2.msra.mxu0 0.0
    %3616 = vmatprep.subr.mxu0 0.0
    %3617 = vmatpush2.msra.mxu0 0.0
    %3618 = vmatprep.mubr.f32.mxu0 0.0
    %3619 = vmatmul.mubr.f32.gmra.mxu0 %v3552
    %v3620 = vpop.f32.mrf.mxu0
    %v3621 = vadd.f32 0.0, %v3620
    %v3622 = vpop.f32.mrf.mxu0
    %3623 = vdwg.mxu0
    %v3624 = vld [vmem:[%s16] sm:$0x1]
    %v3625 = vmul.f32 %v3621, %v3621
    %vm3626 = vcmask 253952
    %v3627 = vsel %vm3626, %v3625, 0.0
    %3628 = vadd.xlane.f32.xlu0 %v3627
    %v3629 = vpop.xlane.xlu0 %3628
    %v3630 = vmul.f32 %v3629, %v164
    %v3631 = vadd.f32 %v3630, 1e-06
    %v3632 = vrsqrt.pop %v3631
    %v3633 = vmul.f32 %v3621, %v3632
    %v3634 = vmul.f32 %v3633, %v3624
    %v3635 = vld [vmem:[%s17] sm:$0xff]
    %v3636 = vld [vmem:[%s17 + $0x8] sm:$0xff]
    %v3637 = vld [vmem:[%s17 + $0x10] sm:$0xff]
    %v3638 = vld [vmem:[%s17 + $0x18] sm:$0xff]
    %v3640 = vsel %vm74, %v3634, 0
    %3642 = vmatprep.subr.mxu0 0.0
    %3643 = vmatpush1.msra.mxu0 0.0
    %3644 = vmatprep.subr.mxu0 0.0
    %3645 = vmatpush1.msra.mxu0 0.0
    %3646 = vmatprep.subr.mxu0 0.0
    %3647 = vmatpush1.msra.mxu0 0.0
    %3648 = vmatprep.subr.mxu0 0.0
    %3649 = vmatpush1.msra.mxu0 0.0
    %3650 = vmatprep.subr.mxu0 0.0
    %3651 = vmatpush1.msra.mxu0 0.0
    %3652 = vmatprep.subr.mxu0 0.0
    %3653 = vmatpush1.msra.mxu0 0.0
    %3654 = vmatprep.subr.mxu0 0.0
    %3655 = vmatpush1.msra.mxu0 0.0
    %3656 = vmatprep.subr.mxu0 0.0
    %3657 = vmatpush1.msra.mxu0 0.0
    %3658 = vmatprep.subr.mxu0 0.0
    %3659 = vmatpush1.msra.mxu0 0.0
    %3660 = vmatprep.subr.mxu0 0.0
    %3661 = vmatpush1.msra.mxu0 0.0
    %3662 = vmatprep.subr.mxu0 0.0
    %3663 = vmatpush1.msra.mxu0 0.0
    %3664 = vmatprep.subr.mxu0 0.0
    %3665 = vmatpush1.msra.mxu0 0.0
    %3666 = vmatprep.subr.mxu0 0.0
    %3667 = vmatpush1.msra.mxu0 %v3638
    %3668 = vmatprep.subr.mxu0 0.0
    %3669 = vmatpush1.msra.mxu0 %v3637
    %3670 = vmatprep.subr.mxu0 0.0
    %3671 = vmatpush1.msra.mxu0 %v3636
    %3672 = vmatprep.subr.mxu0 0.0
    %3673 = vmatpush1.msra.mxu0 %v3635
    %3674 = vmatprep.subr.mxu0 0.0
    %3675 = vmatpush2.msra.mxu0 0.0
    %3676 = vmatprep.subr.mxu0 0.0
    %3677 = vmatpush2.msra.mxu0 0.0
    %3678 = vmatprep.subr.mxu0 0.0
    %3679 = vmatpush2.msra.mxu0 0.0
    %3680 = vmatprep.subr.mxu0 0.0
    %3681 = vmatpush2.msra.mxu0 0.0
    %3682 = vmatprep.subr.mxu0 0.0
    %3683 = vmatpush2.msra.mxu0 0.0
    %3684 = vmatprep.subr.mxu0 0.0
    %3685 = vmatpush2.msra.mxu0 0.0
    %3686 = vmatprep.subr.mxu0 0.0
    %3687 = vmatpush2.msra.mxu0 0.0
    %3688 = vmatprep.subr.mxu0 0.0
    %3689 = vmatpush2.msra.mxu0 0.0
    %3690 = vmatprep.subr.mxu0 0.0
    %3691 = vmatpush2.msra.mxu0 0.0
    %3692 = vmatprep.subr.mxu0 0.0
    %3693 = vmatpush2.msra.mxu0 0.0
    %3694 = vmatprep.subr.mxu0 0.0
    %3695 = vmatpush2.msra.mxu0 0.0
    %3696 = vmatprep.subr.mxu0 0.0
    %3697 = vmatpush2.msra.mxu0 0.0
    %3698 = vmatprep.subr.mxu0 0.0
    %3699 = vmatpush2.msra.mxu0 0.0
    %3700 = vmatprep.subr.mxu0 0.0
    %3701 = vmatpush2.msra.mxu0 0.0
    %3702 = vmatprep.subr.mxu0 0.0
    %3703 = vmatpush2.msra.mxu0 0.0
    %3704 = vmatprep.subr.mxu0 0.0
    %3705 = vmatpush2.msra.mxu0 0.0
    %3706 = vmatprep.mubr.f32.mxu0 0.0
    %3707 = vmatmul.mubr.f32.gmra.mxu0 %v3640
    %v3708 = vpop.f32.mrf.mxu0
    %v3709 = vadd.f32 0.0, %v3708
    %v3710 = vpop.f32.mrf.mxu0
    %3711 = vdwg.mxu0
    %3712 = vst [vmem:[#allocation2] sm:$0x1] %v3709
    // Predicated region
    $region74: #{talker_forward.1} parent=1 // pred_check
      _
    $region75: #{talker_forward.1} parent=1 // pred_check_branch
      %3714 = sbr.rel (0) target = $region77
    $region76: #{talker_forward.1} parent=1 // pred_region
      %s3716 = ssub.s32 16, 16
      %3717 = vsyncadd [#allocation3], %s3716
      %s3719 = sshll.u32 [#allocation2], 4
      %s3720 = int_to_ptr.vmem [resolvable:$true] %s3719
      %3722 = dma.vmem_to_hbm [thread:$0]  %s3720, 16, %s18, [#allocation3]
    $region77: #{talker_forward.1} parent=1 // pred_fallthru
      _
    // Predicated region
    $region78: #{talker_forward.1} parent=1 // pred_check
      _
    $region79: #{talker_forward.1} parent=1 // pred_check_branch
      %3724 = sbr.rel (0) target = $region81
    $region80: #{talker_forward.1} parent=1 // pred_region
      _
    $region81: #{talker_forward.1} parent=1 // pred_fallthru
      _
    // Predicated region
    $region82: #{talker_forward.1} parent=1 // pred_check
      _
    $region83: #{talker_forward.1} parent=1 // pred_check_branch
      %3726 = sbr.rel (0) target = $region85
    $region84: #{talker_forward.1} parent=1 // pred_region
      %3727 = dma.done [#allocation3], 16
    $region85: #{talker_forward.1} parent=1 // pred_fallthru
      _
    // Predicated region
    $region86: #{talker_forward.1} parent=1 // pred_check
      _
    $region87: #{talker_forward.1} parent=1 // pred_check_branch
      %3729 = sbr.rel (0) target = $region89
    $region88: #{talker_forward.1} parent=1 // pred_region
      _
    $region89: #{talker_forward.1} parent=1 // pred_fallthru
      _
    %3730 = vsyncpa [#allocation3], 1

</llo_original>
